<compile_context>
chip_gen: v6e
topology: v6e:2x2x1
jax: 0.10.0
libtpu: 0.0.40
codegen_flags: <defaults>
</compile_context>

<pallas_src>
import functools

import jax
import jax.numpy as jnp
from jax import lax
from jax.experimental import pallas as pl
from jax.experimental.pallas import tpu as pltpu


# ----------------------------- chip-derived budgets --------------------------

def _derive_vmem_limit():
    cap = 128 * 1024 * 1024
    try:
        info = pltpu.get_tpu_info()
        cap = int(getattr(info, "vmem_capacity_bytes", cap))
    except Exception:
        pass
    # v5e/v6e (128 MiB) -> 96 MiB scoped limit; v7x (64 MiB) -> 48 MiB.
    return int(min(cap * 3 // 4, 100 * 1024 * 1024))


VMEM_LIMIT = _derive_vmem_limit()


def _probe_single_buffering():
    """Feature-detect pipeline_mode=pl.Buffered(1) for resident weight blocks."""
    def k(x_ref, o_ref):
        o_ref[...] = x_ref[...] + 1.0
    try:
        out = pl.pallas_call(
            k,
            grid=(1,),
            in_specs=[pl.BlockSpec((8, 128), lambda i: (0, 0),
                                   pipeline_mode=pl.Buffered(1))],
            out_specs=pl.BlockSpec((8, 128), lambda i: (0, 0)),
            out_shape=jax.ShapeDtypeStruct((8, 128), jnp.float32),
        )(jnp.zeros((8, 128), jnp.float32))
        jax.block_until_ready(out)
        return True
    except Exception:
        return False


_SINGLE_BUFFERED_OK = _probe_single_buffering()


def _resident_spec(shape):
    """BlockSpec for a grid-invariant block: single-buffered when supported
    (halves its VMEM footprint; 16 MiB per W_hh at H=1024 matters on v7x)."""
    index_map = lambda *_: (0,) * len(shape)
    if _SINGLE_BUFFERED_OK:
        return pl.BlockSpec(shape, index_map, pipeline_mode=pl.Buffered(1))
    return pl.BlockSpec(shape, index_map)


# ----------------------------- tiling helpers --------------------------------

def _largest_divisor_leq(n, cap):
    cap = int(max(1, min(n, cap)))
    for d in range(cap, 0, -1):
        if n % d == 0:
            return d
    return 1


def _pick_row_tile(m, cap):
    """Largest divisor of m that is sublane-aligned (multiple of 8) and <= cap."""
    cap = int(max(8, min(m, cap)))
    for d in range(cap, 0, -1):
        if m % d == 0 and d % 8 == 0:
            return d
    return m


def _pick_col_tile(n, cap=512):
    """Largest lane-aligned (multiple of 128) divisor of n <= cap, else full n."""
    for d in range(min(n, cap), 0, -1):
        if n % d == 0 and d % 128 == 0:
            return d
    return n


def _auto_time_tile(T, B, H, act_bytes, has_outputs):
    """Derive the recurrence time tile from the scoped-VMEM budget."""
    budget = int(VMEM_LIMIT * 0.7)
    fixed = 2 * H * 4 * H * 4          # W_hh fwd+bwd (single-buffered, f32)
    fixed += 4 * B * H * 4             # h/c scratch
    per_t = 2 * 2 * B * 4 * H * act_bytes       # xg fwd+bwd, double-buffered
    if has_outputs:
        per_t += 2 * 2 * B * H * act_bytes      # out fwd+bwd, double-buffered
    cap = max(1, (budget - fixed) // max(per_t, 1))
    return _largest_divisor_leq(T, cap)


def _time_tiling(T, B, H, act_bytes, has_outputs, time_tile):
    tt = time_tile if time_tile is not None else _auto_time_tile(T, B, H, act_bytes,
                                                                 has_outputs)
    tt = max(1, min(tt, T))
    if T % tt != 0:
        tt = _largest_divisor_leq(T, tt)
    return tt, T // tt


def _pick_unroll(tt, B, H):
    """Unroll only while a step's live gate tensors (2 dirs x [B,4H] f32) fit in vregs."""
    live_vregs = (2 * B * 4 * H * 4) // 4096
    if live_vregs <= 16:
        u = 8
    elif live_vregs <= 64:
        u = 4
    elif live_vregs <= 128:
        u = 2
    else:
        u = 1
    return max(1, min(tt, u))


# ----------------------------- Pallas kernels --------------------------------

def _proj_l0_kernel(x_ref, wf_ref, wb_ref, bf_ref, bb_ref, gf_ref, gb_ref):
    """Layer-0 input projection: gf = x@Wf + bf, gb = x@Wb + bb (one gate-column tile)."""
    x = x_ref[...]
    gf_ref[...] = (jnp.dot(x, wf_ref[...], preferred_element_type=jnp.float32)
                   + bf_ref[...]).astype(gf_ref.dtype)
    gb_ref[...] = (jnp.dot(x, wb_ref[...], preferred_element_type=jnp.float32)
                   + bb_ref[...]).astype(gb_ref.dtype)


def _proj_deep_kernel(xf_ref, xb_ref, wff_ref, wbf_ref, wfb_ref, wbb_ref,
                      bf_ref, bb_ref, gf_ref, gb_ref):
    """Deeper-layer projection from the previous layer's (fwd, bwd) outputs.
    Uses pre-split W_ih halves -> no concat of [out_f, out_b] and no 8H intermediate."""
    xf = xf_ref[...]
    xb = xb_ref[...]
    gf_ref[...] = (jnp.dot(xf, wff_ref[...], preferred_element_type=jnp.float32)
                   + jnp.dot(xb, wbf_ref[...], preferred_element_type=jnp.float32)
                   + bf_ref[...]).astype(gf_ref.dtype)
    gb_ref[...] = (jnp.dot(xf, wfb_ref[...], preferred_element_type=jnp.float32)
                   + jnp.dot(xb, wbb_ref[...], preferred_element_type=jnp.float32)
                   + bb_ref[...]).astype(gb_ref.dtype)


def _lstm_step(xg, h, c, whh, H):
    """One LSTM cell update. xg: [B,4H] precomputed input gates (f32)."""
    gates = xg + jnp.dot(h, whh, preferred_element_type=jnp.float32)
    # PyTorch gate order i, f, g, o.  When H % 128 == 0 these slices are lane-tile
    # aligned -> free vreg views (no XLU extracts); pick H as a multiple of 128 for
    # real workloads.
    i = jax.nn.sigmoid(gates[:, 0:H])
    f = jax.nn.sigmoid(gates[:, H:2 * H])
    g = jnp.tanh(gates[:, 2 * H:3 * H])
    o = jax.nn.sigmoid(gates[:, 3 * H:4 * H])
    c_new = f * c + i * g
    h_new = o * jnp.tanh(c_new)
    return h_new, c_new


def _recurrence_tile(xg_f_ref, xg_b_ref, whh_f_ref, whh_b_ref,
                     h_f, c_f, h_b, c_b, out_f_ref, out_b_ref, unroll):
    """One time-tile of the fused bidirectional recurrence.

    xg_f_ref: [TT, B, 4H] forward input-gates tile (already X@W_ih + b)
    xg_b_ref: [TT, B, 4H] backward input-gates tile (reversed tile order via index_map)
    whh_*:    [H, 4H]     recurrent weights (resident, single-buffered)
    h_*/c_*:  [B, H]      persistent VMEM carries (touched once per tile)
    out_*:    [TT, B, H]  per-step outputs (None for the last layer)
    Returns the final (h_fwd, h_bwd) of this tile as register values.
    """
    TT = xg_f_ref.shape[0]
    H = h_f.shape[-1]

    @pl.when(pl.program_id(0) == 0)
    def _init():
        h_f[...] = jnp.zeros_like(h_f)
        c_f[...] = jnp.zeros_like(c_f)
        h_b[...] = jnp.zeros_like(h_b)
        c_b[...] = jnp.zeros_like(c_b)

    # Hoist weight loads out of the time loop.
    whh_f = whh_f_ref[...]
    whh_b = whh_b_ref[...]

    def body(t, carry):
        hf, cf, hb, cb = carry
        tb = TT - 1 - t   # backward direction walks this tile in reverse
        # Two independent recurrent chains -> their h@W_hh MXU pushes and EUP
        # sigmoid/tanh latencies interleave on one TensorCore.
        hf, cf = _lstm_step(xg_f_ref[t].astype(jnp.float32), hf, cf, whh_f, H)
        hb, cb = _lstm_step(xg_b_ref[tb].astype(jnp.float32), hb, cb, whh_b, H)
        if out_f_ref is not None:
            out_f_ref[t] = hf.astype(out_f_ref.dtype)
            out_b_ref[tb] = hb.astype(out_b_ref.dtype)
        return hf, cf, hb, cb

    carry0 = (h_f[...], c_f[...], h_b[...], c_b[...])
    hf, cf, hb, cb = lax.fori_loop(0, TT, body, carry0, unroll=unroll)
    # Single write-back per tile (carries stay register-resident inside the loop).
    h_f[...] = hf
    c_f[...] = cf
    h_b[...] = hb
    c_b[...] = cb
    return hf, hb


def _bilstm_mid_kernel(xg_f_ref, xg_b_ref, whh_f_ref, whh_b_ref,
                       out_f_ref, out_b_ref, h_f, c_f, h_b, c_b, *, unroll):
    """Non-final layer: emit per-step fwd/bwd hidden states for the next layer."""
    _recurrence_tile(xg_f_ref, xg_b_ref, whh_f_ref, whh_b_ref,
                     h_f, c_f, h_b, c_b, out_f_ref, out_b_ref, unroll)


def _bilstm_last_kernel(xg_f_ref, xg_b_ref, whh_f_ref, whh_b_ref,
                        wfc_f_ref, wfc_b_ref, bfc_ref, logits_ref,
                        h_f, c_f, h_b, c_b, *, unroll):
    """Final layer: only final hidden states matter; FC head fused in the epilogue."""
    hf, hb = _recurrence_tile(xg_f_ref, xg_b_ref, whh_f_ref, whh_b_ref,
                              h_f, c_f, h_b, c_b, None, None, unroll)

    @pl.when(pl.program_id(0) == pl.num_programs(0) - 1)
    def _fc():
        # hidden = cat(h_fwd_final, h_bwd_final); eval-mode dropout is identity.
        # Split dots against the pre-split FC halves -> no in-kernel concat.
        logits_ref[...] = (
            jnp.dot(hf, wfc_f_ref[...], preferred_element_type=jnp.float32)
            + jnp.dot(hb, wfc_b_ref[...], preferred_element_type=jnp.float32)
            + bfc_ref[...]).astype(logits_ref.dtype)


# ----------------------------- wrappers ---------------------------------------

def input_projection(x_parts, w_f_parts, w_b_parts, b_f, b_b, *, act_dtype):
    """gates_d = sum_k x_parts[k] @ w_d_parts[k] + b_d for d in {fwd, bwd}.

    Tiled over rows (M) and gate columns (4H, 128-aligned tile). Returns (gf, gb),
    each [M, 4H] in act_dtype.
    """
    M = x_parts[0].shape[0]
    N = w_f_parts[0].shape[1]                    # 4H
    tn = _pick_col_tile(N)
    nn = N // tn

    in_bytes = x_parts[0].dtype.itemsize
    out_bytes = jnp.dtype(act_dtype).itemsize
    k_sum = sum(xp.shape[1] for xp in x_parts)
    w_bytes = 2 * 2 * k_sum * tn * 4             # fwd+bwd weight blocks, double-buffered
    per_row = 2 * k_sum * in_bytes + 2 * 2 * tn * out_bytes
    budget = max(8 * per_row, int(VMEM_LIMIT * 0.6) - w_bytes)
    tm = _pick_row_tile(M, budget // per_row)
    nm = M // tm

    x_specs = [pl.BlockSpec((tm, xp.shape[1]), lambda j, i: (i, 0)) for xp in x_parts]
    w_specs = [pl.BlockSpec((wp.shape[0], tn), lambda j, i: (0, j))
               for wp in (*w_f_parts, *w_b_parts)]
    b_spec = pl.BlockSpec((1, tn), lambda j, i: (0, j))
    out_spec = pl.BlockSpec((tm, tn), lambda j, i: (i, j))

    kernel = _proj_l0_kernel if len(x_parts) == 1 else _proj_deep_kernel
    gf, gb = pl.pallas_call(
        kernel,
        grid=(nn, nm),          # gate-column tiles outer -> weight block resident per sweep
        in_specs=x_specs + w_specs + [b_spec, b_spec],
        out_specs=(out_spec, out_spec),
        out_shape=(jax.ShapeDtypeStruct((M, N), act_dtype),
                   jax.ShapeDtypeStruct((M, N), act_dtype)),
        compiler_params=pltpu.CompilerParams(
            dimension_semantics=("parallel", "parallel"),
            vmem_limit_bytes=VMEM_LIMIT),
    )(*x_parts, *w_f_parts, *w_b_parts, b_f, b_b)
    return gf, gb


def bilstm_layer(gf, gb, w_hh_f, w_hh_b, T, B, *, act_dtype, time_tile=None):
    """Fused bidirectional recurrence for a non-final layer -> (out_f, out_b) [T*B, H]."""
    H = w_hh_f.shape[0]
    gf3 = gf.reshape(T, B, 4 * H)
    gb3 = gb.reshape(T, B, 4 * H)
    act_bytes = jnp.dtype(act_dtype).itemsize
    tt, nt = _time_tiling(T, B, H, act_bytes, True, time_tile)
    unroll = _pick_unroll(tt, B, H)

    in_specs = [
        pl.BlockSpec((tt, B, 4 * H), lambda i: (i, 0, 0)),            # fwd tile i
        pl.BlockSpec((tt, B, 4 * H), lambda i: (nt - 1 - i, 0, 0)),   # bwd tile, reversed
        _resident_spec((H, 4 * H)),
        _resident_spec((H, 4 * H)),
    ]
    out_specs = (
        pl.BlockSpec((tt, B, H), lambda i: (i, 0, 0)),
        pl.BlockSpec((tt, B, H), lambda i: (nt - 1 - i, 0, 0)),
    )
    out_f, out_b = pl.pallas_call(
        functools.partial(_bilstm_mid_kernel, unroll=unroll),
        grid=(nt,),
        in_specs=in_specs,
        out_specs=out_specs,
        out_shape=(jax.ShapeDtypeStruct((T, B, H), act_dtype),
                   jax.ShapeDtypeStruct((T, B, H), act_dtype)),
        scratch_shapes=[pltpu.VMEM((B, H), jnp.float32)] * 4,
        compiler_params=pltpu.CompilerParams(
            dimension_semantics=("arbitrary",),   # h/c carry across time tiles
            vmem_limit_bytes=VMEM_LIMIT),
    )(gf3, gb3, w_hh_f, w_hh_b)
    return out_f.reshape(T * B, H), out_b.reshape(T * B, H)


def bilstm_last_layer(gf, gb, w_hh_f, w_hh_b, fc_w_f, fc_w_b, fc_b, T, B,
                      *, act_dtype, time_tile=None):
    """Final layer: recurrence + fused classifier head. Returns logits [B, O] (f32)."""
    H = w_hh_f.shape[0]
    O = fc_w_f.shape[1]
    gf3 = gf.reshape(T, B, 4 * H)
    gb3 = gb.reshape(T, B, 4 * H)
    act_bytes = jnp.dtype(act_dtype).itemsize
    tt, nt = _time_tiling(T, B, H, act_bytes, False, time_tile)
    unroll = _pick_unroll(tt, B, H)

    in_specs = [
        pl.BlockSpec((tt, B, 4 * H), lambda i: (i, 0, 0)),
        pl.BlockSpec((tt, B, 4 * H), lambda i: (nt - 1 - i, 0, 0)),
        _resident_spec((H, 4 * H)),
        _resident_spec((H, 4 * H)),
        _resident_spec((H, O)),
        _resident_spec((H, O)),
        _resident_spec((1, O)),
    ]
    logits = pl.pallas_call(
        functools.partial(_bilstm_last_kernel, unroll=unroll),
        grid=(nt,),
        in_specs=in_specs,
        out_specs=pl.BlockSpec((B, O), lambda i: (0, 0)),
        out_shape=jax.ShapeDtypeStruct((B, O), jnp.float32),
        scratch_shapes=[pltpu.VMEM((B, H), jnp.float32)] * 4,
        compiler_params=pltpu.CompilerParams(
            dimension_semantics=("arbitrary",),
            vmem_limit_bytes=VMEM_LIMIT),
    )(gf3, gb3, w_hh_f, w_hh_b, fc_w_f, fc_w_b, fc_b)
    return logits


def lstm_classifier_forward(params, input_ids, *, time_tile=None,
                            activation_dtype=jnp.float32):
    """Full forward pass matching LSTMClassifier.forward (eval mode, bidirectional).

    input_ids: [B, T] int32 -> logits [B, output_dim] float32.
    activation_dtype: storage dtype for xg gates / inter-layer activations
    (bf16 recommended on v6e/v7x; f32 keeps exact parity with the f32 reference).
    """
    B, T = input_ids.shape
    # Embedding lookup (gather) — glue in plain JAX.
    emb = jnp.take(params["embedding"], input_ids, axis=0)            # [B, T, E]
    # Sublane-pad the batch to a multiple of 8; padded rows are independent and sliced
    # off the final logits, so no masking is needed.
    B_p = ((B + 7) // 8) * 8
    if B_p != B:
        emb = jnp.pad(emb, ((0, B_p - B), (0, 0), (0, 0)))
    x = jnp.transpose(emb, (1, 0, 2)).astype(activation_dtype)        # [T, B_p, E]
    E = x.shape[-1]
    x2 = x.reshape(T * B_p, E)                                        # row = t*B_p + b

    layers = params["layers"]
    n_layers = len(layers)

    feat_f, feat_b = x2, None
    logits = None
    for li, p in enumerate(layers):
        # Hoisted input projection: one tiled GEMM per layer (bias folded in once).
        if li == 0:
            gf, gb = input_projection([feat_f], [p["w_ih_f"]], [p["w_ih_b"]],
                                      p["b_f"], p["b_b"], act_dtype=activation_dtype)
        else:
            gf, gb = input_projection(
                [feat_f, feat_b],
                [p["w_ih_f_from_f"], p["w_ih_f_from_b"]],
                [p["w_ih_b_from_f"], p["w_ih_b_from_b"]],
                p["b_f"], p["b_b"], act_dtype=activation_dtype)

        if li < n_layers - 1:
            # inter-layer dropout is identity in eval mode
            feat_f, feat_b = bilstm_layer(gf, gb, p["w_hh_f"], p["w_hh_b"], T, B_p,
                                          act_dtype=activation_dtype,
                                          time_tile=time_tile)
        else:
            logits = bilstm_last_layer(gf, gb, p["w_hh_f"], p["w_hh_b"],
                                       params["fc_w_f"], params["fc_w_b"],
                                       params["fc_b"], T, B_p,
                                       act_dtype=activation_dtype,
                                       time_tile=time_tile)
    return logits[:B]


# ----------------------------- parameter init ---------------------------------

def init_params(key, vocab_size, embedding_dim, hidden_dim, output_dim, n_layers,
                pad_idx):
    keys = jax.random.split(key, 3 + 8 * n_layers)
    it = iter(keys)

    emb = 0.1 * jax.random.normal(next(it), (vocab_size, embedding_dim), jnp.float32)
    emb = emb.at[pad_idx].set(0.0)   # padding_idx row zeroed, like nn.Embedding

    H = hidden_dim
    scale = 1.0 / jnp.sqrt(H)

    def uni(k, shape):
        return jax.random.uniform(k, shape, jnp.float32, -scale, scale)

    layers = []
    for layer in range(n_layers):
        e_in = embedding_dim if layer == 0 else 2 * H
        w_ih_f = uni(next(it), (e_in, 4 * H))
        w_hh_f = uni(next(it), (H, 4 * H))
        b_f = uni(next(it), (1, 4 * H)) + uni(next(it), (1, 4 * H))   # b_ih + b_hh
        w_ih_b = uni(next(it), (e_in, 4 * H))
        w_hh_b = uni(next(it), (H, 4 * H))
        b_b = uni(next(it), (1, 4 * H)) + uni(next(it), (1, 4 * H))
        p = {"b_f": b_f, "b_b": b_b, "w_hh_f": w_hh_f, "w_hh_b": w_hh_b}
        if layer == 0:
            p["w_ih_f"] = w_ih_f
            p["w_ih_b"] = w_ih_b
        else:
            # Pre-split by source direction (rows 0:H act on prev-fwd, H:2H on prev-bwd).
            p["w_ih_f_from_f"] = w_ih_f[:H]
            p["w_ih_f_from_b"] = w_ih_f[H:]
            p["w_ih_b_from_f"] = w_ih_b[:H]
            p["w_ih_b_from_b"] = w_ih_b[H:]
        layers.append(p)

    fc_w = uni(next(it), (2 * H, output_dim))
    fc_b = uni(next(it), (1, output_dim))
    return {"embedding": emb, "layers": layers,
            "fc_w_f": fc_w[:H], "fc_w_b": fc_w[H:], "fc_b": fc_b}


# ----------------------------- pure-JAX reference ------------------------------

def _ref_forward(params, input_ids):
    emb = jnp.take(params["embedding"], input_ids, axis=0)
    x = jnp.transpose(emb, (1, 0, 2)).astype(jnp.float32)    # [T, B, E]
    H = params["layers"][0]["w_hh_f"].shape[0]

    def run_dir(seq, w_ih, w_hh, b):
        T, B, _ = seq.shape
        h = jnp.zeros((B, H), jnp.float32)
        c = jnp.zeros((B, H), jnp.float32)
        outs = []
        for t in range(T):
            gates = seq[t] @ w_ih + h @ w_hh + b
            i = jax.nn.sigmoid(gates[:, 0:H])
            f = jax.nn.sigmoid(gates[:, H:2 * H])
            g = jnp.tanh(gates[:, 2 * H:3 * H])
            o = jax.nn.sigmoid(gates[:, 3 * H:4 * H])
            c = f * c + i * g
            h = o * jnp.tanh(c)
            outs.append(h)
        return jnp.stack(outs, 0), h

    layer_in = x
    h_f = h_b = None
    for li, p in enumerate(params["layers"]):
        if li == 0:
            w_ih_f, w_ih_b = p["w_ih_f"], p["w_ih_b"]
        else:
            w_ih_f = jnp.concatenate([p["w_ih_f_from_f"], p["w_ih_f_from_b"]], axis=0)
            w_ih_b = jnp.concatenate([p["w_ih_b_from_f"], p["w_ih_b_from_b"]], axis=0)
        out_f, h_f = run_dir(layer_in, w_ih_f, p["w_hh_f"], p["b_f"])
        out_b_rev, h_b = run_dir(layer_in[::-1], w_ih_b, p["w_hh_b"], p["b_b"])
        layer_in = jnp.concatenate([out_f, out_b_rev[::-1]], axis=-1)
    hidden = jnp.concatenate([h_f, h_b], axis=1)
    fc_w = jnp.concatenate([params["fc_w_f"], params["fc_w_b"]], axis=0)
    return hidden @ fc_w + params["fc_b"]


# ----------------------------- main --------------------------------------------

if __name__ == "__main__":
    vocab_size = 50
    embedding_dim = 32
    hidden_dim = 32      # for real workloads pick H as a multiple of 128 (lane-aligned gates)
    output_dim = 4
    n_layers = 2
    pad_idx = 0
    B, T = 2, 8

    key = jax.random.PRNGKey(0)
    k_param, k_ids = jax.random.split(key)
    params = init_params(k_param, vocab_size, embedding_dim, hidden_dim,
                         output_dim, n_layers, pad_idx)
    input_ids = jax.random.randint(k_ids, (B, T), 0, vocab_size, dtype=jnp.int32)

    # time_tile=4 -> 2 grid steps per layer, exercising the pipelined carry logic.
    fwd = jax.jit(functools.partial(lstm_classifier_forward, time_tile=4))
    out = jax.block_until_ready(fwd(params, input_ids))

    ref = _ref_forward(params, input_ids)
    assert out.shape == (B, output_dim)
    assert jnp.allclose(out, ref, atol=1e-4, rtol=1e-4), (out, ref)

    print("KERNEL_OK")
</pallas_src>

<mosaic_0001>
module attributes {stable_mosaic.version = 11 : i64} {
  func.func @k(%arg0: i32, %arg1: memref<8x128xf32, #tpu.memory_space<vmem>>, %arg2: memref<8x128xf32, #tpu.memory_space<vmem>>) attributes {dimension_semantics = [#tpu.dimension_semantics<arbitrary>], iteration_bounds = array<i64: 1>, scalar_prefetch = 0 : i64, scratch_operands = 0 : i64, tpu.core_type = #tpu.core_type<tc>, window_params = [{pipeline_mode = #tpu.pipeline_mode<synchronous>, transform_indices = @transform_0, window_bounds = array<i64: 8, 128>}, {pipeline_mode = #tpu.pipeline_mode<synchronous>, transform_indices = @transform_1, window_bounds = array<i64: 8, 128>}]} {
    %c0 = arith.constant 0 : index
    %c0_0 = arith.constant 0 : index
    %0 = vector.load %arg1[%c0, %c0_0] : memref<8x128xf32, #tpu.memory_space<vmem>>, vector<8x128xf32>
    %cst = arith.constant 1.000000e+00 : f32
    %1 = vector.broadcast %cst : f32 to vector<8x128xf32>
    %2 = arith.addf %0, %1 : vector<8x128xf32>
    %c0_1 = arith.constant 0 : index
    %c0_2 = arith.constant 0 : index
    %3 = vector.load %arg2[%c0_1, %c0_2] : memref<8x128xf32, #tpu.memory_space<vmem>>, vector<8x128xf32>
    tpu.vector_store %arg2[%c0_1, %c0_2], %2 {strides = array<i32>} : memref<8x128xf32, #tpu.memory_space<vmem>>, vector<8x128xf32>,
    return
  }
  func.func @transform_0(%arg0: i32) -> (i32, i32) {
    %c0_i32 = arith.constant 0 : i32
    %c0_i32_0 = arith.constant 0 : i32
    %c0_i32_1 = arith.constant 0 : i32
    return %c0_i32, %c0_i32_0 : i32, i32
  }
  func.func @transform_1(%arg0: i32) -> (i32, i32) {
    %c0_i32 = arith.constant 0 : i32
    %c0_i32_0 = arith.constant 0 : i32
    %c0_i32_1 = arith.constant 0 : i32
    return %c0_i32, %c0_i32_0 : i32, i32
  }
}

module attributes {stable_mosaic.version = 11 : i64} {
  func.func @_bilstm_last_kernel(%arg0: i32, %arg1: memref<4x8x128xf32, #tpu.memory_space<vmem>>, %arg2: memref<4x8x128xf32, #tpu.memory_space<vmem>>, %arg3: memref<32x128xf32, #tpu.memory_space<vmem>>, %arg4: memref<32x128xf32, #tpu.memory_space<vmem>>, %arg5: memref<32x4xf32, #tpu.memory_space<vmem>>, %arg6: memref<32x4xf32, #tpu.memory_space<vmem>>, %arg7: memref<1x4xf32, #tpu.memory_space<vmem>>, %arg8: memref<8x4xf32, #tpu.memory_space<vmem>>, %arg9: memref<8x32xf32, #tpu.memory_space<vmem>>, %arg10: memref<8x32xf32, #tpu.memory_space<vmem>>, %arg11: memref<8x32xf32, #tpu.memory_space<vmem>>, %arg12: memref<8x32xf32, #tpu.memory_space<vmem>>) attributes {dimension_semantics = [#tpu.dimension_semantics<arbitrary>], iteration_bounds = array<i64: 2>, scalar_prefetch = 0 : i64, scratch_operands = 4 : i64, tpu.core_type = #tpu.core_type<tc>, window_params = [{transform_indices = @transform_0, window_bounds = array<i64: 4, 8, 128>}, {transform_indices = @transform_1, window_bounds = array<i64: 4, 8, 128>}, {pipeline_mode = #tpu.pipeline_mode<synchronous>, transform_indices = @transform_2, window_bounds = array<i64: 32, 128>}, {pipeline_mode = #tpu.pipeline_mode<synchronous>, transform_indices = @transform_3, window_bounds = array<i64: 32, 128>}, {pipeline_mode = #tpu.pipeline_mode<synchronous>, transform_indices = @transform_4, window_bounds = array<i64: 32, 4>}, {pipeline_mode = #tpu.pipeline_mode<synchronous>, transform_indices = @transform_5, window_bounds = array<i64: 32, 4>}, {pipeline_mode = #tpu.pipeline_mode<synchronous>, transform_indices = @transform_6, window_bounds = array<i64: 1, 4>}, {pipeline_mode = #tpu.pipeline_mode<synchronous>, transform_indices = @transform_7, window_bounds = array<i64: 8, 4>}]} {
    %c0_i32 = arith.constant 0 : i32
    %0 = arith.cmpi eq, %arg0, %c0_i32 : i32
    %1 = arith.extui %0 : i1 to i32
    %c0_i32_0 = arith.constant 0 : i32
    %2 = arith.cmpi ne, %1, %c0_i32_0 : i32
    scf.if %2 {
      %cst_74 = arith.constant 0.000000e+00 : f32
      %260 = vector.broadcast %cst_74 : f32 to vector<8x32xf32>
      %c0_75 = arith.constant 0 : index
      %c0_76 = arith.constant 0 : index
      %261 = vector.load %arg9[%c0_75, %c0_76] : memref<8x32xf32, #tpu.memory_space<vmem>>, vector<8x32xf32>
      tpu.vector_store %arg9[%c0_75, %c0_76], %260 {strides = array<i32>} : memref<8x32xf32, #tpu.memory_space<vmem>>, vector<8x32xf32>,
      %cst_77 = arith.constant 0.000000e+00 : f32
      %262 = vector.broadcast %cst_77 : f32 to vector<8x32xf32>
      %c0_78 = arith.constant 0 : index
      %c0_79 = arith.constant 0 : index
      %263 = vector.load %arg10[%c0_78, %c0_79] : memref<8x32xf32, #tpu.memory_space<vmem>>, vector<8x32xf32>
      tpu.vector_store %arg10[%c0_78, %c0_79], %262 {strides = array<i32>} : memref<8x32xf32, #tpu.memory_space<vmem>>, vector<8x32xf32>,
      %cst_80 = arith.constant 0.000000e+00 : f32
      %264 = vector.broadcast %cst_80 : f32 to vector<8x32xf32>
      %c0_81 = arith.constant 0 : index
      %c0_82 = arith.constant 0 : index
      %265 = vector.load %arg11[%c0_81, %c0_82] : memref<8x32xf32, #tpu.memory_space<vmem>>, vector<8x32xf32>
      tpu.vector_store %arg11[%c0_81, %c0_82], %264 {strides = array<i32>} : memref<8x32xf32, #tpu.memory_space<vmem>>, vector<8x32xf32>,
      %cst_83 = arith.constant 0.000000e+00 : f32
      %266 = vector.broadcast %cst_83 : f32 to vector<8x32xf32>
      %c0_84 = arith.constant 0 : index
      %c0_85 = arith.constant 0 : index
      %267 = vector.load %arg12[%c0_84, %c0_85] : memref<8x32xf32, #tpu.memory_space<vmem>>, vector<8x32xf32>
      tpu.vector_store %arg12[%c0_84, %c0_85], %266 {strides = array<i32>} : memref<8x32xf32, #tpu.memory_space<vmem>>, vector<8x32xf32>,
    } else {
    }
    %c0 = arith.constant 0 : index
    %c0_1 = arith.constant 0 : index
    %3 = vector.load %arg3[%c0, %c0_1] : memref<32x128xf32, #tpu.memory_space<vmem>>, vector<32x128xf32>
    %c0_2 = arith.constant 0 : index
    %c0_3 = arith.constant 0 : index
    %4 = vector.load %arg4[%c0_2, %c0_3] : memref<32x128xf32, #tpu.memory_space<vmem>>, vector<32x128xf32>
    %c0_4 = arith.constant 0 : index
    %c0_5 = arith.constant 0 : index
    %5 = vector.load %arg9[%c0_4, %c0_5] : memref<8x32xf32, #tpu.memory_space<vmem>>, vector<8x32xf32>
    %c0_6 = arith.constant 0 : index
    %c0_7 = arith.constant 0 : index
    %6 = vector.load %arg10[%c0_6, %c0_7] : memref<8x32xf32, #tpu.memory_space<vmem>>, vector<8x32xf32>
    %c0_8 = arith.constant 0 : index
    %c0_9 = arith.constant 0 : index
    %7 = vector.load %arg11[%c0_8, %c0_9] : memref<8x32xf32, #tpu.memory_space<vmem>>, vector<8x32xf32>
    %c0_10 = arith.constant 0 : index
    %c0_11 = arith.constant 0 : index
    %8 = vector.load %arg12[%c0_10, %c0_11] : memref<8x32xf32, #tpu.memory_space<vmem>>, vector<8x32xf32>
    %c0_i32_12 = arith.constant 0 : i32
    %c3_i32 = arith.constant 3 : i32
    %9 = arith.subi %c3_i32, %c0_i32_12 : i32
    %10 = arith.index_cast %c0_i32_12 : i32 to index
    %c0_13 = arith.constant 0 : index
    %c0_14 = arith.constant 0 : index
    %11 = vector.load %arg1[%10, %c0_13, %c0_14] : memref<4x8x128xf32, #tpu.memory_space<vmem>>, vector<1x8x128xf32>
    %12 = vector.shape_cast %11 : vector<1x8x128xf32> to vector<8x128xf32>
    %cst = arith.constant dense<0.000000e+00> : vector<8x128xf32>
    %13 = tpu.matmul %5, %3, %cst {dimension_numbers = #tpu.dot_dimension_numbers<[1], [0], [0], [1], [0, 0, 1, 1], [], []>} : vector<8x32xf32>, vector<32x128xf32>, vector<8x128xf32> -> vector<8x128xf32>
    %14 = arith.addf %12, %13 : vector<8x128xf32>
    %15 = vector.extract_strided_slice %14 {offsets = [0, 0], sizes = [8, 32], strides = [1, 1]} : vector<8x128xf32> to vector<8x32xf32>
    %16 = arith.negf %15 : vector<8x32xf32>
    %17 = math.exp %16 : vector<8x32xf32>
    %cst_15 = arith.constant 1.000000e+00 : f32
    %18 = vector.broadcast %cst_15 : f32 to vector<8x32xf32>
    %19 = arith.addf %18, %17 : vector<8x32xf32>
    %20 = arith.divf %18, %19 : vector<8x32xf32>
    %21 = vector.extract_strided_slice %14 {offsets = [0, 32], sizes = [8, 32], strides = [1, 1]} : vector<8x128xf32> to vector<8x32xf32>
    %22 = arith.negf %21 : vector<8x32xf32>
    %23 = math.exp %22 : vector<8x32xf32>
    %cst_16 = arith.constant 1.000000e+00 : f32
    %24 = vector.broadcast %cst_16 : f32 to vector<8x32xf32>
    %25 = arith.addf %24, %23 : vector<8x32xf32>
    %26 = arith.divf %24, %25 : vector<8x32xf32>
    %27 = vector.extract_strided_slice %14 {offsets = [0, 64], sizes = [8, 32], strides = [1, 1]} : vector<8x128xf32> to vector<8x32xf32>
    %28 = math.tanh %27 : vector<8x32xf32>
    %29 = vector.extract_strided_slice %14 {offsets = [0, 96], sizes = [8, 32], strides = [1, 1]} : vector<8x128xf32> to vector<8x32xf32>
    %30 = arith.negf %29 : vector<8x32xf32>
    %31 = math.exp %30 : vector<8x32xf32>
    %cst_17 = arith.constant 1.000000e+00 : f32
    %32 = vector.broadcast %cst_17 : f32 to vector<8x32xf32>
    %33 = arith.addf %32, %31 : vector<8x32xf32>
    %34 = arith.divf %32, %33 : vector<8x32xf32>
    %35 = arith.mulf %26, %6 : vector<8x32xf32>
    %36 = arith.mulf %20, %28 : vector<8x32xf32>
    %37 = arith.addf %35, %36 : vector<8x32xf32>
    %38 = math.tanh %37 : vector<8x32xf32>
    %39 = arith.mulf %34, %38 : vector<8x32xf32>
    %40 = arith.index_cast %9 : i32 to index
    %c0_18 = arith.constant 0 : index
    %c0_19 = arith.constant 0 : index
    %41 = vector.load %arg2[%40, %c0_18, %c0_19] : memref<4x8x128xf32, #tpu.memory_space<vmem>>, vector<1x8x128xf32>
    %42 = vector.shape_cast %41 : vector<1x8x128xf32> to vector<8x128xf32>
    %cst_20 = arith.constant dense<0.000000e+00> : vector<8x128xf32>
    %43 = tpu.matmul %7, %4, %cst_20 {dimension_numbers = #tpu.dot_dimension_numbers<[1], [0], [0], [1], [0, 0, 1, 1], [], []>} : vector<8x32xf32>, vector<32x128xf32>, vector<8x128xf32> -> vector<8x128xf32>
    %44 = arith.addf %42, %43 : vector<8x128xf32>
    %45 = vector.extract_strided_slice %44 {offsets = [0, 0], sizes = [8, 32], strides = [1, 1]} : vector<8x128xf32> to vector<8x32xf32>
    %46 = arith.negf %45 : vector<8x32xf32>
    %47 = math.exp %46 : vector<8x32xf32>
    %cst_21 = arith.constant 1.000000e+00 : f32
    %48 = vector.broadcast %cst_21 : f32 to vector<8x32xf32>
    %49 = arith.addf %48, %47 : vector<8x32xf32>
    %50 = arith.divf %48, %49 : vector<8x32xf32>
    %51 = vector.extract_strided_slice %44 {offsets = [0, 32], sizes = [8, 32], strides = [1, 1]} : vector<8x128xf32> to vector<8x32xf32>
    %52 = arith.negf %51 : vector<8x32xf32>
    %53 = math.exp %52 : vector<8x32xf32>
    %cst_22 = arith.constant 1.000000e+00 : f32
    %54 = vector.broadcast %cst_22 : f32 to vector<8x32xf32>
    %55 = arith.addf %54, %53 : vector<8x32xf32>
    %56 = arith.divf %54, %55 : vector<8x32xf32>
    %57 = vector.extract_strided_slice %44 {offsets = [0, 64], sizes = [8, 32], strides = [1, 1]} : vector<8x128xf32> to vector<8x32xf32>
    %58 = math.tanh %57 : vector<8x32xf32>
    %59 = vector.extract_strided_slice %44 {offsets = [0, 96], sizes = [8, 32], strides = [1, 1]} : vector<8x128xf32> to vector<8x32xf32>
    %60 = arith.negf %59 : vector<8x32xf32>
    %61 = math.exp %60 : vector<8x32xf32>
    %cst_23 = arith.constant 1.000000e+00 : f32
    %62 = vector.broadcast %cst_23 : f32 to vector<8x32xf32>
    %63 = arith.addf %62, %61 : vector<8x32xf32>
    %64 = arith.divf %62, %63 : vector<8x32xf32>
    %65 = arith.mulf %56, %8 : vector<8x32xf32>
    %66 = arith.mulf %50, %58 : vector<8x32xf32>
    %67 = arith.addf %65, %66 : vector<8x32xf32>
    %68 = math.tanh %67 : vector<8x32xf32>
    %69 = arith.mulf %64, %68 : vector<8x32xf32>
    %c1_i32 = arith.constant 1 : i32
    %c3_i32_24 = arith.constant 3 : i32
    %70 = arith.subi %c3_i32_24, %c1_i32 : i32
    %71 = arith.index_cast %c1_i32 : i32 to index
    %c0_25 = arith.constant 0 : index
    %c0_26 = arith.constant 0 : index
    %72 = vector.load %arg1[%71, %c0_25, %c0_26] : memref<4x8x128xf32, #tpu.memory_space<vmem>>, vector<1x8x128xf32>
    %73 = vector.shape_cast %72 : vector<1x8x128xf32> to vector<8x128xf32>
    %cst_27 = arith.constant dense<0.000000e+00> : vector<8x128xf32>
    %74 = tpu.matmul %39, %3, %cst_27 {dimension_numbers = #tpu.dot_dimension_numbers<[1], [0], [0], [1], [0, 0, 1, 1], [], []>} : vector<8x32xf32>, vector<32x128xf32>, vector<8x128xf32> -> vector<8x128xf32>
    %75 = arith.addf %73, %74 : vector<8x128xf32>
    %76 = vector.extract_strided_slice %75 {offsets = [0, 0], sizes = [8, 32], strides = [1, 1]} : vector<8x128xf32> to vector<8x32xf32>
    %77 = arith.negf %76 : vector<8x32xf32>
    %78 = math.exp %77 : vector<8x32xf32>
    %cst_28 = arith.constant 1.000000e+00 : f32
    %79 = vector.broadcast %cst_28 : f32 to vector<8x32xf32>
    %80 = arith.addf %79, %78 : vector<8x32xf32>
    %81 = arith.divf %79, %80 : vector<8x32xf32>
    %82 = vector.extract_strided_slice %75 {offsets = [0, 32], sizes = [8, 32], strides = [1, 1]} : vector<8x128xf32> to vector<8x32xf32>
    %83 = arith.negf %82 : vector<8x32xf32>
    %84 = math.exp %83 : vector<8x32xf32>
    %cst_29 = arith.constant 1.000000e+00 : f32
    %85 = vector.broadcast %cst_29 : f32 to vector<8x32xf32>
    %86 = arith.addf %85, %84 : vector<8x32xf32>
    %87 = arith.divf %85, %86 : vector<8x32xf32>
    %88 = vector.extract_strided_slice %75 {offsets = [0, 64], sizes = [8, 32], strides = [1, 1]} : vector<8x128xf32> to vector<8x32xf32>
    %89 = math.tanh %88 : vector<8x32xf32>
    %90 = vector.extract_strided_slice %75 {offsets = [0, 96], sizes = [8, 32], strides = [1, 1]} : vector<8x128xf32> to vector<8x32xf32>
    %91 = arith.negf %90 : vector<8x32xf32>
    %92 = math.exp %91 : vector<8x32xf32>
    %cst_30 = arith.constant 1.000000e+00 : f32
    %93 = vector.broadcast %cst_30 : f32 to vector<8x32xf32>
    %94 = arith.addf %93, %92 : vector<8x32xf32>
    %95 = arith.divf %93, %94 : vector<8x32xf32>
    %96 = arith.mulf %87, %37 : vector<8x32xf32>
    %97 = arith.mulf %81, %89 : vector<8x32xf32>
    %98 = arith.addf %96, %97 : vector<8x32xf32>
    %99 = math.tanh %98 : vector<8x32xf32>
    %100 = arith.mulf %95, %99 : vector<8x32xf32>
    %101 = arith.index_cast %70 : i32 to index
    %c0_31 = arith.constant 0 : index
    %c0_32 = arith.constant 0 : index
    %102 = vector.load %arg2[%101, %c0_31, %c0_32] : memref<4x8x128xf32, #tpu.memory_space<vmem>>, vector<1x8x128xf32>
    %103 = vector.shape_cast %102 : vector<1x8x128xf32> to vector<8x128xf32>
    %cst_33 = arith.constant dense<0.000000e+00> : vector<8x128xf32>
    %104 = tpu.matmul %69, %4, %cst_33 {dimension_numbers = #tpu.dot_dimension_numbers<[1], [0], [0], [1], [0, 0, 1, 1], [], []>} : vector<8x32xf32>, vector<32x128xf32>, vector<8x128xf32> -> vector<8x128xf32>
    %105 = arith.addf %103, %104 : vector<8x128xf32>
    %106 = vector.extract_strided_slice %105 {offsets = [0, 0], sizes = [8, 32], strides = [1, 1]} : vector<8x128xf32> to vector<8x32xf32>
    %107 = arith.negf %106 : vector<8x32xf32>
    %108 = math.exp %107 : vector<8x32xf32>
    %cst_34 = arith.constant 1.000000e+00 : f32
    %109 = vector.broadcast %cst_34 : f32 to vector<8x32xf32>
    %110 = arith.addf %109, %108 : vector<8x32xf32>
    %111 = arith.divf %109, %110 : vector<8x32xf32>
    %112 = vector.extract_strided_slice %105 {offsets = [0, 32], sizes = [8, 32], strides = [1, 1]} : vector<8x128xf32> to vector<8x32xf32>
    %113 = arith.negf %112 : vector<8x32xf32>
    %114 = math.exp %113 : vector<8x32xf32>
    %cst_35 = arith.constant 1.000000e+00 : f32
    %115 = vector.broadcast %cst_35 : f32 to vector<8x32xf32>
    %116 = arith.addf %115, %114 : vector<8x32xf32>
    %117 = arith.divf %115, %116 : vector<8x32xf32>
    %118 = vector.extract_strided_slice %105 {offsets = [0, 64], sizes = [8, 32], strides = [1, 1]} : vector<8x128xf32> to vector<8x32xf32>
    %119 = math.tanh %118 : vector<8x32xf32>
    %120 = vector.extract_strided_slice %105 {offsets = [0, 96], sizes = [8, 32], strides = [1, 1]} : vector<8x128xf32> to vector<8x32xf32>
    %121 = arith.negf %120 : vector<8x32xf32>
    %122 = math.exp %121 : vector<8x32xf32>
    %cst_36 = arith.constant 1.000000e+00 : f32
    %123 = vector.broadcast %cst_36 : f32 to vector<8x32xf32>
    %124 = arith.addf %123, %122 : vector<8x32xf32>
    %125 = arith.divf %123, %124 : vector<8x32xf32>
    %126 = arith.mulf %117, %67 : vector<8x32xf32>
    %127 = arith.mulf %111, %119 : vector<8x32xf32>
    %128 = arith.addf %126, %127 : vector<8x32xf32>
    %129 = math.tanh %128 : vector<8x32xf32>
    %130 = arith.mulf %125, %129 : vector<8x32xf32>
    %c2_i32 = arith.constant 2 : i32
    %c3_i32_37 = arith.constant 3 : i32
    %131 = arith.subi %c3_i32_37, %c2_i32 : i32
    %132 = arith.index_cast %c2_i32 : i32 to index
    %c0_38 = arith.constant 0 : index
    %c0_39 = arith.constant 0 : index
    %133 = vector.load %arg1[%132, %c0_38, %c0_39] : memref<4x8x128xf32, #tpu.memory_space<vmem>>, vector<1x8x128xf32>
    %134 = vector.shape_cast %133 : vector<1x8x128xf32> to vector<8x128xf32>
    %cst_40 = arith.constant dense<0.000000e+00> : vector<8x128xf32>
    %135 = tpu.matmul %100, %3, %cst_40 {dimension_numbers = #tpu.dot_dimension_numbers<[1], [0], [0], [1], [0, 0, 1, 1], [], []>} : vector<8x32xf32>, vector<32x128xf32>, vector<8x128xf32> -> vector<8x128xf32>
    %136 = arith.addf %134, %135 : vector<8x128xf32>
    %137 = vector.extract_strided_slice %136 {offsets = [0, 0], sizes = [8, 32], strides = [1, 1]} : vector<8x128xf32> to vector<8x32xf32>
    %138 = arith.negf %137 : vector<8x32xf32>
    %139 = math.exp %138 : vector<8x32xf32>
    %cst_41 = arith.constant 1.000000e+00 : f32
    %140 = vector.broadcast %cst_41 : f32 to vector<8x32xf32>
    %141 = arith.addf %140, %139 : vector<8x32xf32>
    %142 = arith.divf %140, %141 : vector<8x32xf32>
    %143 = vector.extract_strided_slice %136 {offsets = [0, 32], sizes = [8, 32], strides = [1, 1]} : vector<8x128xf32> to vector<8x32xf32>
    %144 = arith.negf %143 : vector<8x32xf32>
    %145 = math.exp %144 : vector<8x32xf32>
    %cst_42 = arith.constant 1.000000e+00 : f32
    %146 = vector.broadcast %cst_42 : f32 to vector<8x32xf32>
    %147 = arith.addf %146, %145 : vector<8x32xf32>
    %148 = arith.divf %146, %147 : vector<8x32xf32>
    %149 = vector.extract_strided_slice %136 {offsets = [0, 64], sizes = [8, 32], strides = [1, 1]} : vector<8x128xf32> to vector<8x32xf32>
    %150 = math.tanh %149 : vector<8x32xf32>
    %151 = vector.extract_strided_slice %136 {offsets = [0, 96], sizes = [8, 32], strides = [1, 1]} : vector<8x128xf32> to vector<8x32xf32>
    %152 = arith.negf %151 : vector<8x32xf32>
    %153 = math.exp %152 : vector<8x32xf32>
    %cst_43 = arith.constant 1.000000e+00 : f32
    %154 = vector.broadcast %cst_43 : f32 to vector<8x32xf32>
    %155 = arith.addf %154, %153 : vector<8x32xf32>
    %156 = arith.divf %154, %155 : vector<8x32xf32>
    %157 = arith.mulf %148, %98 : vector<8x32xf32>
    %158 = arith.mulf %142, %150 : vector<8x32xf32>
    %159 = arith.addf %157, %158 : vector<8x32xf32>
    %160 = math.tanh %159 : vector<8x32xf32>
    %161 = arith.mulf %156, %160 : vector<8x32xf32>
    %162 = arith.index_cast %131 : i32 to index
    %c0_44 = arith.constant 0 : index
    %c0_45 = arith.constant 0 : index
    %163 = vector.load %arg2[%162, %c0_44, %c0_45] : memref<4x8x128xf32, #tpu.memory_space<vmem>>, vector<1x8x128xf32>
    %164 = vector.shape_cast %163 : vector<1x8x128xf32> to vector<8x128xf32>
    %cst_46 = arith.constant dense<0.000000e+00> : vector<8x128xf32>
    %165 = tpu.matmul %130, %4, %cst_46 {dimension_numbers = #tpu.dot_dimension_numbers<[1], [0], [0], [1], [0, 0, 1, 1], [], []>} : vector<8x32xf32>, vector<32x128xf32>, vector<8x128xf32> -> vector<8x128xf32>
    %166 = arith.addf %164, %165 : vector<8x128xf32>
    %167 = vector.extract_strided_slice %166 {offsets = [0, 0], sizes = [8, 32], strides = [1, 1]} : vector<8x128xf32> to vector<8x32xf32>
    %168 = arith.negf %167 : vector<8x32xf32>
    %169 = math.exp %168 : vector<8x32xf32>
    %cst_47 = arith.constant 1.000000e+00 : f32
    %170 = vector.broadcast %cst_47 : f32 to vector<8x32xf32>
    %171 = arith.addf %170, %169 : vector<8x32xf32>
    %172 = arith.divf %170, %171 : vector<8x32xf32>
    %173 = vector.extract_strided_slice %166 {offsets = [0, 32], sizes = [8, 32], strides = [1, 1]} : vector<8x128xf32> to vector<8x32xf32>
    %174 = arith.negf %173 : vector<8x32xf32>
    %175 = math.exp %174 : vector<8x32xf32>
    %cst_48 = arith.constant 1.000000e+00 : f32
    %176 = vector.broadcast %cst_48 : f32 to vector<8x32xf32>
    %177 = arith.addf %176, %175 : vector<8x32xf32>
    %178 = arith.divf %176, %177 : vector<8x32xf32>
    %179 = vector.extract_strided_slice %166 {offsets = [0, 64], sizes = [8, 32], strides = [1, 1]} : vector<8x128xf32> to vector<8x32xf32>
    %180 = math.tanh %179 : vector<8x32xf32>
    %181 = vector.extract_strided_slice %166 {offsets = [0, 96], sizes = [8, 32], strides = [1, 1]} : vector<8x128xf32> to vector<8x32xf32>
    %182 = arith.negf %181 : vector<8x32xf32>
    %183 = math.exp %182 : vector<8x32xf32>
    %cst_49 = arith.constant 1.000000e+00 : f32
    %184 = vector.broadcast %cst_49 : f32 to vector<8x32xf32>
    %185 = arith.addf %184, %183 : vector<8x32xf32>
    %186 = arith.divf %184, %185 : vector<8x32xf32>
    %187 = arith.mulf %178, %128 : vector<8x32xf32>
    %188 = arith.mulf %172, %180 : vector<8x32xf32>
    %189 = arith.addf %187, %188 : vector<8x32xf32>
    %190 = math.tanh %189 : vector<8x32xf32>
    %191 = arith.mulf %186, %190 : vector<8x32xf32>
    %c3_i32_50 = arith.constant 3 : i32
    %c3_i32_51 = arith.constant 3 : i32
    %192 = arith.subi %c3_i32_51, %c3_i32_50 : i32
    %193 = arith.index_cast %c3_i32_50 : i32 to index
    %c0_52 = arith.constant 0 : index
    %c0_53 = arith.constant 0 : index
    %194 = vector.load %arg1[%193, %c0_52, %c0_53] : memref<4x8x128xf32, #tpu.memory_space<vmem>>, vector<1x8x128xf32>
    %195 = vector.shape_cast %194 : vector<1x8x128xf32> to vector<8x128xf32>
    %cst_54 = arith.constant dense<0.000000e+00> : vector<8x128xf32>
    %196 = tpu.matmul %161, %3, %cst_54 {dimension_numbers = #tpu.dot_dimension_numbers<[1], [0], [0], [1], [0, 0, 1, 1], [], []>} : vector<8x32xf32>, vector<32x128xf32>, vector<8x128xf32> -> vector<8x128xf32>
    %197 = arith.addf %195, %196 : vector<8x128xf32>
    %198 = vector.extract_strided_slice %197 {offsets = [0, 0], sizes = [8, 32], strides = [1, 1]} : vector<8x128xf32> to vector<8x32xf32>
    %199 = arith.negf %198 : vector<8x32xf32>
    %200 = math.exp %199 : vector<8x32xf32>
    %cst_55 = arith.constant 1.000000e+00 : f32
    %201 = vector.broadcast %cst_55 : f32 to vector<8x32xf32>
    %202 = arith.addf %201, %200 : vector<8x32xf32>
    %203 = arith.divf %201, %202 : vector<8x32xf32>
    %204 = vector.extract_strided_slice %197 {offsets = [0, 32], sizes = [8, 32], strides = [1, 1]} : vector<8x128xf32> to vector<8x32xf32>
    %205 = arith.negf %204 : vector<8x32xf32>
    %206 = math.exp %205 : vector<8x32xf32>
    %cst_56 = arith.constant 1.000000e+00 : f32
    %207 = vector.broadcast %cst_56 : f32 to vector<8x32xf32>
    %208 = arith.addf %207, %206 : vector<8x32xf32>
    %209 = arith.divf %207, %208 : vector<8x32xf32>
    %210 = vector.extract_strided_slice %197 {offsets = [0, 64], sizes = [8, 32], strides = [1, 1]} : vector<8x128xf32> to vector<8x32xf32>
    %211 = math.tanh %210 : vector<8x32xf32>
    %212 = vector.extract_strided_slice %197 {offsets = [0, 96], sizes = [8, 32], strides = [1, 1]} : vector<8x128xf32> to vector<8x32xf32>
    %213 = arith.negf %212 : vector<8x32xf32>
    %214 = math.exp %213 : vector<8x32xf32>
    %cst_57 = arith.constant 1.000000e+00 : f32
    %215 = vector.broadcast %cst_57 : f32 to vector<8x32xf32>
    %216 = arith.addf %215, %214 : vector<8x32xf32>
    %217 = arith.divf %215, %216 : vector<8x32xf32>
    %218 = arith.mulf %209, %159 : vector<8x32xf32>
    %219 = arith.mulf %203, %211 : vector<8x32xf32>
    %220 = arith.addf %218, %219 : vector<8x32xf32>
    %221 = math.tanh %220 : vector<8x32xf32>
    %222 = arith.mulf %217, %221 : vector<8x32xf32>
    %223 = arith.index_cast %192 : i32 to index
    %c0_58 = arith.constant 0 : index
    %c0_59 = arith.constant 0 : index
    %224 = vector.load %arg2[%223, %c0_58, %c0_59] : memref<4x8x128xf32, #tpu.memory_space<vmem>>, vector<1x8x128xf32>
    %225 = vector.shape_cast %224 : vector<1x8x128xf32> to vector<8x128xf32>
    %cst_60 = arith.constant dense<0.000000e+00> : vector<8x128xf32>
    %226 = tpu.matmul %191, %4, %cst_60 {dimension_numbers = #tpu.dot_dimension_numbers<[1], [0], [0], [1], [0, 0, 1, 1], [], []>} : vector<8x32xf32>, vector<32x128xf32>, vector<8x128xf32> -> vector<8x128xf32>
    %227 = arith.addf %225, %226 : vector<8x128xf32>
    %228 = vector.extract_strided_slice %227 {offsets = [0, 0], sizes = [8, 32], strides = [1, 1]} : vector<8x128xf32> to vector<8x32xf32>
    %229 = arith.negf %228 : vector<8x32xf32>
    %230 = math.exp %229 : vector<8x32xf32>
    %cst_61 = arith.constant 1.000000e+00 : f32
    %231 = vector.broadcast %cst_61 : f32 to vector<8x32xf32>
    %232 = arith.addf %231, %230 : vector<8x32xf32>
    %233 = arith.divf %231, %232 : vector<8x32xf32>
    %234 = vector.extract_strided_slice %227 {offsets = [0, 32], sizes = [8, 32], strides = [1, 1]} : vector<8x128xf32> to vector<8x32xf32>
    %235 = arith.negf %234 : vector<8x32xf32>
    %236 = math.exp %235 : vector<8x32xf32>
    %cst_62 = arith.constant 1.000000e+00 : f32
    %237 = vector.broadcast %cst_62 : f32 to vector<8x32xf32>
    %238 = arith.addf %237, %236 : vector<8x32xf32>
    %239 = arith.divf %237, %238 : vector<8x32xf32>
    %240 = vector.extract_strided_slice %227 {offsets = [0, 64], sizes = [8, 32], strides = [1, 1]} : vector<8x128xf32> to vector<8x32xf32>
    %241 = math.tanh %240 : vector<8x32xf32>
    %242 = vector.extract_strided_slice %227 {offsets = [0, 96], sizes = [8, 32], strides = [1, 1]} : vector<8x128xf32> to vector<8x32xf32>
    %243 = arith.negf %242 : vector<8x32xf32>
    %244 = math.exp %243 : vector<8x32xf32>
    %cst_63 = arith.constant 1.000000e+00 : f32
    %245 = vector.broadcast %cst_63 : f32 to vector<8x32xf32>
    %246 = arith.addf %245, %244 : vector<8x32xf32>
    %247 = arith.divf %245, %246 : vector<8x32xf32>
    %248 = arith.mulf %239, %189 : vector<8x32xf32>
    %249 = arith.mulf %233, %241 : vector<8x32xf32>
    %250 = arith.addf %248, %249 : vector<8x32xf32>
    %251 = math.tanh %250 : vector<8x32xf32>
    %252 = arith.mulf %247, %251 : vector<8x32xf32>
    %c4_i32 = arith.constant 4 : i32
    %c0_64 = arith.constant 0 : index
    %c0_65 = arith.constant 0 : index
    %253 = vector.load %arg9[%c0_64, %c0_65] : memref<8x32xf32, #tpu.memory_space<vmem>>, vector<8x32xf32>
    tpu.vector_store %arg9[%c0_64, %c0_65], %222 {strides = array<i32>} : memref<8x32xf32, #tpu.memory_space<vmem>>, vector<8x32xf32>,
    %c0_66 = arith.constant 0 : index
    %c0_67 = arith.constant 0 : index
    %254 = vector.load %arg10[%c0_66, %c0_67] : memref<8x32xf32, #tpu.memory_space<vmem>>, vector<8x32xf32>
    tpu.vector_store %arg10[%c0_66, %c0_67], %220 {strides = array<i32>} : memref<8x32xf32, #tpu.memory_space<vmem>>, vector<8x32xf32>,
    %c0_68 = arith.constant 0 : index
    %c0_69 = arith.constant 0 : index
    %255 = vector.load %arg11[%c0_68, %c0_69] : memref<8x32xf32, #tpu.memory_space<vmem>>, vector<8x32xf32>
    tpu.vector_store %arg11[%c0_68, %c0_69], %252 {strides = array<i32>} : memref<8x32xf32, #tpu.memory_space<vmem>>, vector<8x32xf32>,
    %c0_70 = arith.constant 0 : index
    %c0_71 = arith.constant 0 : index
    %256 = vector.load %arg12[%c0_70, %c0_71] : memref<8x32xf32, #tpu.memory_space<vmem>>, vector<8x32xf32>
    tpu.vector_store %arg12[%c0_70, %c0_71], %250 {strides = array<i32>} : memref<8x32xf32, #tpu.memory_space<vmem>>, vector<8x32xf32>,
    %c1_i32_72 = arith.constant 1 : i32
    %257 = arith.cmpi eq, %arg0, %c1_i32_72 : i32
    %258 = arith.extui %257 : i1 to i32
    %c0_i32_73 = arith.constant 0 : i32
    %259 = arith.cmpi ne, %258, %c0_i32_73 : i32
    scf.if %259 {
      %c0_74 = arith.constant 0 : index
      %c0_75 = arith.constant 0 : index
      %260 = vector.load %arg5[%c0_74, %c0_75] : memref<32x4xf32, #tpu.memory_space<vmem>>, vector<32x4xf32>
      %cst_76 = arith.constant dense<0.000000e+00> : vector<8x4xf32>
      %261 = tpu.matmul %222, %260, %cst_76 {dimension_numbers = #tpu.dot_dimension_numbers<[1], [0], [0], [1], [0, 0, 1, 1], [], []>} : vector<8x32xf32>, vector<32x4xf32>, vector<8x4xf32> -> vector<8x4xf32>
      %c0_77 = arith.constant 0 : index
      %c0_78 = arith.constant 0 : index
      %262 = vector.load %arg6[%c0_77, %c0_78] : memref<32x4xf32, #tpu.memory_space<vmem>>, vector<32x4xf32>
      %cst_79 = arith.constant dense<0.000000e+00> : vector<8x4xf32>
      %263 = tpu.matmul %252, %262, %cst_79 {dimension_numbers = #tpu.dot_dimension_numbers<[1], [0], [0], [1], [0, 0, 1, 1], [], []>} : vector<8x32xf32>, vector<32x4xf32>, vector<8x4xf32> -> vector<8x4xf32>
      %264 = arith.addf %261, %263 : vector<8x4xf32>
      %c0_80 = arith.constant 0 : index
      %c0_81 = arith.constant 0 : index
      %265 = vector.load %arg7[%c0_80, %c0_81] : memref<1x4xf32, #tpu.memory_space<vmem>>, vector<1x4xf32>
      %266 = vector.broadcast %265 : vector<1x4xf32> to vector<8x4xf32>
      %267 = arith.addf %264, %266 : vector<8x4xf32>
      %c0_82 = arith.constant 0 : index
      %c0_83 = arith.constant 0 : index
      %268 = vector.load %arg8[%c0_82, %c0_83] : memref<8x4xf32, #tpu.memory_space<vmem>>, vector<8x4xf32>
      tpu.vector_store %arg8[%c0_82, %c0_83], %267 {strides = array<i32>} : memref<8x4xf32, #tpu.memory_space<vmem>>, vector<8x4xf32>,
    } else {
    }
    return
  }
  func.func @transform_0(%arg0: i32) -> (i32, i32, i32) {
    %c0_i32 = arith.constant 0 : i32
    %c0_i32_0 = arith.constant 0 : i32
    %c0_i32_1 = arith.constant 0 : i32
    return %arg0, %c0_i32, %c0_i32_0 : i32, i32, i32
  }
  func.func @transform_1(%arg0: i32) -> (i32, i32, i32) {
    %c1_i32 = arith.constant 1 : i32
    %0 = arith.subi %c1_i32, %arg0 : i32
    %c0_i32 = arith.constant 0 : i32
    %c0_i32_0 = arith.constant 0 : i32
    %c0_i32_1 = arith.constant 0 : i32
    return %0, %c0_i32, %c0_i32_0 : i32, i32, i32
  }
  func.func @transform_2(%arg0: i32) -> (i32, i32) {
    %c0_i32 = arith.constant 0 : i32
    %c0_i32_0 = arith.constant 0 : i32
    %c0_i32_1 = arith.constant 0 : i32
    return %c0_i32, %c0_i32_0 : i32, i32
  }
  func.func @transform_3(%arg0: i32) -> (i32, i32) {
    %c0_i32 = arith.constant 0 : i32
    %c0_i32_0 = arith.constant 0 : i32
    %c0_i32_1 = arith.constant 0 : i32
    return %c0_i32, %c0_i32_0 : i32, i32
  }
  func.func @transform_4(%arg0: i32) -> (i32, i32) {
    %c0_i32 = arith.constant 0 : i32
    %c0_i32_0 = arith.constant 0 : i32
    %c0_i32_1 = arith.constant 0 : i32
    return %c0_i32, %c0_i32_0 : i32, i32
  }
  func.func @transform_5(%arg0: i32) -> (i32, i32) {
    %c0_i32 = arith.constant 0 : i32
    %c0_i32_0 = arith.constant 0 : i32
    %c0_i32_1 = arith.constant 0 : i32
    return %c0_i32, %c0_i32_0 : i32, i32
  }
  func.func @transform_6(%arg0: i32) -> (i32, i32) {
    %c0_i32 = arith.constant 0 : i32
    %c0_i32_0 = arith.constant 0 : i32
    %c0_i32_1 = arith.constant 0 : i32
    return %c0_i32, %c0_i32_0 : i32, i32
  }
  func.func @transform_7(%arg0: i32) -> (i32, i32) {
    %c0_i32 = arith.constant 0 : i32
    %c0_i32_0 = arith.constant 0 : i32
    %c0_i32_1 = arith.constant 0 : i32
    return %c0_i32, %c0_i32_0 : i32, i32
  }
}

module attributes {stable_mosaic.version = 11 : i64} {
  func.func @_proj_l0_kernel(%arg0: i32, %arg1: i32, %arg2: memref<64x32xf32, #tpu.memory_space<vmem>>, %arg3: memref<32x128xf32, #tpu.memory_space<vmem>>, %arg4: memref<32x128xf32, #tpu.memory_space<vmem>>, %arg5: memref<1x128xf32, #tpu.memory_space<vmem>>, %arg6: memref<1x128xf32, #tpu.memory_space<vmem>>, %arg7: memref<64x128xf32, #tpu.memory_space<vmem>>, %arg8: memref<64x128xf32, #tpu.memory_space<vmem>>) attributes {dimension_semantics = [#tpu.dimension_semantics<parallel>, #tpu.dimension_semantics<parallel>], iteration_bounds = array<i64: 1, 1>, scalar_prefetch = 0 : i64, scratch_operands = 0 : i64, tpu.core_type = #tpu.core_type<tc>, window_params = [{transform_indices = @transform_0, window_bounds = array<i64: 64, 32>}, {transform_indices = @transform_1, window_bounds = array<i64: 32, 128>}, {transform_indices = @transform_2, window_bounds = array<i64: 32, 128>}, {transform_indices = @transform_3, window_bounds = array<i64: 1, 128>}, {transform_indices = @transform_4, window_bounds = array<i64: 1, 128>}, {transform_indices = @transform_5, window_bounds = array<i64: 64, 128>}, {transform_indices = @transform_6, window_bounds = array<i64: 64, 128>}]} {
    %c0 = arith.constant 0 : index
    %c0_0 = arith.constant 0 : index
    %0 = vector.load %arg2[%c0, %c0_0] : memref<64x32xf32, #tpu.memory_space<vmem>>, vector<64x32xf32>
    %c0_1 = arith.constant 0 : index
    %c0_2 = arith.constant 0 : index
    %1 = vector.load %arg3[%c0_1, %c0_2] : memref<32x128xf32, #tpu.memory_space<vmem>>, vector<32x128xf32>
    %cst = arith.constant dense<0.000000e+00> : vector<64x128xf32>
    %2 = tpu.matmul %0, %1, %cst {dimension_numbers = #tpu.dot_dimension_numbers<[1], [0], [0], [1], [0, 0, 1, 1], [], []>} : vector<64x32xf32>, vector<32x128xf32>, vector<64x128xf32> -> vector<64x128xf32>
    %c0_3 = arith.constant 0 : index
    %c0_4 = arith.constant 0 : index
    %3 = vector.load %arg5[%c0_3, %c0_4] : memref<1x128xf32, #tpu.memory_space<vmem>>, vector<1x128xf32>
    %4 = vector.broadcast %3 : vector<1x128xf32> to vector<64x128xf32>
    %5 = arith.addf %2, %4 : vector<64x128xf32>
    %c0_5 = arith.constant 0 : index
    %c0_6 = arith.constant 0 : index
    %6 = vector.load %arg7[%c0_5, %c0_6] : memref<64x128xf32, #tpu.memory_space<vmem>>, vector<64x128xf32>
    tpu.vector_store %arg7[%c0_5, %c0_6], %5 {strides = array<i32>} : memref<64x128xf32, #tpu.memory_space<vmem>>, vector<64x128xf32>,
    %c0_7 = arith.constant 0 : index
    %c0_8 = arith.constant 0 : index
    %7 = vector.load %arg4[%c0_7, %c0_8] : memref<32x128xf32, #tpu.memory_space<vmem>>, vector<32x128xf32>
    %cst_9 = arith.constant dense<0.000000e+00> : vector<64x128xf32>
    %8 = tpu.matmul %0, %7, %cst_9 {dimension_numbers = #tpu.dot_dimension_numbers<[1], [0], [0], [1], [0, 0, 1, 1], [], []>} : vector<64x32xf32>, vector<32x128xf32>, vector<64x128xf32> -> vector<64x128xf32>
    %c0_10 = arith.constant 0 : index
    %c0_11 = arith.constant 0 : index
    %9 = vector.load %arg6[%c0_10, %c0_11] : memref<1x128xf32, #tpu.memory_space<vmem>>, vector<1x128xf32>
    %10 = vector.broadcast %9 : vector<1x128xf32> to vector<64x128xf32>
    %11 = arith.addf %8, %10 : vector<64x128xf32>
    %c0_12 = arith.constant 0 : index
    %c0_13 = arith.constant 0 : index
    %12 = vector.load %arg8[%c0_12, %c0_13] : memref<64x128xf32, #tpu.memory_space<vmem>>, vector<64x128xf32>
    tpu.vector_store %arg8[%c0_12, %c0_13], %11 {strides = array<i32>} : memref<64x128xf32, #tpu.memory_space<vmem>>, vector<64x128xf32>,
    return
  }
  func.func @transform_0(%arg0: i32, %arg1: i32) -> (i32, i32) {
    %c0_i32 = arith.constant 0 : i32
    %c0_i32_0 = arith.constant 0 : i32
    return %arg1, %c0_i32 : i32, i32
  }
  func.func @transform_1(%arg0: i32, %arg1: i32) -> (i32, i32) {
    %c0_i32 = arith.constant 0 : i32
    %c0_i32_0 = arith.constant 0 : i32
    return %c0_i32, %arg0 : i32, i32
  }
  func.func @transform_2(%arg0: i32, %arg1: i32) -> (i32, i32) {
    %c0_i32 = arith.constant 0 : i32
    %c0_i32_0 = arith.constant 0 : i32
    return %c0_i32, %arg0 : i32, i32
  }
  func.func @transform_3(%arg0: i32, %arg1: i32) -> (i32, i32) {
    %c0_i32 = arith.constant 0 : i32
    %c0_i32_0 = arith.constant 0 : i32
    return %c0_i32, %arg0 : i32, i32
  }
  func.func @transform_4(%arg0: i32, %arg1: i32) -> (i32, i32) {
    %c0_i32 = arith.constant 0 : i32
    %c0_i32_0 = arith.constant 0 : i32
    return %c0_i32, %arg0 : i32, i32
  }
  func.func @transform_5(%arg0: i32, %arg1: i32) -> (i32, i32) {
    %c0_i32 = arith.constant 0 : i32
    return %arg1, %arg0 : i32, i32
  }
  func.func @transform_6(%arg0: i32, %arg1: i32) -> (i32, i32) {
    %c0_i32 = arith.constant 0 : i32
    return %arg1, %arg0 : i32, i32
  }
}

module attributes {stable_mosaic.version = 11 : i64} {
  func.func @_proj_deep_kernel(%arg0: i32, %arg1: i32, %arg2: memref<64x32xf32, #tpu.memory_space<vmem>>, %arg3: memref<64x32xf32, #tpu.memory_space<vmem>>, %arg4: memref<32x128xf32, #tpu.memory_space<vmem>>, %arg5: memref<32x128xf32, #tpu.memory_space<vmem>>, %arg6: memref<32x128xf32, #tpu.memory_space<vmem>>, %arg7: memref<32x128xf32, #tpu.memory_space<vmem>>, %arg8: memref<1x128xf32, #tpu.memory_space<vmem>>, %arg9: memref<1x128xf32, #tpu.memory_space<vmem>>, %arg10: memref<64x128xf32, #tpu.memory_space<vmem>>, %arg11: memref<64x128xf32, #tpu.memory_space<vmem>>) attributes {dimension_semantics = [#tpu.dimension_semantics<parallel>, #tpu.dimension_semantics<parallel>], iteration_bounds = array<i64: 1, 1>, scalar_prefetch = 0 : i64, scratch_operands = 0 : i64, tpu.core_type = #tpu.core_type<tc>, window_params = [{transform_indices = @transform_0, window_bounds = array<i64: 64, 32>}, {transform_indices = @transform_1, window_bounds = array<i64: 64, 32>}, {transform_indices = @transform_2, window_bounds = array<i64: 32, 128>}, {transform_indices = @transform_3, window_bounds = array<i64: 32, 128>}, {transform_indices = @transform_4, window_bounds = array<i64: 32, 128>}, {transform_indices = @transform_5, window_bounds = array<i64: 32, 128>}, {transform_indices = @transform_6, window_bounds = array<i64: 1, 128>}, {transform_indices = @transform_7, window_bounds = array<i64: 1, 128>}, {transform_indices = @transform_8, window_bounds = array<i64: 64, 128>}, {transform_indices = @transform_9, window_bounds = array<i64: 64, 128>}]} {
    %c0 = arith.constant 0 : index
    %c0_0 = arith.constant 0 : index
    %0 = vector.load %arg2[%c0, %c0_0] : memref<64x32xf32, #tpu.memory_space<vmem>>, vector<64x32xf32>
    %c0_1 = arith.constant 0 : index
    %c0_2 = arith.constant 0 : index
    %1 = vector.load %arg3[%c0_1, %c0_2] : memref<64x32xf32, #tpu.memory_space<vmem>>, vector<64x32xf32>
    %c0_3 = arith.constant 0 : index
    %c0_4 = arith.constant 0 : index
    %2 = vector.load %arg4[%c0_3, %c0_4] : memref<32x128xf32, #tpu.memory_space<vmem>>, vector<32x128xf32>
    %cst = arith.constant dense<0.000000e+00> : vector<64x128xf32>
    %3 = tpu.matmul %0, %2, %cst {dimension_numbers = #tpu.dot_dimension_numbers<[1], [0], [0], [1], [0, 0, 1, 1], [], []>} : vector<64x32xf32>, vector<32x128xf32>, vector<64x128xf32> -> vector<64x128xf32>
    %c0_5 = arith.constant 0 : index
    %c0_6 = arith.constant 0 : index
    %4 = vector.load %arg5[%c0_5, %c0_6] : memref<32x128xf32, #tpu.memory_space<vmem>>, vector<32x128xf32>
    %cst_7 = arith.constant dense<0.000000e+00> : vector<64x128xf32>
    %5 = tpu.matmul %1, %4, %cst_7 {dimension_numbers = #tpu.dot_dimension_numbers<[1], [0], [0], [1], [0, 0, 1, 1], [], []>} : vector<64x32xf32>, vector<32x128xf32>, vector<64x128xf32> -> vector<64x128xf32>
    %6 = arith.addf %3, %5 : vector<64x128xf32>
    %c0_8 = arith.constant 0 : index
    %c0_9 = arith.constant 0 : index
    %7 = vector.load %arg8[%c0_8, %c0_9] : memref<1x128xf32, #tpu.memory_space<vmem>>, vector<1x128xf32>
    %8 = vector.broadcast %7 : vector<1x128xf32> to vector<64x128xf32>
    %9 = arith.addf %6, %8 : vector<64x128xf32>
    %c0_10 = arith.constant 0 : index
    %c0_11 = arith.constant 0 : index
    %10 = vector.load %arg10[%c0_10, %c0_11] : memref<64x128xf32, #tpu.memory_space<vmem>>, vector<64x128xf32>
    tpu.vector_store %arg10[%c0_10, %c0_11], %9 {strides = array<i32>} : memref<64x128xf32, #tpu.memory_space<vmem>>, vector<64x128xf32>,
    %c0_12 = arith.constant 0 : index
    %c0_13 = arith.constant 0 : index
    %11 = vector.load %arg6[%c0_12, %c0_13] : memref<32x128xf32, #tpu.memory_space<vmem>>, vector<32x128xf32>
    %cst_14 = arith.constant dense<0.000000e+00> : vector<64x128xf32>
    %12 = tpu.matmul %0, %11, %cst_14 {dimension_numbers = #tpu.dot_dimension_numbers<[1], [0], [0], [1], [0, 0, 1, 1], [], []>} : vector<64x32xf32>, vector<32x128xf32>, vector<64x128xf32> -> vector<64x128xf32>
    %c0_15 = arith.constant 0 : index
    %c0_16 = arith.constant 0 : index
    %13 = vector.load %arg7[%c0_15, %c0_16] : memref<32x128xf32, #tpu.memory_space<vmem>>, vector<32x128xf32>
    %cst_17 = arith.constant dense<0.000000e+00> : vector<64x128xf32>
    %14 = tpu.matmul %1, %13, %cst_17 {dimension_numbers = #tpu.dot_dimension_numbers<[1], [0], [0], [1], [0, 0, 1, 1], [], []>} : vector<64x32xf32>, vector<32x128xf32>, vector<64x128xf32> -> vector<64x128xf32>
    %15 = arith.addf %12, %14 : vector<64x128xf32>
    %c0_18 = arith.constant 0 : index
    %c0_19 = arith.constant 0 : index
    %16 = vector.load %arg9[%c0_18, %c0_19] : memref<1x128xf32, #tpu.memory_space<vmem>>, vector<1x128xf32>
    %17 = vector.broadcast %16 : vector<1x128xf32> to vector<64x128xf32>
    %18 = arith.addf %15, %17 : vector<64x128xf32>
    %c0_20 = arith.constant 0 : index
    %c0_21 = arith.constant 0 : index
    %19 = vector.load %arg11[%c0_20, %c0_21] : memref<64x128xf32, #tpu.memory_space<vmem>>, vector<64x128xf32>
    tpu.vector_store %arg11[%c0_20, %c0_21], %18 {strides = array<i32>} : memref<64x128xf32, #tpu.memory_space<vmem>>, vector<64x128xf32>,
    return
  }
  func.func @transform_0(%arg0: i32, %arg1: i32) -> (i32, i32) {
    %c0_i32 = arith.constant 0 : i32
    %c0_i32_0 = arith.constant 0 : i32
    return %arg1, %c0_i32 : i32, i32
  }
  func.func @transform_1(%arg0: i32, %arg1: i32) -> (i32, i32) {
    %c0_i32 = arith.constant 0 : i32
    %c0_i32_0 = arith.constant 0 : i32
    return %arg1, %c0_i32 : i32, i32
  }
  func.func @transform_2(%arg0: i32, %arg1: i32) -> (i32, i32) {
    %c0_i32 = arith.constant 0 : i32
    %c0_i32_0 = arith.constant 0 : i32
    return %c0_i32, %arg0 : i32, i32
  }
  func.func @transform_3(%arg0: i32, %arg1: i32) -> (i32, i32) {
    %c0_i32 = arith.constant 0 : i32
    %c0_i32_0 = arith.constant 0 : i32
    return %c0_i32, %arg0 : i32, i32
  }
  func.func @transform_4(%arg0: i32, %arg1: i32) -> (i32, i32) {
    %c0_i32 = arith.constant 0 : i32
    %c0_i32_0 = arith.constant 0 : i32
    return %c0_i32, %arg0 : i32, i32
  }
  func.func @transform_5(%arg0: i32, %arg1: i32) -> (i32, i32) {
    %c0_i32 = arith.constant 0 : i32
    %c0_i32_0 = arith.constant 0 : i32
    return %c0_i32, %arg0 : i32, i32
  }
  func.func @transform_6(%arg0: i32, %arg1: i32) -> (i32, i32) {
    %c0_i32 = arith.constant 0 : i32
    %c0_i32_0 = arith.constant 0 : i32
    return %c0_i32, %arg0 : i32, i32
  }
  func.func @transform_7(%arg0: i32, %arg1: i32) -> (i32, i32) {
    %c0_i32 = arith.constant 0 : i32
    %c0_i32_0 = arith.constant 0 : i32
    return %c0_i32, %arg0 : i32, i32
  }
  func.func @transform_8(%arg0: i32, %arg1: i32) -> (i32, i32) {
    %c0_i32 = arith.constant 0 : i32
    return %arg1, %arg0 : i32, i32
  }
  func.func @transform_9(%arg0: i32, %arg1: i32) -> (i32, i32) {
    %c0_i32 = arith.constant 0 : i32
    return %arg1, %arg0 : i32, i32
  }
}

module attributes {stable_mosaic.version = 11 : i64} {
  func.func @_bilstm_mid_kernel(%arg0: i32, %arg1: memref<4x8x128xf32, #tpu.memory_space<vmem>>, %arg2: memref<4x8x128xf32, #tpu.memory_space<vmem>>, %arg3: memref<32x128xf32, #tpu.memory_space<vmem>>, %arg4: memref<32x128xf32, #tpu.memory_space<vmem>>, %arg5: memref<4x8x32xf32, #tpu.memory_space<vmem>>, %arg6: memref<4x8x32xf32, #tpu.memory_space<vmem>>, %arg7: memref<8x32xf32, #tpu.memory_space<vmem>>, %arg8: memref<8x32xf32, #tpu.memory_space<vmem>>, %arg9: memref<8x32xf32, #tpu.memory_space<vmem>>, %arg10: memref<8x32xf32, #tpu.memory_space<vmem>>) attributes {dimension_semantics = [#tpu.dimension_semantics<arbitrary>], iteration_bounds = array<i64: 2>, scalar_prefetch = 0 : i64, scratch_operands = 4 : i64, tpu.core_type = #tpu.core_type<tc>, window_params = [{transform_indices = @transform_0, window_bounds = array<i64: 4, 8, 128>}, {transform_indices = @transform_1, window_bounds = array<i64: 4, 8, 128>}, {pipeline_mode = #tpu.pipeline_mode<synchronous>, transform_indices = @transform_2, window_bounds = array<i64: 32, 128>}, {pipeline_mode = #tpu.pipeline_mode<synchronous>, transform_indices = @transform_3, window_bounds = array<i64: 32, 128>}, {transform_indices = @transform_4, window_bounds = array<i64: 4, 8, 32>}, {transform_indices = @transform_5, window_bounds = array<i64: 4, 8, 32>}]} {
    %c0_i32 = arith.constant 0 : i32
    %0 = arith.cmpi eq, %arg0, %c0_i32 : i32
    %1 = arith.extui %0 : i1 to i32
    %c0_i32_0 = arith.constant 0 : i32
    %2 = arith.cmpi ne, %1, %c0_i32_0 : i32
    scf.if %2 {
      %cst_88 = arith.constant 0.000000e+00 : f32
      %289 = vector.broadcast %cst_88 : f32 to vector<8x32xf32>
      %c0_89 = arith.constant 0 : index
      %c0_90 = arith.constant 0 : index
      %290 = vector.load %arg7[%c0_89, %c0_90] : memref<8x32xf32, #tpu.memory_space<vmem>>, vector<8x32xf32>
      tpu.vector_store %arg7[%c0_89, %c0_90], %289 {strides = array<i32>} : memref<8x32xf32, #tpu.memory_space<vmem>>, vector<8x32xf32>,
      %cst_91 = arith.constant 0.000000e+00 : f32
      %291 = vector.broadcast %cst_91 : f32 to vector<8x32xf32>
      %c0_92 = arith.constant 0 : index
      %c0_93 = arith.constant 0 : index
      %292 = vector.load %arg8[%c0_92, %c0_93] : memref<8x32xf32, #tpu.memory_space<vmem>>, vector<8x32xf32>
      tpu.vector_store %arg8[%c0_92, %c0_93], %291 {strides = array<i32>} : memref<8x32xf32, #tpu.memory_space<vmem>>, vector<8x32xf32>,
      %cst_94 = arith.constant 0.000000e+00 : f32
      %293 = vector.broadcast %cst_94 : f32 to vector<8x32xf32>
      %c0_95 = arith.constant 0 : index
      %c0_96 = arith.constant 0 : index
      %294 = vector.load %arg9[%c0_95, %c0_96] : memref<8x32xf32, #tpu.memory_space<vmem>>, vector<8x32xf32>
      tpu.vector_store %arg9[%c0_95, %c0_96], %293 {strides = array<i32>} : memref<8x32xf32, #tpu.memory_space<vmem>>, vector<8x32xf32>,
      %cst_97 = arith.constant 0.000000e+00 : f32
      %295 = vector.broadcast %cst_97 : f32 to vector<8x32xf32>
      %c0_98 = arith.constant 0 : index
      %c0_99 = arith.constant 0 : index
      %296 = vector.load %arg10[%c0_98, %c0_99] : memref<8x32xf32, #tpu.memory_space<vmem>>, vector<8x32xf32>
      tpu.vector_store %arg10[%c0_98, %c0_99], %295 {strides = array<i32>} : memref<8x32xf32, #tpu.memory_space<vmem>>, vector<8x32xf32>,
    } else {
    }
    %c0 = arith.constant 0 : index
    %c0_1 = arith.constant 0 : index
    %3 = vector.load %arg3[%c0, %c0_1] : memref<32x128xf32, #tpu.memory_space<vmem>>, vector<32x128xf32>
    %c0_2 = arith.constant 0 : index
    %c0_3 = arith.constant 0 : index
    %4 = vector.load %arg4[%c0_2, %c0_3] : memref<32x128xf32, #tpu.memory_space<vmem>>, vector<32x128xf32>
    %c0_4 = arith.constant 0 : index
    %c0_5 = arith.constant 0 : index
    %5 = vector.load %arg7[%c0_4, %c0_5] : memref<8x32xf32, #tpu.memory_space<vmem>>, vector<8x32xf32>
    %c0_6 = arith.constant 0 : index
    %c0_7 = arith.constant 0 : index
    %6 = vector.load %arg8[%c0_6, %c0_7] : memref<8x32xf32, #tpu.memory_space<vmem>>, vector<8x32xf32>
    %c0_8 = arith.constant 0 : index
    %c0_9 = arith.constant 0 : index
    %7 = vector.load %arg9[%c0_8, %c0_9] : memref<8x32xf32, #tpu.memory_space<vmem>>, vector<8x32xf32>
    %c0_10 = arith.constant 0 : index
    %c0_11 = arith.constant 0 : index
    %8 = vector.load %arg10[%c0_10, %c0_11] : memref<8x32xf32, #tpu.memory_space<vmem>>, vector<8x32xf32>
    %c0_i32_12 = arith.constant 0 : i32
    %c3_i32 = arith.constant 3 : i32
    %9 = arith.subi %c3_i32, %c0_i32_12 : i32
    %10 = arith.index_cast %c0_i32_12 : i32 to index
    %c0_13 = arith.constant 0 : index
    %c0_14 = arith.constant 0 : index
    %11 = vector.load %arg1[%10, %c0_13, %c0_14] : memref<4x8x128xf32, #tpu.memory_space<vmem>>, vector<1x8x128xf32>
    %12 = vector.shape_cast %11 : vector<1x8x128xf32> to vector<8x128xf32>
    %cst = arith.constant dense<0.000000e+00> : vector<8x128xf32>
    %13 = tpu.matmul %5, %3, %cst {dimension_numbers = #tpu.dot_dimension_numbers<[1], [0], [0], [1], [0, 0, 1, 1], [], []>} : vector<8x32xf32>, vector<32x128xf32>, vector<8x128xf32> -> vector<8x128xf32>
    %14 = arith.addf %12, %13 : vector<8x128xf32>
    %15 = vector.extract_strided_slice %14 {offsets = [0, 0], sizes = [8, 32], strides = [1, 1]} : vector<8x128xf32> to vector<8x32xf32>
    %16 = arith.negf %15 : vector<8x32xf32>
    %17 = math.exp %16 : vector<8x32xf32>
    %cst_15 = arith.constant 1.000000e+00 : f32
    %18 = vector.broadcast %cst_15 : f32 to vector<8x32xf32>
    %19 = arith.addf %18, %17 : vector<8x32xf32>
    %20 = arith.divf %18, %19 : vector<8x32xf32>
    %21 = vector.extract_strided_slice %14 {offsets = [0, 32], sizes = [8, 32], strides = [1, 1]} : vector<8x128xf32> to vector<8x32xf32>
    %22 = arith.negf %21 : vector<8x32xf32>
    %23 = math.exp %22 : vector<8x32xf32>
    %cst_16 = arith.constant 1.000000e+00 : f32
    %24 = vector.broadcast %cst_16 : f32 to vector<8x32xf32>
    %25 = arith.addf %24, %23 : vector<8x32xf32>
    %26 = arith.divf %24, %25 : vector<8x32xf32>
    %27 = vector.extract_strided_slice %14 {offsets = [0, 64], sizes = [8, 32], strides = [1, 1]} : vector<8x128xf32> to vector<8x32xf32>
    %28 = math.tanh %27 : vector<8x32xf32>
    %29 = vector.extract_strided_slice %14 {offsets = [0, 96], sizes = [8, 32], strides = [1, 1]} : vector<8x128xf32> to vector<8x32xf32>
    %30 = arith.negf %29 : vector<8x32xf32>
    %31 = math.exp %30 : vector<8x32xf32>
    %cst_17 = arith.constant 1.000000e+00 : f32
    %32 = vector.broadcast %cst_17 : f32 to vector<8x32xf32>
    %33 = arith.addf %32, %31 : vector<8x32xf32>
    %34 = arith.divf %32, %33 : vector<8x32xf32>
    %35 = arith.mulf %26, %6 : vector<8x32xf32>
    %36 = arith.mulf %20, %28 : vector<8x32xf32>
    %37 = arith.addf %35, %36 : vector<8x32xf32>
    %38 = math.tanh %37 : vector<8x32xf32>
    %39 = arith.mulf %34, %38 : vector<8x32xf32>
    %40 = arith.index_cast %9 : i32 to index
    %c0_18 = arith.constant 0 : index
    %c0_19 = arith.constant 0 : index
    %41 = vector.load %arg2[%40, %c0_18, %c0_19] : memref<4x8x128xf32, #tpu.memory_space<vmem>>, vector<1x8x128xf32>
    %42 = vector.shape_cast %41 : vector<1x8x128xf32> to vector<8x128xf32>
    %cst_20 = arith.constant dense<0.000000e+00> : vector<8x128xf32>
    %43 = tpu.matmul %7, %4, %cst_20 {dimension_numbers = #tpu.dot_dimension_numbers<[1], [0], [0], [1], [0, 0, 1, 1], [], []>} : vector<8x32xf32>, vector<32x128xf32>, vector<8x128xf32> -> vector<8x128xf32>
    %44 = arith.addf %42, %43 : vector<8x128xf32>
    %45 = vector.extract_strided_slice %44 {offsets = [0, 0], sizes = [8, 32], strides = [1, 1]} : vector<8x128xf32> to vector<8x32xf32>
    %46 = arith.negf %45 : vector<8x32xf32>
    %47 = math.exp %46 : vector<8x32xf32>
    %cst_21 = arith.constant 1.000000e+00 : f32
    %48 = vector.broadcast %cst_21 : f32 to vector<8x32xf32>
    %49 = arith.addf %48, %47 : vector<8x32xf32>
    %50 = arith.divf %48, %49 : vector<8x32xf32>
    %51 = vector.extract_strided_slice %44 {offsets = [0, 32], sizes = [8, 32], strides = [1, 1]} : vector<8x128xf32> to vector<8x32xf32>
    %52 = arith.negf %51 : vector<8x32xf32>
    %53 = math.exp %52 : vector<8x32xf32>
    %cst_22 = arith.constant 1.000000e+00 : f32
    %54 = vector.broadcast %cst_22 : f32 to vector<8x32xf32>
    %55 = arith.addf %54, %53 : vector<8x32xf32>
    %56 = arith.divf %54, %55 : vector<8x32xf32>
    %57 = vector.extract_strided_slice %44 {offsets = [0, 64], sizes = [8, 32], strides = [1, 1]} : vector<8x128xf32> to vector<8x32xf32>
    %58 = math.tanh %57 : vector<8x32xf32>
    %59 = vector.extract_strided_slice %44 {offsets = [0, 96], sizes = [8, 32], strides = [1, 1]} : vector<8x128xf32> to vector<8x32xf32>
    %60 = arith.negf %59 : vector<8x32xf32>
    %61 = math.exp %60 : vector<8x32xf32>
    %cst_23 = arith.constant 1.000000e+00 : f32
    %62 = vector.broadcast %cst_23 : f32 to vector<8x32xf32>
    %63 = arith.addf %62, %61 : vector<8x32xf32>
    %64 = arith.divf %62, %63 : vector<8x32xf32>
    %65 = arith.mulf %56, %8 : vector<8x32xf32>
    %66 = arith.mulf %50, %58 : vector<8x32xf32>
    %67 = arith.addf %65, %66 : vector<8x32xf32>
    %68 = math.tanh %67 : vector<8x32xf32>
    %69 = arith.mulf %64, %68 : vector<8x32xf32>
    %70 = arith.index_cast %c0_i32_12 : i32 to index
    %c0_24 = arith.constant 0 : index
    %c0_25 = arith.constant 0 : index
    %71 = vector.load %arg5[%70, %c0_24, %c0_25] : memref<4x8x32xf32, #tpu.memory_space<vmem>>, vector<1x8x32xf32>
    %72 = vector.shape_cast %71 : vector<1x8x32xf32> to vector<8x32xf32>
    %73 = vector.shape_cast %39 : vector<8x32xf32> to vector<1x8x32xf32>
    tpu.vector_store %arg5[%70, %c0_24, %c0_25], %73 {strides = array<i32>} : memref<4x8x32xf32, #tpu.memory_space<vmem>>, vector<1x8x32xf32>,
    %74 = arith.index_cast %9 : i32 to index
    %c0_26 = arith.constant 0 : index
    %c0_27 = arith.constant 0 : index
    %75 = vector.load %arg6[%74, %c0_26, %c0_27] : memref<4x8x32xf32, #tpu.memory_space<vmem>>, vector<1x8x32xf32>
    %76 = vector.shape_cast %75 : vector<1x8x32xf32> to vector<8x32xf32>
    %77 = vector.shape_cast %69 : vector<8x32xf32> to vector<1x8x32xf32>
    tpu.vector_store %arg6[%74, %c0_26, %c0_27], %77 {strides = array<i32>} : memref<4x8x32xf32, #tpu.memory_space<vmem>>, vector<1x8x32xf32>,
    %c1_i32 = arith.constant 1 : i32
    %c3_i32_28 = arith.constant 3 : i32
    %78 = arith.subi %c3_i32_28, %c1_i32 : i32
    %79 = arith.index_cast %c1_i32 : i32 to index
    %c0_29 = arith.constant 0 : index
    %c0_30 = arith.constant 0 : index
    %80 = vector.load %arg1[%79, %c0_29, %c0_30] : memref<4x8x128xf32, #tpu.memory_space<vmem>>, vector<1x8x128xf32>
    %81 = vector.shape_cast %80 : vector<1x8x128xf32> to vector<8x128xf32>
    %cst_31 = arith.constant dense<0.000000e+00> : vector<8x128xf32>
    %82 = tpu.matmul %39, %3, %cst_31 {dimension_numbers = #tpu.dot_dimension_numbers<[1], [0], [0], [1], [0, 0, 1, 1], [], []>} : vector<8x32xf32>, vector<32x128xf32>, vector<8x128xf32> -> vector<8x128xf32>
    %83 = arith.addf %81, %82 : vector<8x128xf32>
    %84 = vector.extract_strided_slice %83 {offsets = [0, 0], sizes = [8, 32], strides = [1, 1]} : vector<8x128xf32> to vector<8x32xf32>
    %85 = arith.negf %84 : vector<8x32xf32>
    %86 = math.exp %85 : vector<8x32xf32>
    %cst_32 = arith.constant 1.000000e+00 : f32
    %87 = vector.broadcast %cst_32 : f32 to vector<8x32xf32>
    %88 = arith.addf %87, %86 : vector<8x32xf32>
    %89 = arith.divf %87, %88 : vector<8x32xf32>
    %90 = vector.extract_strided_slice %83 {offsets = [0, 32], sizes = [8, 32], strides = [1, 1]} : vector<8x128xf32> to vector<8x32xf32>
    %91 = arith.negf %90 : vector<8x32xf32>
    %92 = math.exp %91 : vector<8x32xf32>
    %cst_33 = arith.constant 1.000000e+00 : f32
    %93 = vector.broadcast %cst_33 : f32 to vector<8x32xf32>
    %94 = arith.addf %93, %92 : vector<8x32xf32>
    %95 = arith.divf %93, %94 : vector<8x32xf32>
    %96 = vector.extract_strided_slice %83 {offsets = [0, 64], sizes = [8, 32], strides = [1, 1]} : vector<8x128xf32> to vector<8x32xf32>
    %97 = math.tanh %96 : vector<8x32xf32>
    %98 = vector.extract_strided_slice %83 {offsets = [0, 96], sizes = [8, 32], strides = [1, 1]} : vector<8x128xf32> to vector<8x32xf32>
    %99 = arith.negf %98 : vector<8x32xf32>
    %100 = math.exp %99 : vector<8x32xf32>
    %cst_34 = arith.constant 1.000000e+00 : f32
    %101 = vector.broadcast %cst_34 : f32 to vector<8x32xf32>
    %102 = arith.addf %101, %100 : vector<8x32xf32>
    %103 = arith.divf %101, %102 : vector<8x32xf32>
    %104 = arith.mulf %95, %37 : vector<8x32xf32>
    %105 = arith.mulf %89, %97 : vector<8x32xf32>
    %106 = arith.addf %104, %105 : vector<8x32xf32>
    %107 = math.tanh %106 : vector<8x32xf32>
    %108 = arith.mulf %103, %107 : vector<8x32xf32>
    %109 = arith.index_cast %78 : i32 to index
    %c0_35 = arith.constant 0 : index
    %c0_36 = arith.constant 0 : index
    %110 = vector.load %arg2[%109, %c0_35, %c0_36] : memref<4x8x128xf32, #tpu.memory_space<vmem>>, vector<1x8x128xf32>
    %111 = vector.shape_cast %110 : vector<1x8x128xf32> to vector<8x128xf32>
    %cst_37 = arith.constant dense<0.000000e+00> : vector<8x128xf32>
    %112 = tpu.matmul %69, %4, %cst_37 {dimension_numbers = #tpu.dot_dimension_numbers<[1], [0], [0], [1], [0, 0, 1, 1], [], []>} : vector<8x32xf32>, vector<32x128xf32>, vector<8x128xf32> -> vector<8x128xf32>
    %113 = arith.addf %111, %112 : vector<8x128xf32>
    %114 = vector.extract_strided_slice %113 {offsets = [0, 0], sizes = [8, 32], strides = [1, 1]} : vector<8x128xf32> to vector<8x32xf32>
    %115 = arith.negf %114 : vector<8x32xf32>
    %116 = math.exp %115 : vector<8x32xf32>
    %cst_38 = arith.constant 1.000000e+00 : f32
    %117 = vector.broadcast %cst_38 : f32 to vector<8x32xf32>
    %118 = arith.addf %117, %116 : vector<8x32xf32>
    %119 = arith.divf %117, %118 : vector<8x32xf32>
    %120 = vector.extract_strided_slice %113 {offsets = [0, 32], sizes = [8, 32], strides = [1, 1]} : vector<8x128xf32> to vector<8x32xf32>
    %121 = arith.negf %120 : vector<8x32xf32>
    %122 = math.exp %121 : vector<8x32xf32>
    %cst_39 = arith.constant 1.000000e+00 : f32
    %123 = vector.broadcast %cst_39 : f32 to vector<8x32xf32>
    %124 = arith.addf %123, %122 : vector<8x32xf32>
    %125 = arith.divf %123, %124 : vector<8x32xf32>
    %126 = vector.extract_strided_slice %113 {offsets = [0, 64], sizes = [8, 32], strides = [1, 1]} : vector<8x128xf32> to vector<8x32xf32>
    %127 = math.tanh %126 : vector<8x32xf32>
    %128 = vector.extract_strided_slice %113 {offsets = [0, 96], sizes = [8, 32], strides = [1, 1]} : vector<8x128xf32> to vector<8x32xf32>
    %129 = arith.negf %128 : vector<8x32xf32>
    %130 = math.exp %129 : vector<8x32xf32>
    %cst_40 = arith.constant 1.000000e+00 : f32
    %131 = vector.broadcast %cst_40 : f32 to vector<8x32xf32>
    %132 = arith.addf %131, %130 : vector<8x32xf32>
    %133 = arith.divf %131, %132 : vector<8x32xf32>
    %134 = arith.mulf %125, %67 : vector<8x32xf32>
    %135 = arith.mulf %119, %127 : vector<8x32xf32>
    %136 = arith.addf %134, %135 : vector<8x32xf32>
    %137 = math.tanh %136 : vector<8x32xf32>
    %138 = arith.mulf %133, %137 : vector<8x32xf32>
    %139 = arith.index_cast %c1_i32 : i32 to index
    %c0_41 = arith.constant 0 : index
    %c0_42 = arith.constant 0 : index
    %140 = vector.load %arg5[%139, %c0_41, %c0_42] : memref<4x8x32xf32, #tpu.memory_space<vmem>>, vector<1x8x32xf32>
    %141 = vector.shape_cast %140 : vector<1x8x32xf32> to vector<8x32xf32>
    %142 = vector.shape_cast %108 : vector<8x32xf32> to vector<1x8x32xf32>
    tpu.vector_store %arg5[%139, %c0_41, %c0_42], %142 {strides = array<i32>} : memref<4x8x32xf32, #tpu.memory_space<vmem>>, vector<1x8x32xf32>,
    %143 = arith.index_cast %78 : i32 to index
    %c0_43 = arith.constant 0 : index
    %c0_44 = arith.constant 0 : index
    %144 = vector.load %arg6[%143, %c0_43, %c0_44] : memref<4x8x32xf32, #tpu.memory_space<vmem>>, vector<1x8x32xf32>
    %145 = vector.shape_cast %144 : vector<1x8x32xf32> to vector<8x32xf32>
    %146 = vector.shape_cast %138 : vector<8x32xf32> to vector<1x8x32xf32>
    tpu.vector_store %arg6[%143, %c0_43, %c0_44], %146 {strides = array<i32>} : memref<4x8x32xf32, #tpu.memory_space<vmem>>, vector<1x8x32xf32>,
    %c2_i32 = arith.constant 2 : i32
    %c3_i32_45 = arith.constant 3 : i32
    %147 = arith.subi %c3_i32_45, %c2_i32 : i32
    %148 = arith.index_cast %c2_i32 : i32 to index
    %c0_46 = arith.constant 0 : index
    %c0_47 = arith.constant 0 : index
    %149 = vector.load %arg1[%148, %c0_46, %c0_47] : memref<4x8x128xf32, #tpu.memory_space<vmem>>, vector<1x8x128xf32>
    %150 = vector.shape_cast %149 : vector<1x8x128xf32> to vector<8x128xf32>
    %cst_48 = arith.constant dense<0.000000e+00> : vector<8x128xf32>
    %151 = tpu.matmul %108, %3, %cst_48 {dimension_numbers = #tpu.dot_dimension_numbers<[1], [0], [0], [1], [0, 0, 1, 1], [], []>} : vector<8x32xf32>, vector<32x128xf32>, vector<8x128xf32> -> vector<8x128xf32>
    %152 = arith.addf %150, %151 : vector<8x128xf32>
    %153 = vector.extract_strided_slice %152 {offsets = [0, 0], sizes = [8, 32], strides = [1, 1]} : vector<8x128xf32> to vector<8x32xf32>
    %154 = arith.negf %153 : vector<8x32xf32>
    %155 = math.exp %154 : vector<8x32xf32>
    %cst_49 = arith.constant 1.000000e+00 : f32
    %156 = vector.broadcast %cst_49 : f32 to vector<8x32xf32>
    %157 = arith.addf %156, %155 : vector<8x32xf32>
    %158 = arith.divf %156, %157 : vector<8x32xf32>
    %159 = vector.extract_strided_slice %152 {offsets = [0, 32], sizes = [8, 32], strides = [1, 1]} : vector<8x128xf32> to vector<8x32xf32>
    %160 = arith.negf %159 : vector<8x32xf32>
    %161 = math.exp %160 : vector<8x32xf32>
    %cst_50 = arith.constant 1.000000e+00 : f32
    %162 = vector.broadcast %cst_50 : f32 to vector<8x32xf32>
    %163 = arith.addf %162, %161 : vector<8x32xf32>
    %164 = arith.divf %162, %163 : vector<8x32xf32>
    %165 = vector.extract_strided_slice %152 {offsets = [0, 64], sizes = [8, 32], strides = [1, 1]} : vector<8x128xf32> to vector<8x32xf32>
    %166 = math.tanh %165 : vector<8x32xf32>
    %167 = vector.extract_strided_slice %152 {offsets = [0, 96], sizes = [8, 32], strides = [1, 1]} : vector<8x128xf32> to vector<8x32xf32>
    %168 = arith.negf %167 : vector<8x32xf32>
    %169 = math.exp %168 : vector<8x32xf32>
    %cst_51 = arith.constant 1.000000e+00 : f32
    %170 = vector.broadcast %cst_51 : f32 to vector<8x32xf32>
    %171 = arith.addf %170, %169 : vector<8x32xf32>
    %172 = arith.divf %170, %171 : vector<8x32xf32>
    %173 = arith.mulf %164, %106 : vector<8x32xf32>
    %174 = arith.mulf %158, %166 : vector<8x32xf32>
    %175 = arith.addf %173, %174 : vector<8x32xf32>
    %176 = math.tanh %175 : vector<8x32xf32>
    %177 = arith.mulf %172, %176 : vector<8x32xf32>
    %178 = arith.index_cast %147 : i32 to index
    %c0_52 = arith.constant 0 : index
    %c0_53 = arith.constant 0 : index
    %179 = vector.load %arg2[%178, %c0_52, %c0_53] : memref<4x8x128xf32, #tpu.memory_space<vmem>>, vector<1x8x128xf32>
    %180 = vector.shape_cast %179 : vector<1x8x128xf32> to vector<8x128xf32>
    %cst_54 = arith.constant dense<0.000000e+00> : vector<8x128xf32>
    %181 = tpu.matmul %138, %4, %cst_54 {dimension_numbers = #tpu.dot_dimension_numbers<[1], [0], [0], [1], [0, 0, 1, 1], [], []>} : vector<8x32xf32>, vector<32x128xf32>, vector<8x128xf32> -> vector<8x128xf32>
    %182 = arith.addf %180, %181 : vector<8x128xf32>
    %183 = vector.extract_strided_slice %182 {offsets = [0, 0], sizes = [8, 32], strides = [1, 1]} : vector<8x128xf32> to vector<8x32xf32>
    %184 = arith.negf %183 : vector<8x32xf32>
    %185 = math.exp %184 : vector<8x32xf32>
    %cst_55 = arith.constant 1.000000e+00 : f32
    %186 = vector.broadcast %cst_55 : f32 to vector<8x32xf32>
    %187 = arith.addf %186, %185 : vector<8x32xf32>
    %188 = arith.divf %186, %187 : vector<8x32xf32>
    %189 = vector.extract_strided_slice %182 {offsets = [0, 32], sizes = [8, 32], strides = [1, 1]} : vector<8x128xf32> to vector<8x32xf32>
    %190 = arith.negf %189 : vector<8x32xf32>
    %191 = math.exp %190 : vector<8x32xf32>
    %cst_56 = arith.constant 1.000000e+00 : f32
    %192 = vector.broadcast %cst_56 : f32 to vector<8x32xf32>
    %193 = arith.addf %192, %191 : vector<8x32xf32>
    %194 = arith.divf %192, %193 : vector<8x32xf32>
    %195 = vector.extract_strided_slice %182 {offsets = [0, 64], sizes = [8, 32], strides = [1, 1]} : vector<8x128xf32> to vector<8x32xf32>
    %196 = math.tanh %195 : vector<8x32xf32>
    %197 = vector.extract_strided_slice %182 {offsets = [0, 96], sizes = [8, 32], strides = [1, 1]} : vector<8x128xf32> to vector<8x32xf32>
    %198 = arith.negf %197 : vector<8x32xf32>
    %199 = math.exp %198 : vector<8x32xf32>
    %cst_57 = arith.constant 1.000000e+00 : f32
    %200 = vector.broadcast %cst_57 : f32 to vector<8x32xf32>
    %201 = arith.addf %200, %199 : vector<8x32xf32>
    %202 = arith.divf %200, %201 : vector<8x32xf32>
    %203 = arith.mulf %194, %136 : vector<8x32xf32>
    %204 = arith.mulf %188, %196 : vector<8x32xf32>
    %205 = arith.addf %203, %204 : vector<8x32xf32>
    %206 = math.tanh %205 : vector<8x32xf32>
    %207 = arith.mulf %202, %206 : vector<8x32xf32>
    %208 = arith.index_cast %c2_i32 : i32 to index
    %c0_58 = arith.constant 0 : index
    %c0_59 = arith.constant 0 : index
    %209 = vector.load %arg5[%208, %c0_58, %c0_59] : memref<4x8x32xf32, #tpu.memory_space<vmem>>, vector<1x8x32xf32>
    %210 = vector.shape_cast %209 : vector<1x8x32xf32> to vector<8x32xf32>
    %211 = vector.shape_cast %177 : vector<8x32xf32> to vector<1x8x32xf32>
    tpu.vector_store %arg5[%208, %c0_58, %c0_59], %211 {strides = array<i32>} : memref<4x8x32xf32, #tpu.memory_space<vmem>>, vector<1x8x32xf32>,
    %212 = arith.index_cast %147 : i32 to index
    %c0_60 = arith.constant 0 : index
    %c0_61 = arith.constant 0 : index
    %213 = vector.load %arg6[%212, %c0_60, %c0_61] : memref<4x8x32xf32, #tpu.memory_space<vmem>>, vector<1x8x32xf32>
    %214 = vector.shape_cast %213 : vector<1x8x32xf32> to vector<8x32xf32>
    %215 = vector.shape_cast %207 : vector<8x32xf32> to vector<1x8x32xf32>
    tpu.vector_store %arg6[%212, %c0_60, %c0_61], %215 {strides = array<i32>} : memref<4x8x32xf32, #tpu.memory_space<vmem>>, vector<1x8x32xf32>,
    %c3_i32_62 = arith.constant 3 : i32
    %c3_i32_63 = arith.constant 3 : i32
    %216 = arith.subi %c3_i32_63, %c3_i32_62 : i32
    %217 = arith.index_cast %c3_i32_62 : i32 to index
    %c0_64 = arith.constant 0 : index
    %c0_65 = arith.constant 0 : index
    %218 = vector.load %arg1[%217, %c0_64, %c0_65] : memref<4x8x128xf32, #tpu.memory_space<vmem>>, vector<1x8x128xf32>
    %219 = vector.shape_cast %218 : vector<1x8x128xf32> to vector<8x128xf32>
    %cst_66 = arith.constant dense<0.000000e+00> : vector<8x128xf32>
    %220 = tpu.matmul %177, %3, %cst_66 {dimension_numbers = #tpu.dot_dimension_numbers<[1], [0], [0], [1], [0, 0, 1, 1], [], []>} : vector<8x32xf32>, vector<32x128xf32>, vector<8x128xf32> -> vector<8x128xf32>
    %221 = arith.addf %219, %220 : vector<8x128xf32>
    %222 = vector.extract_strided_slice %221 {offsets = [0, 0], sizes = [8, 32], strides = [1, 1]} : vector<8x128xf32> to vector<8x32xf32>
    %223 = arith.negf %222 : vector<8x32xf32>
    %224 = math.exp %223 : vector<8x32xf32>
    %cst_67 = arith.constant 1.000000e+00 : f32
    %225 = vector.broadcast %cst_67 : f32 to vector<8x32xf32>
    %226 = arith.addf %225, %224 : vector<8x32xf32>
    %227 = arith.divf %225, %226 : vector<8x32xf32>
    %228 = vector.extract_strided_slice %221 {offsets = [0, 32], sizes = [8, 32], strides = [1, 1]} : vector<8x128xf32> to vector<8x32xf32>
    %229 = arith.negf %228 : vector<8x32xf32>
    %230 = math.exp %229 : vector<8x32xf32>
    %cst_68 = arith.constant 1.000000e+00 : f32
    %231 = vector.broadcast %cst_68 : f32 to vector<8x32xf32>
    %232 = arith.addf %231, %230 : vector<8x32xf32>
    %233 = arith.divf %231, %232 : vector<8x32xf32>
    %234 = vector.extract_strided_slice %221 {offsets = [0, 64], sizes = [8, 32], strides = [1, 1]} : vector<8x128xf32> to vector<8x32xf32>
    %235 = math.tanh %234 : vector<8x32xf32>
    %236 = vector.extract_strided_slice %221 {offsets = [0, 96], sizes = [8, 32], strides = [1, 1]} : vector<8x128xf32> to vector<8x32xf32>
    %237 = arith.negf %236 : vector<8x32xf32>
    %238 = math.exp %237 : vector<8x32xf32>
    %cst_69 = arith.constant 1.000000e+00 : f32
    %239 = vector.broadcast %cst_69 : f32 to vector<8x32xf32>
    %240 = arith.addf %239, %238 : vector<8x32xf32>
    %241 = arith.divf %239, %240 : vector<8x32xf32>
    %242 = arith.mulf %233, %175 : vector<8x32xf32>
    %243 = arith.mulf %227, %235 : vector<8x32xf32>
    %244 = arith.addf %242, %243 : vector<8x32xf32>
    %245 = math.tanh %244 : vector<8x32xf32>
    %246 = arith.mulf %241, %245 : vector<8x32xf32>
    %247 = arith.index_cast %216 : i32 to index
    %c0_70 = arith.constant 0 : index
    %c0_71 = arith.constant 0 : index
    %248 = vector.load %arg2[%247, %c0_70, %c0_71] : memref<4x8x128xf32, #tpu.memory_space<vmem>>, vector<1x8x128xf32>
    %249 = vector.shape_cast %248 : vector<1x8x128xf32> to vector<8x128xf32>
    %cst_72 = arith.constant dense<0.000000e+00> : vector<8x128xf32>
    %250 = tpu.matmul %207, %4, %cst_72 {dimension_numbers = #tpu.dot_dimension_numbers<[1], [0], [0], [1], [0, 0, 1, 1], [], []>} : vector<8x32xf32>, vector<32x128xf32>, vector<8x128xf32> -> vector<8x128xf32>
    %251 = arith.addf %249, %250 : vector<8x128xf32>
    %252 = vector.extract_strided_slice %251 {offsets = [0, 0], sizes = [8, 32], strides = [1, 1]} : vector<8x128xf32> to vector<8x32xf32>
    %253 = arith.negf %252 : vector<8x32xf32>
    %254 = math.exp %253 : vector<8x32xf32>
    %cst_73 = arith.constant 1.000000e+00 : f32
    %255 = vector.broadcast %cst_73 : f32 to vector<8x32xf32>
    %256 = arith.addf %255, %254 : vector<8x32xf32>
    %257 = arith.divf %255, %256 : vector<8x32xf32>
    %258 = vector.extract_strided_slice %251 {offsets = [0, 32], sizes = [8, 32], strides = [1, 1]} : vector<8x128xf32> to vector<8x32xf32>
    %259 = arith.negf %258 : vector<8x32xf32>
    %260 = math.exp %259 : vector<8x32xf32>
    %cst_74 = arith.constant 1.000000e+00 : f32
    %261 = vector.broadcast %cst_74 : f32 to vector<8x32xf32>
    %262 = arith.addf %261, %260 : vector<8x32xf32>
    %263 = arith.divf %261, %262 : vector<8x32xf32>
    %264 = vector.extract_strided_slice %251 {offsets = [0, 64], sizes = [8, 32], strides = [1, 1]} : vector<8x128xf32> to vector<8x32xf32>
    %265 = math.tanh %264 : vector<8x32xf32>
    %266 = vector.extract_strided_slice %251 {offsets = [0, 96], sizes = [8, 32], strides = [1, 1]} : vector<8x128xf32> to vector<8x32xf32>
    %267 = arith.negf %266 : vector<8x32xf32>
    %268 = math.exp %267 : vector<8x32xf32>
    %cst_75 = arith.constant 1.000000e+00 : f32
    %269 = vector.broadcast %cst_75 : f32 to vector<8x32xf32>
    %270 = arith.addf %269, %268 : vector<8x32xf32>
    %271 = arith.divf %269, %270 : vector<8x32xf32>
    %272 = arith.mulf %263, %205 : vector<8x32xf32>
    %273 = arith.mulf %257, %265 : vector<8x32xf32>
    %274 = arith.addf %272, %273 : vector<8x32xf32>
    %275 = math.tanh %274 : vector<8x32xf32>
    %276 = arith.mulf %271, %275 : vector<8x32xf32>
    %277 = arith.index_cast %c3_i32_62 : i32 to index
    %c0_76 = arith.constant 0 : index
    %c0_77 = arith.constant 0 : index
    %278 = vector.load %arg5[%277, %c0_76, %c0_77] : memref<4x8x32xf32, #tpu.memory_space<vmem>>, vector<1x8x32xf32>
    %279 = vector.shape_cast %278 : vector<1x8x32xf32> to vector<8x32xf32>
    %280 = vector.shape_cast %246 : vector<8x32xf32> to vector<1x8x32xf32>
    tpu.vector_store %arg5[%277, %c0_76, %c0_77], %280 {strides = array<i32>} : memref<4x8x32xf32, #tpu.memory_space<vmem>>, vector<1x8x32xf32>,
    %281 = arith.index_cast %216 : i32 to index
    %c0_78 = arith.constant 0 : index
    %c0_79 = arith.constant 0 : index
    %282 = vector.load %arg6[%281, %c0_78, %c0_79] : memref<4x8x32xf32, #tpu.memory_space<vmem>>, vector<1x8x32xf32>
    %283 = vector.shape_cast %282 : vector<1x8x32xf32> to vector<8x32xf32>
    %284 = vector.shape_cast %276 : vector<8x32xf32> to vector<1x8x32xf32>
    tpu.vector_store %arg6[%281, %c0_78, %c0_79], %284 {strides = array<i32>} : memref<4x8x32xf32, #tpu.memory_space<vmem>>, vector<1x8x32xf32>,
    %c4_i32 = arith.constant 4 : i32
    %c0_80 = arith.constant 0 : index
    %c0_81 = arith.constant 0 : index
    %285 = vector.load %arg7[%c0_80, %c0_81] : memref<8x32xf32, #tpu.memory_space<vmem>>, vector<8x32xf32>
    tpu.vector_store %arg7[%c0_80, %c0_81], %246 {strides = array<i32>} : memref<8x32xf32, #tpu.memory_space<vmem>>, vector<8x32xf32>,
    %c0_82 = arith.constant 0 : index
    %c0_83 = arith.constant 0 : index
    %286 = vector.load %arg8[%c0_82, %c0_83] : memref<8x32xf32, #tpu.memory_space<vmem>>, vector<8x32xf32>
    tpu.vector_store %arg8[%c0_82, %c0_83], %244 {strides = array<i32>} : memref<8x32xf32, #tpu.memory_space<vmem>>, vector<8x32xf32>,
    %c0_84 = arith.constant 0 : index
    %c0_85 = arith.constant 0 : index
    %287 = vector.load %arg9[%c0_84, %c0_85] : memref<8x32xf32, #tpu.memory_space<vmem>>, vector<8x32xf32>
    tpu.vector_store %arg9[%c0_84, %c0_85], %276 {strides = array<i32>} : memref<8x32xf32, #tpu.memory_space<vmem>>, vector<8x32xf32>,
    %c0_86 = arith.constant 0 : index
    %c0_87 = arith.constant 0 : index
    %288 = vector.load %arg10[%c0_86, %c0_87] : memref<8x32xf32, #tpu.memory_space<vmem>>, vector<8x32xf32>
    tpu.vector_store %arg10[%c0_86, %c0_87], %274 {strides = array<i32>} : memref<8x32xf32, #tpu.memory_space<vmem>>, vector<8x32xf32>,
    return
  }
  func.func @transform_0(%arg0: i32) -> (i32, i32, i32) {
    %c0_i32 = arith.constant 0 : i32
    %c0_i32_0 = arith.constant 0 : i32
    %c0_i32_1 = arith.constant 0 : i32
    return %arg0, %c0_i32, %c0_i32_0 : i32, i32, i32
  }
  func.func @transform_1(%arg0: i32) -> (i32, i32, i32) {
    %c1_i32 = arith.constant 1 : i32
    %0 = arith.subi %c1_i32, %arg0 : i32
    %c0_i32 = arith.constant 0 : i32
    %c0_i32_0 = arith.constant 0 : i32
    %c0_i32_1 = arith.constant 0 : i32
    return %0, %c0_i32, %c0_i32_0 : i32, i32, i32
  }
  func.func @transform_2(%arg0: i32) -> (i32, i32) {
    %c0_i32 = arith.constant 0 : i32
    %c0_i32_0 = arith.constant 0 : i32
    %c0_i32_1 = arith.constant 0 : i32
    return %c0_i32, %c0_i32_0 : i32, i32
  }
  func.func @transform_3(%arg0: i32) -> (i32, i32) {
    %c0_i32 = arith.constant 0 : i32
    %c0_i32_0 = arith.constant 0 : i32
    %c0_i32_1 = arith.constant 0 : i32
    return %c0_i32, %c0_i32_0 : i32, i32
  }
  func.func @transform_4(%arg0: i32) -> (i32, i32, i32) {
    %c0_i32 = arith.constant 0 : i32
    %c0_i32_0 = arith.constant 0 : i32
    %c0_i32_1 = arith.constant 0 : i32
    return %arg0, %c0_i32, %c0_i32_0 : i32, i32, i32
  }
  func.func @transform_5(%arg0: i32) -> (i32, i32, i32) {
    %c1_i32 = arith.constant 1 : i32
    %0 = arith.subi %c1_i32, %arg0 : i32
    %c0_i32 = arith.constant 0 : i32
    %c0_i32_0 = arith.constant 0 : i32
    %c0_i32_1 = arith.constant 0 : i32
    return %0, %c0_i32, %c0_i32_0 : i32, i32, i32
  }
}

</mosaic_0001>

<llo_original>
// kernel: tpu_custom_call.1
$region0: #{tpu_custom_call.1}
  #allocation0 [shape = 'u32[]', space=smem, size = 0x4, offset = 0x4, fixed_abs, tag = 'smem constant byte address 0x4 - core index']
  #allocation1 [shape = 'u32[144,128]{1,0:T(1,128)}', space=vmem, size = 0x12000, scoped, tag = 'internal scratch']
  %s0 = inlined_call_operand.hbm [shape: f32[8,128], index: 0, kind: input, shape index: {}]
  %s1 = inlined_call_operand.hbm [shape: f32[8,128], index: 1, kind: output, shape index: {}]
  %s2 = sld [smem:[#allocation0]]
  $region18: #{tpu_custom_call.1} parent=0
    _
  %s4 = ssub.s32 1, %s2
  %s5 = scalar_select 0, %s4, %s2
  $region1: #{tpu_custom_call.1} parent=0
    #allocation2 [shape = 'u8[4096]{0}', space=vmem, size = 0x1000, scoped, tag = 'input window, operand 0, single buffered']
    #allocation3 [shape = 's32[1]{0}', space=sflag, size = 0x4, scoped, tag = 'scoped memory for tpu_custom_call.1']
    #allocation4 [shape = 's32[1]{0}', space=sflag, size = 0x4, scoped, tag = 'scoped memory for tpu_custom_call.1']
    #allocation5 [shape = 'u8[4096]{0}', space=vmem, size = 0x1000, scoped, tag = 'output window, operand 0, single buffered']
    %6 = vsyncpa [#allocation3], 0
    %7 = vsyncpa [#allocation4], 0
    // Predicated region
    $region2: #{tpu_custom_call.1} parent=1 // pred_check
      _
    $region3: #{tpu_custom_call.1} parent=1 // pred_check_branch
      %9 = sbr.rel (0) target = $region5
    $region4: #{tpu_custom_call.1} parent=1 // pred_region
      %s11 = ssub.s32 128, 128
      %12 = vsyncadd [#allocation3], %s11
      %s14 = sshll.u32 [#allocation2], 4
      %s15 = int_to_ptr.vmem [resolvable:$true] %s14
      %17 = dma.hbm_to_vmem [thread:$0]  %s0, 128, %s15, [#allocation3]
    $region5: #{tpu_custom_call.1} parent=1 // pred_fallthru
      _
    // Predicated region
    $region6: #{tpu_custom_call.1} parent=1 // pred_check
      _
    $region7: #{tpu_custom_call.1} parent=1 // pred_check_branch
      %19 = sbr.rel (0) target = $region9
    $region8: #{tpu_custom_call.1} parent=1 // pred_region
      %20 = dma.done [#allocation3], 128
    $region9: #{tpu_custom_call.1} parent=1 // pred_fallthru
      _
    %v21 = vld [vmem:[#allocation2] sm:$0xff]
    %v22 = vadd.f32 %v21, 1.0
    %23 = vst [vmem:[#allocation5] sm:$0xff] %v22
    // Predicated region
    $region10: #{tpu_custom_call.1} parent=1 // pred_check
      _
    $region11: #{tpu_custom_call.1} parent=1 // pred_check_branch
      %25 = sbr.rel (0) target = $region13
    $region12: #{tpu_custom_call.1} parent=1 // pred_region
      %s27 = ssub.s32 128, 128
      %28 = vsyncadd [#allocation4], %s27
      %s30 = sshll.u32 [#allocation5], 4
      %s31 = int_to_ptr.vmem [resolvable:$true] %s30
      %33 = dma.vmem_to_hbm [thread:$0]  %s31, 128, %s1, [#allocation4]
    $region13: #{tpu_custom_call.1} parent=1 // pred_fallthru
      _
    // Predicated region
    $region14: #{tpu_custom_call.1} parent=1 // pred_check
      _
    $region15: #{tpu_custom_call.1} parent=1 // pred_check_branch
      %35 = sbr.rel (0) target = $region17
    $region16: #{tpu_custom_call.1} parent=1 // pred_region
      %36 = dma.done [#allocation4], 128
    $region17: #{tpu_custom_call.1} parent=1 // pred_fallthru
      _
    %37 = vsyncpa [#allocation3], 1
    %38 = vsyncpa [#allocation4], 1

// kernel: lstm_classifier_forward.4
$region0: #{lstm_classifier_forward.4}
  #allocation0 [shape = 'u32[]', space=smem, size = 0x4, offset = 0x4, fixed_abs, tag = 'smem constant byte address 0x4 - core index']
  #allocation1 [shape = 'u32[144,128]{1,0:T(1,128)}', space=vmem, size = 0x12000, scoped, tag = 'internal scratch']
  %s0 = inlined_call_operand.vmem [shape: f32[64,32], index: 0, kind: input, shape index: {}]
  %s1 = inlined_call_operand.vmem [shape: f32[32,128], index: 1, kind: input, shape index: {}]
  %s2 = inlined_call_operand.vmem [shape: f32[32,128], index: 2, kind: input, shape index: {}]
  %s3 = inlined_call_operand.vmem [shape: f32[1,128], index: 3, kind: input, shape index: {}]
  %s4 = inlined_call_operand.vmem [shape: f32[1,128], index: 4, kind: input, shape index: {}]
  %s5 = inlined_call_operand.vmem [shape: f32[64,128], index: 5, kind: output, shape index: {0}]
  %s6 = inlined_call_operand.vmem [shape: f32[64,128], index: 6, kind: output, shape index: {1}]
  %7 = xla_tuple %s5, %s6
  %s8 = sld [smem:[#allocation0]]
  $region38: #{lstm_classifier_forward.4} parent=0
    _
  %s10 = ssub.s32 1, %s8
  %s11 = scalar_select 0, %s10, %s8
  // Predicated region
  $region2: #{lstm_classifier_forward.4} parent=0 // pred_check
    _
  $region3: #{lstm_classifier_forward.4} parent=0 // pred_check_branch
    %13 = sbr.rel (0) target = $region5
  $region4: #{lstm_classifier_forward.4} parent=0 // pred_region
    _
  $region5: #{lstm_classifier_forward.4} parent=0 // pred_fallthru
    _
  // Predicated region
  $region6: #{lstm_classifier_forward.4} parent=0 // pred_check
    _
  $region7: #{lstm_classifier_forward.4} parent=0 // pred_check_branch
    %15 = sbr.rel (0) target = $region9
  $region8: #{lstm_classifier_forward.4} parent=0 // pred_region
    _
  $region9: #{lstm_classifier_forward.4} parent=0 // pred_fallthru
    _
  // Predicated region
  $region10: #{lstm_classifier_forward.4} parent=0 // pred_check
    _
  $region11: #{lstm_classifier_forward.4} parent=0 // pred_check_branch
    %17 = sbr.rel (0) target = $region13
  $region12: #{lstm_classifier_forward.4} parent=0 // pred_region
    _
  $region13: #{lstm_classifier_forward.4} parent=0 // pred_fallthru
    _
  // Predicated region
  $region14: #{lstm_classifier_forward.4} parent=0 // pred_check
    _
  $region15: #{lstm_classifier_forward.4} parent=0 // pred_check_branch
    %19 = sbr.rel (0) target = $region17
  $region16: #{lstm_classifier_forward.4} parent=0 // pred_region
    _
  $region17: #{lstm_classifier_forward.4} parent=0 // pred_fallthru
    _
  // Predicated region
  $region18: #{lstm_classifier_forward.4} parent=0 // pred_check
    _
  $region19: #{lstm_classifier_forward.4} parent=0 // pred_check_branch
    %21 = sbr.rel (0) target = $region21
  $region20: #{lstm_classifier_forward.4} parent=0 // pred_region
    _
  $region21: #{lstm_classifier_forward.4} parent=0 // pred_fallthru
    _
  %v22 = vld [vmem:[%s0] sm:$0xff]
  %v23 = vld [vmem:[%s0 + $0x8] sm:$0xff]
  %v24 = vld [vmem:[%s0 + $0x10] sm:$0xff]
  %v25 = vld [vmem:[%s0 + $0x18] sm:$0xff]
  %v26 = vld [vmem:[%s0 + $0x20] sm:$0xff]
  %v27 = vld [vmem:[%s0 + $0x28] sm:$0xff]
  %v28 = vld [vmem:[%s0 + $0x30] sm:$0xff]
  %v29 = vld [vmem:[%s0 + $0x38] sm:$0xff]
  %v30 = vld [vmem:[%s1] sm:$0xff]
  %v31 = vld [vmem:[%s1 + $0x8] sm:$0xff]
  %v32 = vld [vmem:[%s1 + $0x10] sm:$0xff]
  %v33 = vld [vmem:[%s1 + $0x18] sm:$0xff]
  %v34 = vld [vmem:[%s3] sm:$0x1]
  %v36 = vlaneseq
  %v37 = vshrl.u32 %v36, 7
  %v38 = vsub.s32 0, %v37
  %v39 = vrot.slane %v34, %v38
  %vm41 = vcmask 261120
  %v43 = vsel %vm41, %v22, 0
  %v46 = vsel %vm41, %v23, 0
  %v49 = vsel %vm41, %v24, 0
  %v52 = vsel %vm41, %v25, 0
  %v55 = vsel %vm41, %v26, 0
  %v58 = vsel %vm41, %v27, 0
  %v61 = vsel %vm41, %v28, 0
  %v64 = vsel %vm41, %v29, 0
  %66 = vmatprep.subr.mxu0 0.0
  %67 = vmatpush1.msra.mxu0 0.0
  %68 = vmatprep.subr.mxu0 0.0
  %69 = vmatpush1.msra.mxu0 0.0
  %70 = vmatprep.subr.mxu0 0.0
  %71 = vmatpush1.msra.mxu0 0.0
  %72 = vmatprep.subr.mxu0 0.0
  %73 = vmatpush1.msra.mxu0 0.0
  %74 = vmatprep.subr.mxu0 0.0
  %75 = vmatpush1.msra.mxu0 0.0
  %76 = vmatprep.subr.mxu0 0.0
  %77 = vmatpush1.msra.mxu0 0.0
  %78 = vmatprep.subr.mxu0 0.0
  %79 = vmatpush1.msra.mxu0 0.0
  %80 = vmatprep.subr.mxu0 0.0
  %81 = vmatpush1.msra.mxu0 0.0
  %82 = vmatprep.subr.mxu0 0.0
  %83 = vmatpush1.msra.mxu0 0.0
  %84 = vmatprep.subr.mxu0 0.0
  %85 = vmatpush1.msra.mxu0 0.0
  %86 = vmatprep.subr.mxu0 0.0
  %87 = vmatpush1.msra.mxu0 0.0
  %88 = vmatprep.subr.mxu0 0.0
  %89 = vmatpush1.msra.mxu0 0.0
  %90 = vmatprep.subr.mxu0 0.0
  %91 = vmatpush1.msra.mxu0 %v33
  %92 = vmatprep.subr.mxu0 0.0
  %93 = vmatpush1.msra.mxu0 %v32
  %94 = vmatprep.subr.mxu0 0.0
  %95 = vmatpush1.msra.mxu0 %v31
  %96 = vmatprep.subr.mxu0 0.0
  %97 = vmatpush1.msra.mxu0 %v30
  %98 = vmatprep.subr.mxu0 0.0
  %99 = vmatpush2.msra.mxu0 0.0
  %100 = vmatprep.subr.mxu0 0.0
  %101 = vmatpush2.msra.mxu0 0.0
  %102 = vmatprep.subr.mxu0 0.0
  %103 = vmatpush2.msra.mxu0 0.0
  %104 = vmatprep.subr.mxu0 0.0
  %105 = vmatpush2.msra.mxu0 0.0
  %106 = vmatprep.subr.mxu0 0.0
  %107 = vmatpush2.msra.mxu0 0.0
  %108 = vmatprep.subr.mxu0 0.0
  %109 = vmatpush2.msra.mxu0 0.0
  %110 = vmatprep.subr.mxu0 0.0
  %111 = vmatpush2.msra.mxu0 0.0
  %112 = vmatprep.subr.mxu0 0.0
  %113 = vmatpush2.msra.mxu0 0.0
  %114 = vmatprep.subr.mxu0 0.0
  %115 = vmatpush2.msra.mxu0 0.0
  %116 = vmatprep.subr.mxu0 0.0
  %117 = vmatpush2.msra.mxu0 0.0
  %118 = vmatprep.subr.mxu0 0.0
  %119 = vmatpush2.msra.mxu0 0.0
  %120 = vmatprep.subr.mxu0 0.0
  %121 = vmatpush2.msra.mxu0 0.0
  %122 = vmatprep.subr.mxu0 0.0
  %123 = vmatpush2.msra.mxu0 0.0
  %124 = vmatprep.subr.mxu0 0.0
  %125 = vmatpush2.msra.mxu0 0.0
  %126 = vmatprep.subr.mxu0 0.0
  %127 = vmatpush2.msra.mxu0 0.0
  %128 = vmatprep.subr.mxu0 0.0
  %129 = vmatpush2.msra.mxu0 0.0
  %130 = vmatprep.mubr.f32.mxu0 0.0
  %131 = vmatmul.mubr.f32.gmra.mxu0 %v43
  %v132 = vpop.f32.mrf.mxu0
  %v133 = vadd.f32 %v39, %v132
  %v134 = vpop.f32.mrf.mxu0
  %135 = vmatprep.mubr.f32.mxu0 0.0
  %136 = vmatmul.mubr.f32.gmra.mxu0 %v46
  %v137 = vpop.f32.mrf.mxu0
  %v138 = vadd.f32 %v39, %v137
  %v139 = vpop.f32.mrf.mxu0
  %140 = vmatprep.mubr.f32.mxu0 0.0
  %141 = vmatmul.mubr.f32.gmra.mxu0 %v49
  %v142 = vpop.f32.mrf.mxu0
  %v143 = vadd.f32 %v39, %v142
  %v144 = vpop.f32.mrf.mxu0
  %145 = vmatprep.mubr.f32.mxu0 0.0
  %146 = vmatmul.mubr.f32.gmra.mxu0 %v52
  %v147 = vpop.f32.mrf.mxu0
  %v148 = vadd.f32 %v39, %v147
  %v149 = vpop.f32.mrf.mxu0
  %150 = vmatprep.mubr.f32.mxu0 0.0
  %151 = vmatmul.mubr.f32.gmra.mxu0 %v55
  %v152 = vpop.f32.mrf.mxu0
  %v153 = vadd.f32 %v39, %v152
  %v154 = vpop.f32.mrf.mxu0
  %155 = vmatprep.mubr.f32.mxu0 0.0
  %156 = vmatmul.mubr.f32.gmra.mxu0 %v58
  %v157 = vpop.f32.mrf.mxu0
  %v158 = vadd.f32 %v39, %v157
  %v159 = vpop.f32.mrf.mxu0
  %160 = vmatprep.mubr.f32.mxu0 0.0
  %161 = vmatmul.mubr.f32.gmra.mxu0 %v61
  %v162 = vpop.f32.mrf.mxu0
  %v163 = vadd.f32 %v39, %v162
  %v164 = vpop.f32.mrf.mxu0
  %165 = vmatprep.mubr.f32.mxu0 0.0
  %166 = vmatmul.mubr.f32.gmra.mxu0 %v64
  %v167 = vpop.f32.mrf.mxu0
  %v168 = vadd.f32 %v39, %v167
  %v169 = vpop.f32.mrf.mxu0
  %170 = vdwg.mxu0
  %171 = vst [vmem:[%s5] sm:$0xff] %v133
  %172 = vst [vmem:[%s5 + $0x8] sm:$0xff] %v138
  %173 = vst [vmem:[%s5 + $0x10] sm:$0xff] %v143
  %174 = vst [vmem:[%s5 + $0x18] sm:$0xff] %v148
  %175 = vst [vmem:[%s5 + $0x20] sm:$0xff] %v153
  %176 = vst [vmem:[%s5 + $0x28] sm:$0xff] %v158
  %177 = vst [vmem:[%s5 + $0x30] sm:$0xff] %v163
  %178 = vst [vmem:[%s5 + $0x38] sm:$0xff] %v168
  %v179 = vld [vmem:[%s2] sm:$0xff]
  %v180 = vld [vmem:[%s2 + $0x8] sm:$0xff]
  %v181 = vld [vmem:[%s2 + $0x10] sm:$0xff]
  %v182 = vld [vmem:[%s2 + $0x18] sm:$0xff]
  %v183 = vld [vmem:[%s4] sm:$0x1]
  %v185 = vlaneseq
  %v186 = vshrl.u32 %v185, 7
  %v187 = vsub.s32 0, %v186
  %v188 = vrot.slane %v183, %v187
  %190 = vmatprep.subr.mxu0 0.0
  %191 = vmatpush1.msra.mxu0 0.0
  %192 = vmatprep.subr.mxu0 0.0
  %193 = vmatpush1.msra.mxu0 0.0
  %194 = vmatprep.subr.mxu0 0.0
  %195 = vmatpush1.msra.mxu0 0.0
  %196 = vmatprep.subr.mxu0 0.0
  %197 = vmatpush1.msra.mxu0 0.0
  %198 = vmatprep.subr.mxu0 0.0
  %199 = vmatpush1.msra.mxu0 0.0
  %200 = vmatprep.subr.mxu0 0.0
  %201 = vmatpush1.msra.mxu0 0.0
  %202 = vmatprep.subr.mxu0 0.0
  %203 = vmatpush1.msra.mxu0 0.0
  %204 = vmatprep.subr.mxu0 0.0
  %205 = vmatpush1.msra.mxu0 0.0
  %206 = vmatprep.subr.mxu0 0.0
  %207 = vmatpush1.msra.mxu0 0.0
  %208 = vmatprep.subr.mxu0 0.0
  %209 = vmatpush1.msra.mxu0 0.0
  %210 = vmatprep.subr.mxu0 0.0
  %211 = vmatpush1.msra.mxu0 0.0
  %212 = vmatprep.subr.mxu0 0.0
  %213 = vmatpush1.msra.mxu0 0.0
  %214 = vmatprep.subr.mxu0 0.0
  %215 = vmatpush1.msra.mxu0 %v182
  %216 = vmatprep.subr.mxu0 0.0
  %217 = vmatpush1.msra.mxu0 %v181
  %218 = vmatprep.subr.mxu0 0.0
  %219 = vmatpush1.msra.mxu0 %v180
  %220 = vmatprep.subr.mxu0 0.0
  %221 = vmatpush1.msra.mxu0 %v179
  %222 = vmatprep.subr.mxu0 0.0
  %223 = vmatpush2.msra.mxu0 0.0
  %224 = vmatprep.subr.mxu0 0.0
  %225 = vmatpush2.msra.mxu0 0.0
  %226 = vmatprep.subr.mxu0 0.0
  %227 = vmatpush2.msra.mxu0 0.0
  %228 = vmatprep.subr.mxu0 0.0
  %229 = vmatpush2.msra.mxu0 0.0
  %230 = vmatprep.subr.mxu0 0.0
  %231 = vmatpush2.msra.mxu0 0.0
  %232 = vmatprep.subr.mxu0 0.0
  %233 = vmatpush2.msra.mxu0 0.0
  %234 = vmatprep.subr.mxu0 0.0
  %235 = vmatpush2.msra.mxu0 0.0
  %236 = vmatprep.subr.mxu0 0.0
  %237 = vmatpush2.msra.mxu0 0.0
  %238 = vmatprep.subr.mxu0 0.0
  %239 = vmatpush2.msra.mxu0 0.0
  %240 = vmatprep.subr.mxu0 0.0
  %241 = vmatpush2.msra.mxu0 0.0
  %242 = vmatprep.subr.mxu0 0.0
  %243 = vmatpush2.msra.mxu0 0.0
  %244 = vmatprep.subr.mxu0 0.0
  %245 = vmatpush2.msra.mxu0 0.0
  %246 = vmatprep.subr.mxu0 0.0
  %247 = vmatpush2.msra.mxu0 0.0
  %248 = vmatprep.subr.mxu0 0.0
  %249 = vmatpush2.msra.mxu0 0.0
  %250 = vmatprep.subr.mxu0 0.0
  %251 = vmatpush2.msra.mxu0 0.0
  %252 = vmatprep.subr.mxu0 0.0
  %253 = vmatpush2.msra.mxu0 0.0
  %254 = vmatprep.mubr.f32.mxu0 0.0
  %255 = vmatmul.mubr.f32.gmra.mxu0 %v43
  %v256 = vpop.f32.mrf.mxu0
  %v257 = vadd.f32 %v188, %v256
  %v258 = vpop.f32.mrf.mxu0
  %259 = vmatprep.mubr.f32.mxu0 0.0
  %260 = vmatmul.mubr.f32.gmra.mxu0 %v46
  %v261 = vpop.f32.mrf.mxu0
  %v262 = vadd.f32 %v188, %v261
  %v263 = vpop.f32.mrf.mxu0
  %264 = vmatprep.mubr.f32.mxu0 0.0
  %265 = vmatmul.mubr.f32.gmra.mxu0 %v49
  %v266 = vpop.f32.mrf.mxu0
  %v267 = vadd.f32 %v188, %v266
  %v268 = vpop.f32.mrf.mxu0
  %269 = vmatprep.mubr.f32.mxu0 0.0
  %270 = vmatmul.mubr.f32.gmra.mxu0 %v52
  %v271 = vpop.f32.mrf.mxu0
  %v272 = vadd.f32 %v188, %v271
  %v273 = vpop.f32.mrf.mxu0
  %274 = vmatprep.mubr.f32.mxu0 0.0
  %275 = vmatmul.mubr.f32.gmra.mxu0 %v55
  %v276 = vpop.f32.mrf.mxu0
  %v277 = vadd.f32 %v188, %v276
  %v278 = vpop.f32.mrf.mxu0
  %279 = vmatprep.mubr.f32.mxu0 0.0
  %280 = vmatmul.mubr.f32.gmra.mxu0 %v58
  %v281 = vpop.f32.mrf.mxu0
  %v282 = vadd.f32 %v188, %v281
  %v283 = vpop.f32.mrf.mxu0
  %284 = vmatprep.mubr.f32.mxu0 0.0
  %285 = vmatmul.mubr.f32.gmra.mxu0 %v61
  %v286 = vpop.f32.mrf.mxu0
  %v287 = vadd.f32 %v188, %v286
  %v288 = vpop.f32.mrf.mxu0
  %289 = vmatprep.mubr.f32.mxu0 0.0
  %290 = vmatmul.mubr.f32.gmra.mxu0 %v64
  %v291 = vpop.f32.mrf.mxu0
  %v292 = vadd.f32 %v188, %v291
  %v293 = vpop.f32.mrf.mxu0
  %294 = vdwg.mxu0
  %295 = vst [vmem:[%s6] sm:$0xff] %v257
  %296 = vst [vmem:[%s6 + $0x8] sm:$0xff] %v262
  %297 = vst [vmem:[%s6 + $0x10] sm:$0xff] %v267
  %298 = vst [vmem:[%s6 + $0x18] sm:$0xff] %v272
  %299 = vst [vmem:[%s6 + $0x20] sm:$0xff] %v277
  %300 = vst [vmem:[%s6 + $0x28] sm:$0xff] %v282
  %301 = vst [vmem:[%s6 + $0x30] sm:$0xff] %v287
  %302 = vst [vmem:[%s6 + $0x38] sm:$0xff] %v292
  // Predicated region
  $region22: #{lstm_classifier_forward.4} parent=0 // pred_check
    _
  $region23: #{lstm_classifier_forward.4} parent=0 // pred_check_branch
    %304 = sbr.rel (0) target = $region25
  $region24: #{lstm_classifier_forward.4} parent=0 // pred_region
    _
  $region25: #{lstm_classifier_forward.4} parent=0 // pred_fallthru
    _
  // Predicated region
  $region26: #{lstm_classifier_forward.4} parent=0 // pred_check
    _
  $region27: #{lstm_classifier_forward.4} parent=0 // pred_check_branch
    %306 = sbr.rel (0) target = $region29
  $region28: #{lstm_classifier_forward.4} parent=0 // pred_region
    _
  $region29: #{lstm_classifier_forward.4} parent=0 // pred_fallthru
    _
  // Predicated region
  $region30: #{lstm_classifier_forward.4} parent=0 // pred_check
    _
  $region31: #{lstm_classifier_forward.4} parent=0 // pred_check_branch
    %308 = sbr.rel (0) target = $region33
  $region32: #{lstm_classifier_forward.4} parent=0 // pred_region
    _
  $region33: #{lstm_classifier_forward.4} parent=0 // pred_fallthru
    _
  // Predicated region
  $region34: #{lstm_classifier_forward.4} parent=0 // pred_check
    _
  $region35: #{lstm_classifier_forward.4} parent=0 // pred_check_branch
    %310 = sbr.rel (0) target = $region37
  $region36: #{lstm_classifier_forward.4} parent=0 // pred_region
    _
  $region37: #{lstm_classifier_forward.4} parent=0 // pred_fallthru
    _

// kernel: lstm_classifier_forward.7
$region0: #{lstm_classifier_forward.7}
  #allocation0 [shape = 'u32[]', space=smem, size = 0x4, offset = 0x4, fixed_abs, tag = 'smem constant byte address 0x4 - core index']
  #allocation1 [shape = 'u32[144,128]{1,0:T(1,128)}', space=vmem, size = 0x12000, scoped, tag = 'internal scratch']
  #allocation2 [shape = 'f32[8,32]{1,0:T(8,128)}', space=vmem, size = 0x1000, scoped, tag = 'scratch operand']
  #allocation3 [shape = 'f32[8,32]{1,0:T(8,128)}', space=vmem, size = 0x1000, scoped, tag = 'scratch operand']
  #allocation4 [shape = 'f32[8,32]{1,0:T(8,128)}', space=vmem, size = 0x1000, scoped, tag = 'scratch operand']
  #allocation5 [shape = 'f32[8,32]{1,0:T(8,128)}', space=vmem, size = 0x1000, scoped, tag = 'scratch operand']
  %s0 = inlined_call_operand.vmem [shape: f32[8,8,128], index: 0, kind: input, shape index: {}]
  %s1 = inlined_call_operand.vmem [shape: f32[8,8,128], index: 1, kind: input, shape index: {}]
  %s2 = inlined_call_operand.vmem [shape: f32[32,128], index: 2, kind: input, shape index: {}]
  %s3 = inlined_call_operand.vmem [shape: f32[32,128], index: 3, kind: input, shape index: {}]
  %s4 = inlined_call_operand.vmem [shape: f32[32,4], index: 4, kind: input, shape index: {}]
  %s5 = inlined_call_operand.vmem [shape: f32[32,4], index: 5, kind: input, shape index: {}]
  %s6 = inlined_call_operand.vmem [shape: f32[1,4], index: 6, kind: input, shape index: {}]
  %s7 = inlined_call_operand.vmem [shape: f32[8,4], index: 7, kind: output, shape index: {}]
  %s8 = sld [smem:[#allocation0]]
  $region69: #{lstm_classifier_forward.7} parent=0
    _
  %s10 = ssub.s32 1, %s8
  %s11 = scalar_select 0, %s10, %s8
  loop: start=0, step=1, limit=4
  $region2: #{lstm_classifier_forward.7} parent=0 // loop_pre_header
    _
  $region3: #{lstm_classifier_forward.7} parent=0 // loop_header
    %s13 = sphi 0, %s17
    %p14 = scmp.ge.s32.totalorder %s13, 4
    %s23 = sphi 0, %s25
    %s26 = sphi 0, %s23
    %s27 = sphi 0, %s26
    %s43 = sphi 0, %s27
    %s51 = sphi 0, %s53
    %s54 = sphi 0, %s51
    %s55 = sphi 0, %s54
    %s71 = sphi 0, %s55
    %s75 = sphi 0, %s75
    %s77 = sphi 0, %s75
    %s78 = sphi 0, %s77
    %s92 = sphi 0, %s78
    %s96 = sphi 0, %s96
    %s98 = sphi 0, %s96
    %s99 = sphi 0, %s98
    %s113 = sphi 0, %s99
    %s117 = sphi 0, %s117
    %s119 = sphi 0, %s117
    %s120 = sphi 0, %s119
    %s134 = sphi 0, %s120
    %s138 = sphi 0, %s138
    %s140 = sphi 0, %s138
    %s141 = sphi 0, %s140
    %s155 = sphi 0, %s141
    %s159 = sphi 0, %s159
    %s161 = sphi 0, %s159
    %s162 = sphi 0, %s161
    %s176 = sphi 0, %s162
    %s180 = sphi 0, %s180
    %s182 = sphi 0, %s180
    %s183 = sphi 0, %s182
    %s197 = sphi 0, %s183
  $region4: #{lstm_classifier_forward.7} parent=0 // loop_header_branch
    %16 = sbr.rel (%p14) target = $region8
  $region5: #{lstm_classifier_forward.7} parent=0 // loop_body
    %s18 = ssub.s32 %s13, 1
    %s19 = ssub.s32 %s13, 2
    %s20 = sadd.s32 %s13, 1
    %s21 = ssub.s32 %s13, %s20
    %p22 = scmp.eq.s32.totalorder %s21, 0
    %s24 = sadd.s32 %s23, 1
    %s25 = scalar_select %p22, %s23, %s24
    %p28 = pneg %p22
    %p29 = scmp.eq.s32.totalorder %s13, 1
    %p30 = por %p28, %p29
    %p31 = scmp.ne.s32.totalorder %s23, %s26
    %p32 = scmp.eq.s32.totalorder %s13, 0
    %p33 = por %p31, %p32
    %p34 = scmp.ne.s32.totalorder %s23, %s26
    %p35 = scmp.eq.s32.totalorder %s18, 1
    %p36 = por %p34, %p35
    %p37 = scmp.ne.s32.totalorder %s26, %s27
    %p38 = scmp.eq.s32.totalorder %s18, 0
    %p39 = por %p37, %p38
    %p40 = scmp.ne.s32.totalorder %s26, %s27
    %p41 = scmp.eq.s32.totalorder %s19, 1
    %p42 = por %p40, %p41
    %p44 = scmp.ne.s32.totalorder %s27, %s43
    %p45 = scmp.eq.s32.totalorder %s19, 0
    %p46 = por %p44, %p45
    %s47 = ssub.s32 1, %s13
    %s48 = ssub.s32 1, %s20
    %s49 = ssub.s32 %s47, %s48
    %p50 = scmp.eq.s32.totalorder %s49, 0
    %s52 = sadd.s32 %s51, 1
    %s53 = scalar_select %p50, %s51, %s52
    %p56 = pneg %p50
    %p57 = scmp.eq.s32.totalorder %s13, 1
    %p58 = por %p56, %p57
    %p59 = scmp.ne.s32.totalorder %s51, %s54
    %p60 = scmp.eq.s32.totalorder %s13, 0
    %p61 = por %p59, %p60
    %p62 = scmp.ne.s32.totalorder %s51, %s54
    %p63 = scmp.eq.s32.totalorder %s18, 1
    %p64 = por %p62, %p63
    %p65 = scmp.ne.s32.totalorder %s54, %s55
    %p66 = scmp.eq.s32.totalorder %s18, 0
    %p67 = por %p65, %p66
    %p68 = scmp.ne.s32.totalorder %s54, %s55
    %p69 = scmp.eq.s32.totalorder %s19, 1
    %p70 = por %p68, %p69
    %p72 = scmp.ne.s32.totalorder %s55, %s71
    %p73 = scmp.eq.s32.totalorder %s19, 0
    %p74 = por %p72, %p73
    %s76 = sadd.s32 %s75, 1
    %p79 = scmp.eq.s32.totalorder %s13, 1
    %p80 = scmp.ne.s32.totalorder %s75, %s77
    %p81 = scmp.eq.s32.totalorder %s13, 0
    %p82 = por %p80, %p81
    %p83 = scmp.ne.s32.totalorder %s75, %s77
    %p84 = scmp.eq.s32.totalorder %s18, 1
    %p85 = por %p83, %p84
    %p86 = scmp.ne.s32.totalorder %s77, %s78
    %p87 = scmp.eq.s32.totalorder %s18, 0
    %p88 = por %p86, %p87
    %p89 = scmp.ne.s32.totalorder %s77, %s78
    %p90 = scmp.eq.s32.totalorder %s19, 1
    %p91 = por %p89, %p90
    %p93 = scmp.ne.s32.totalorder %s78, %s92
    %p94 = scmp.eq.s32.totalorder %s19, 0
    %p95 = por %p93, %p94
    %s97 = sadd.s32 %s96, 1
    %p100 = scmp.eq.s32.totalorder %s13, 1
    %p101 = scmp.ne.s32.totalorder %s96, %s98
    %p102 = scmp.eq.s32.totalorder %s13, 0
    %p103 = por %p101, %p102
    %p104 = scmp.ne.s32.totalorder %s96, %s98
    %p105 = scmp.eq.s32.totalorder %s18, 1
    %p106 = por %p104, %p105
    %p107 = scmp.ne.s32.totalorder %s98, %s99
    %p108 = scmp.eq.s32.totalorder %s18, 0
    %p109 = por %p107, %p108
    %p110 = scmp.ne.s32.totalorder %s98, %s99
    %p111 = scmp.eq.s32.totalorder %s19, 1
    %p112 = por %p110, %p111
    %p114 = scmp.ne.s32.totalorder %s99, %s113
    %p115 = scmp.eq.s32.totalorder %s19, 0
    %p116 = por %p114, %p115
    %s118 = sadd.s32 %s117, 1
    %p121 = scmp.eq.s32.totalorder %s13, 1
    %p122 = scmp.ne.s32.totalorder %s117, %s119
    %p123 = scmp.eq.s32.totalorder %s13, 0
    %p124 = por %p122, %p123
    %p125 = scmp.ne.s32.totalorder %s117, %s119
    %p126 = scmp.eq.s32.totalorder %s18, 1
    %p127 = por %p125, %p126
    %p128 = scmp.ne.s32.totalorder %s119, %s120
    %p129 = scmp.eq.s32.totalorder %s18, 0
    %p130 = por %p128, %p129
    %p131 = scmp.ne.s32.totalorder %s119, %s120
    %p132 = scmp.eq.s32.totalorder %s19, 1
    %p133 = por %p131, %p132
    %p135 = scmp.ne.s32.totalorder %s120, %s134
    %p136 = scmp.eq.s32.totalorder %s19, 0
    %p137 = por %p135, %p136
    %s139 = sadd.s32 %s138, 1
    %p142 = scmp.eq.s32.totalorder %s13, 1
    %p143 = scmp.ne.s32.totalorder %s138, %s140
    %p144 = scmp.eq.s32.totalorder %s13, 0
    %p145 = por %p143, %p144
    %p146 = scmp.ne.s32.totalorder %s138, %s140
    %p147 = scmp.eq.s32.totalorder %s18, 1
    %p148 = por %p146, %p147
    %p149 = scmp.ne.s32.totalorder %s140, %s141
    %p150 = scmp.eq.s32.totalorder %s18, 0
    %p151 = por %p149, %p150
    %p152 = scmp.ne.s32.totalorder %s140, %s141
    %p153 = scmp.eq.s32.totalorder %s19, 1
    %p154 = por %p152, %p153
    %p156 = scmp.ne.s32.totalorder %s141, %s155
    %p157 = scmp.eq.s32.totalorder %s19, 0
    %p158 = por %p156, %p157
    %s160 = sadd.s32 %s159, 1
    %p163 = scmp.eq.s32.totalorder %s13, 1
    %p164 = scmp.ne.s32.totalorder %s159, %s161
    %p165 = scmp.eq.s32.totalorder %s13, 0
    %p166 = por %p164, %p165
    %p167 = scmp.ne.s32.totalorder %s159, %s161
    %p168 = scmp.eq.s32.totalorder %s18, 1
    %p169 = por %p167, %p168
    %p170 = scmp.ne.s32.totalorder %s161, %s162
    %p171 = scmp.eq.s32.totalorder %s18, 0
    %p172 = por %p170, %p171
    %p173 = scmp.ne.s32.totalorder %s161, %s162
    %p174 = scmp.eq.s32.totalorder %s19, 1
    %p175 = por %p173, %p174
    %p177 = scmp.ne.s32.totalorder %s162, %s176
    %p178 = scmp.eq.s32.totalorder %s19, 0
    %p179 = por %p177, %p178
    %s181 = sadd.s32 %s180, 1
    %p184 = scmp.eq.s32.totalorder %s13, 1
    %p185 = scmp.ne.s32.totalorder %s180, %s182
    %p186 = scmp.eq.s32.totalorder %s13, 0
    %p187 = por %p185, %p186
    %p188 = scmp.ne.s32.totalorder %s180, %s182
    %p189 = scmp.eq.s32.totalorder %s18, 1
    %p190 = por %p188, %p189
    %p191 = scmp.ne.s32.totalorder %s182, %s183
    %p192 = scmp.eq.s32.totalorder %s18, 0
    %p193 = por %p191, %p192
    %p194 = scmp.ne.s32.totalorder %s182, %s183
    %p195 = scmp.eq.s32.totalorder %s19, 1
    %p196 = por %p194, %p195
    %p198 = scmp.ne.s32.totalorder %s183, %s197
    %p199 = scmp.eq.s32.totalorder %s19, 0
    %p200 = por %p198, %p199
    %p201 = scmp.le.s32.totalorder 1, %s13
    %p202 = scmp.lt.s32.totalorder %s13, 3
    %p203 = pnand %p201, %p202
    %p204 = pneg %p203
    // Predicated region
    $region9: #{lstm_classifier_forward.7} parent=5 // pred_check
      _
    $region10: #{lstm_classifier_forward.7} parent=5 // pred_check_branch
      %206 = sbr.rel (%p203) target = $region12
    $region11: #{lstm_classifier_forward.7} parent=5 // pred_region
      %s207 = ssub.s32 %s13, 1
      // Predicated region
      $region13: #{lstm_classifier_forward.7} parent=11 // pred_check
        %p208 = pneg %p88
      $region14: #{lstm_classifier_forward.7} parent=11 // pred_check_branch
        %210 = sbr.rel (%p208) target = $region16
      $region15: #{lstm_classifier_forward.7} parent=11 // pred_region
        _
      $region16: #{lstm_classifier_forward.7} parent=11 // pred_fallthru
        _
      // Predicated region
      $region17: #{lstm_classifier_forward.7} parent=11 // pred_check
        %p211 = pneg %p109
      $region18: #{lstm_classifier_forward.7} parent=11 // pred_check_branch
        %213 = sbr.rel (%p211) target = $region20
      $region19: #{lstm_classifier_forward.7} parent=11 // pred_region
        _
      $region20: #{lstm_classifier_forward.7} parent=11 // pred_fallthru
        _
      // Predicated region
      $region21: #{lstm_classifier_forward.7} parent=11 // pred_check
        %p214 = pneg %p130
      $region22: #{lstm_classifier_forward.7} parent=11 // pred_check_branch
        %216 = sbr.rel (%p214) target = $region24
      $region23: #{lstm_classifier_forward.7} parent=11 // pred_region
        _
      $region24: #{lstm_classifier_forward.7} parent=11 // pred_fallthru
        _
      // Predicated region
      $region25: #{lstm_classifier_forward.7} parent=11 // pred_check
        %p217 = pneg %p151
      $region26: #{lstm_classifier_forward.7} parent=11 // pred_check_branch
        %219 = sbr.rel (%p217) target = $region28
      $region27: #{lstm_classifier_forward.7} parent=11 // pred_region
        _
      $region28: #{lstm_classifier_forward.7} parent=11 // pred_fallthru
        _
      // Predicated region
      $region29: #{lstm_classifier_forward.7} parent=11 // pred_check
        %p220 = pneg %p172
      $region30: #{lstm_classifier_forward.7} parent=11 // pred_check_branch
        %222 = sbr.rel (%p220) target = $region32
      $region31: #{lstm_classifier_forward.7} parent=11 // pred_region
        _
      $region32: #{lstm_classifier_forward.7} parent=11 // pred_fallthru
        _
    $region12: #{lstm_classifier_forward.7} parent=5 // pred_fallthru
      _
    %p223 = scmp.lt.s32.totalorder %s13, 2
    // Predicated region
    $region33: #{lstm_classifier_forward.7} parent=5 // pred_check
      %p224 = pneg %p223
    $region34: #{lstm_classifier_forward.7} parent=5 // pred_check_branch
      %226 = sbr.rel (%p224) target = $region36
    $region35: #{lstm_classifier_forward.7} parent=5 // pred_region
      // Predicated region
      $region37: #{lstm_classifier_forward.7} parent=35 // pred_check
        %p227 = pneg %p33
      $region38: #{lstm_classifier_forward.7} parent=35 // pred_check_branch
        %229 = sbr.rel (%p227) target = $region40
      $region39: #{lstm_classifier_forward.7} parent=35 // pred_region
        %s230 = smul.u32 4, %s13
        %p231 = scmp.lt.s32.totalorder %s230, 7
        %s232 = scalar_select %p231, %s230, 7
        %s233 = smul.addr %s232, 8
        %s234 = scalar_lea.vmem %s0, %s233
        %s235 = smul.u32 4, %s13
      $region40: #{lstm_classifier_forward.7} parent=35 // pred_fallthru
        _
      // Predicated region
      $region41: #{lstm_classifier_forward.7} parent=35 // pred_check
        %p236 = pneg %p61
      $region42: #{lstm_classifier_forward.7} parent=35 // pred_check_branch
        %238 = sbr.rel (%p236) target = $region44
      $region43: #{lstm_classifier_forward.7} parent=35 // pred_region
        %s239 = ssub.s32 1, %s13
        %s240 = smul.u32 4, %s239
        %p241 = scmp.lt.s32.totalorder %s240, 7
        %s242 = scalar_select %p241, %s240, 7
        %s243 = smul.addr %s242, 8
        %s244 = scalar_lea.vmem %s1, %s243
        %s245 = ssub.s32 1, %s13
        %s246 = smul.u32 4, %s245
      $region44: #{lstm_classifier_forward.7} parent=35 // pred_fallthru
        _
    $region36: #{lstm_classifier_forward.7} parent=5 // pred_fallthru
      _
    %p247 = scmp.le.s32.totalorder 1, %s13
    %p248 = scmp.lt.s32.totalorder %s13, 3
    %p249 = pnand %p247, %p248
    %p250 = pneg %p249
    // Predicated region
    $region45: #{lstm_classifier_forward.7} parent=5 // pred_check
      _
    $region46: #{lstm_classifier_forward.7} parent=5 // pred_check_branch
      %252 = sbr.rel (%p249) target = $region48
    $region47: #{lstm_classifier_forward.7} parent=5 // pred_region
      %s253 = ssub.s32 %s13, 1
      %s254 = smul.u32 4, %s18
      %p255 = scmp.lt.s32.totalorder %s254, 7
      %s256 = scalar_select %p255, %s254, 7
      %s257 = smul.addr %s256, 8
      %s258 = scalar_lea.vmem %s0, %s257
      %p259 = pneg %p39
      %p260 = pneg %p36
      %s261 = ssub.s32 1, %s18
      %s262 = smul.u32 4, %s261
      %p263 = scmp.lt.s32.totalorder %s262, 7
      %s264 = scalar_select %p263, %s262, 7
      %s265 = smul.addr %s264, 8
      %s266 = scalar_lea.vmem %s1, %s265
      %p267 = pneg %p67
      %p268 = pneg %p64
      %p269 = pneg %p88
      %p270 = pneg %p85
      %p271 = pneg %p109
      %p272 = pneg %p106
      %p273 = pneg %p130
      %p274 = pneg %p127
      %p275 = pneg %p151
      %p276 = pneg %p148
      %p277 = pneg %p172
      %p278 = pneg %p169
      %p279 = pneg %p193
      %p280 = pneg %p190
      %s281 = smul.u32 4, %s18
      %p282 = scmp.lt.s32.totalorder %s281, 7
      %s283 = scalar_select %p282, %s281, 7
      %s284 = smul.addr %s283, 8
      %s285 = scalar_lea.vmem %s0, %s284
      %s286 = smul.u32 4, %s18
      %s287 = ssub.s32 1, %s18
      %s288 = smul.u32 4, %s287
      %p289 = scmp.lt.s32.totalorder %s288, 7
      %s290 = scalar_select %p289, %s288, 7
      %s291 = smul.addr %s290, 8
      %s292 = scalar_lea.vmem %s1, %s291
      %s293 = ssub.s32 1, %s18
      %s294 = smul.u32 4, %s293
      %p295 = scmp.eq.s32.totalorder %s18, 0
      // Predicated region
      $region49: #{lstm_classifier_forward.7} parent=47 // pred_check
        %p296 = pneg %p295
      $region50: #{lstm_classifier_forward.7} parent=47 // pred_check_branch
        %298 = sbr.rel (%p296) target = $region52
      $region51: #{lstm_classifier_forward.7} parent=47 // pred_region
        %vm299 = vcmask 261120
        %300 = vst.msk [vmem:[#allocation2] sm:$0xff] %vm299, 0.0
        %301 = vst.msk [vmem:[#allocation3] sm:$0xff] %vm299, 0.0
        %302 = vst.msk [vmem:[#allocation4] sm:$0xff] %vm299, 0.0
        %303 = vst.msk [vmem:[#allocation5] sm:$0xff] %vm299, 0.0
      $region52: #{lstm_classifier_forward.7} parent=47 // pred_fallthru
        _
      %v304 = vld [vmem:[%s2] sm:$0xff]
      %v305 = vld [vmem:[%s2 + $0x8] sm:$0xff]
      %v306 = vld [vmem:[%s2 + $0x10] sm:$0xff]
      %v307 = vld [vmem:[%s2 + $0x18] sm:$0xff]
      %v308 = vld [vmem:[%s3] sm:$0xff]
      %v309 = vld [vmem:[%s3 + $0x8] sm:$0xff]
      %v310 = vld [vmem:[%s3 + $0x10] sm:$0xff]
      %v311 = vld [vmem:[%s3 + $0x18] sm:$0xff]
      %v312 = vld [vmem:[#allocation2] sm:$0xff]
      %v313 = vld [vmem:[#allocation3] sm:$0xff]
      %v314 = vld [vmem:[#allocation4] sm:$0xff]
      %v315 = vld [vmem:[#allocation5] sm:$0xff]
      %v316 = vld [vmem:[%s285] sm:$0xff]
      %vm317 = vcmask 261120
      %v319 = vsel %vm317, %v312, 0
      %321 = vmatprep.subr.mxu0 0.0
      %322 = vmatpush1.msra.mxu0 0.0
      %323 = vmatprep.subr.mxu0 0.0
      %324 = vmatpush1.msra.mxu0 0.0
      %325 = vmatprep.subr.mxu0 0.0
      %326 = vmatpush1.msra.mxu0 0.0
      %327 = vmatprep.subr.mxu0 0.0
      %328 = vmatpush1.msra.mxu0 0.0
      %329 = vmatprep.subr.mxu0 0.0
      %330 = vmatpush1.msra.mxu0 0.0
      %331 = vmatprep.subr.mxu0 0.0
      %332 = vmatpush1.msra.mxu0 0.0
      %333 = vmatprep.subr.mxu0 0.0
      %334 = vmatpush1.msra.mxu0 0.0
      %335 = vmatprep.subr.mxu0 0.0
      %336 = vmatpush1.msra.mxu0 0.0
      %337 = vmatprep.subr.mxu0 0.0
      %338 = vmatpush1.msra.mxu0 0.0
      %339 = vmatprep.subr.mxu0 0.0
      %340 = vmatpush1.msra.mxu0 0.0
      %341 = vmatprep.subr.mxu0 0.0
      %342 = vmatpush1.msra.mxu0 0.0
      %343 = vmatprep.subr.mxu0 0.0
      %344 = vmatpush1.msra.mxu0 0.0
      %345 = vmatprep.subr.mxu0 0.0
      %346 = vmatpush1.msra.mxu0 %v307
      %347 = vmatprep.subr.mxu0 0.0
      %348 = vmatpush1.msra.mxu0 %v306
      %349 = vmatprep.subr.mxu0 0.0
      %350 = vmatpush1.msra.mxu0 %v305
      %351 = vmatprep.subr.mxu0 0.0
      %352 = vmatpush1.msra.mxu0 %v304
      %353 = vmatprep.subr.mxu0 0.0
      %354 = vmatpush2.msra.mxu0 0.0
      %355 = vmatprep.subr.mxu0 0.0
      %356 = vmatpush2.msra.mxu0 0.0
      %357 = vmatprep.subr.mxu0 0.0
      %358 = vmatpush2.msra.mxu0 0.0
      %359 = vmatprep.subr.mxu0 0.0
      %360 = vmatpush2.msra.mxu0 0.0
      %361 = vmatprep.subr.mxu0 0.0
      %362 = vmatpush2.msra.mxu0 0.0
      %363 = vmatprep.subr.mxu0 0.0
      %364 = vmatpush2.msra.mxu0 0.0
      %365 = vmatprep.subr.mxu0 0.0
      %366 = vmatpush2.msra.mxu0 0.0
      %367 = vmatprep.subr.mxu0 0.0
      %368 = vmatpush2.msra.mxu0 0.0
      %369 = vmatprep.subr.mxu0 0.0
      %370 = vmatpush2.msra.mxu0 0.0
      %371 = vmatprep.subr.mxu0 0.0
      %372 = vmatpush2.msra.mxu0 0.0
      %373 = vmatprep.subr.mxu0 0.0
      %374 = vmatpush2.msra.mxu0 0.0
      %375 = vmatprep.subr.mxu0 0.0
      %376 = vmatpush2.msra.mxu0 0.0
      %377 = vmatprep.subr.mxu0 0.0
      %378 = vmatpush2.msra.mxu0 0.0
      %379 = vmatprep.subr.mxu0 0.0
      %380 = vmatpush2.msra.mxu0 0.0
      %381 = vmatprep.subr.mxu0 0.0
      %382 = vmatpush2.msra.mxu0 0.0
      %383 = vmatprep.subr.mxu0 0.0
      %384 = vmatpush2.msra.mxu0 0.0
      %385 = vmatprep.mubr.f32.mxu0 0.0
      %386 = vmatmul.mubr.f32.gmra.mxu0 %v319
      %v387 = vpop.f32.mrf.mxu0
      %v388 = vadd.f32 0.0, %v387
      %v389 = vpop.f32.mrf.mxu0
      %390 = vdwg.mxu0
      %v391 = vadd.f32 %v316, %v388
      %v392 = vxor.u32 %v391, 2147483648
      %v393 = vmul.f32 %v392, 1.442695
      %v394 = vpow.pop %v393
      %v395 = vadd.f32 %v394, 1.0
      %v396 = vrcp.pop %v395
      %v397 = vmul.f32 1.0, %v396
      %v398 = vtanh.pop %v391
      %400 = vrot.lane.b32.xlu0 %v313, 32
      %v401 = vpop.permute.xlu0 %400
      %v403 = vmul.f32 %v397, %v401
      %405 = vrot.lane.b32.xlu0 %v398, 64
      %v406 = vpop.permute.xlu0 %405
      %v408 = vmul.f32 %v397, %v406
      %410 = vrot.lane.b32.xlu0 %v408, 32
      %v411 = vpop.permute.xlu0 %410
      %v413 = vadd.f32 %v403, %v411
      %v414 = vtanh.pop %v413
      %416 = vrot.lane.b32.xlu0 %v414, 64
      %v417 = vpop.permute.xlu0 %416
      %v419 = vmul.f32 %v397, %v417
      %s420 = scalar_lea.vmem %s292, 24
      %v421 = vld [vmem:[%s420] sm:$0xff]
      %v423 = vsel %vm317, %v314, 0
      %425 = vmatprep.subr.mxu0 0.0
      %426 = vmatpush1.msra.mxu0 0.0
      %427 = vmatprep.subr.mxu0 0.0
      %428 = vmatpush1.msra.mxu0 0.0
      %429 = vmatprep.subr.mxu0 0.0
      %430 = vmatpush1.msra.mxu0 0.0
      %431 = vmatprep.subr.mxu0 0.0
      %432 = vmatpush1.msra.mxu0 0.0
      %433 = vmatprep.subr.mxu0 0.0
      %434 = vmatpush1.msra.mxu0 0.0
      %435 = vmatprep.subr.mxu0 0.0
      %436 = vmatpush1.msra.mxu0 0.0
      %437 = vmatprep.subr.mxu0 0.0
      %438 = vmatpush1.msra.mxu0 0.0
      %439 = vmatprep.subr.mxu0 0.0
      %440 = vmatpush1.msra.mxu0 0.0
      %441 = vmatprep.subr.mxu0 0.0
      %442 = vmatpush1.msra.mxu0 0.0
      %443 = vmatprep.subr.mxu0 0.0
      %444 = vmatpush1.msra.mxu0 0.0
      %445 = vmatprep.subr.mxu0 0.0
      %446 = vmatpush1.msra.mxu0 0.0
      %447 = vmatprep.subr.mxu0 0.0
      %448 = vmatpush1.msra.mxu0 0.0
      %449 = vmatprep.subr.mxu0 0.0
      %450 = vmatpush1.msra.mxu0 %v311
      %451 = vmatprep.subr.mxu0 0.0
      %452 = vmatpush1.msra.mxu0 %v310
      %453 = vmatprep.subr.mxu0 0.0
      %454 = vmatpush1.msra.mxu0 %v309
      %455 = vmatprep.subr.mxu0 0.0
      %456 = vmatpush1.msra.mxu0 %v308
      %457 = vmatprep.subr.mxu0 0.0
      %458 = vmatpush2.msra.mxu0 0.0
      %459 = vmatprep.subr.mxu0 0.0
      %460 = vmatpush2.msra.mxu0 0.0
      %461 = vmatprep.subr.mxu0 0.0
      %462 = vmatpush2.msra.mxu0 0.0
      %463 = vmatprep.subr.mxu0 0.0
      %464 = vmatpush2.msra.mxu0 0.0
      %465 = vmatprep.subr.mxu0 0.0
      %466 = vmatpush2.msra.mxu0 0.0
      %467 = vmatprep.subr.mxu0 0.0
      %468 = vmatpush2.msra.mxu0 0.0
      %469 = vmatprep.subr.mxu0 0.0
      %470 = vmatpush2.msra.mxu0 0.0
      %471 = vmatprep.subr.mxu0 0.0
      %472 = vmatpush2.msra.mxu0 0.0
      %473 = vmatprep.subr.mxu0 0.0
      %474 = vmatpush2.msra.mxu0 0.0
      %475 = vmatprep.subr.mxu0 0.0
      %476 = vmatpush2.msra.mxu0 0.0
      %477 = vmatprep.subr.mxu0 0.0
      %478 = vmatpush2.msra.mxu0 0.0
      %479 = vmatprep.subr.mxu0 0.0
      %480 = vmatpush2.msra.mxu0 0.0
      %481 = vmatprep.subr.mxu0 0.0
      %482 = vmatpush2.msra.mxu0 0.0
      %483 = vmatprep.subr.mxu0 0.0
      %484 = vmatpush2.msra.mxu0 0.0
      %485 = vmatprep.subr.mxu0 0.0
      %486 = vmatpush2.msra.mxu0 0.0
      %487 = vmatprep.subr.mxu0 0.0
      %488 = vmatpush2.msra.mxu0 0.0
      %489 = vmatprep.mubr.f32.mxu0 0.0
      %490 = vmatmul.mubr.f32.gmra.mxu0 %v423
      %v491 = vpop.f32.mrf.mxu0
      %v492 = vadd.f32 0.0, %v491
      %v493 = vpop.f32.mrf.mxu0
      %494 = vdwg.mxu0
      %v495 = vadd.f32 %v421, %v492
      %v496 = vxor.u32 %v495, 2147483648
      %v497 = vmul.f32 %v496, 1.442695
      %v498 = vpow.pop %v497
      %v499 = vadd.f32 %v498, 1.0
      %v500 = vrcp.pop %v499
      %v501 = vmul.f32 1.0, %v500
      %v502 = vtanh.pop %v495
      %504 = vrot.lane.b32.xlu0 %v315, 32
      %v505 = vpop.permute.xlu0 %504
      %v507 = vmul.f32 %v501, %v505
      %509 = vrot.lane.b32.xlu0 %v502, 64
      %v510 = vpop.permute.xlu0 %509
      %v512 = vmul.f32 %v501, %v510
      %514 = vrot.lane.b32.xlu0 %v512, 32
      %v515 = vpop.permute.xlu0 %514
      %v517 = vadd.f32 %v507, %v515
      %v518 = vtanh.pop %v517
      %520 = vrot.lane.b32.xlu0 %v518, 64
      %v521 = vpop.permute.xlu0 %520
      %v523 = vmul.f32 %v501, %v521
      %s524 = scalar_lea.vmem %s285, 8
      %v525 = vld [vmem:[%s524] sm:$0xff]
      %527 = vrot.lane.b32.xlu0 %v419, 32
      %v528 = vpop.permute.xlu0 %527
      %v529 = vsel %vm317, %v528, 0
      %531 = vmatprep.subr.mxu0 0.0
      %532 = vmatpush1.msra.mxu0 0.0
      %533 = vmatprep.subr.mxu0 0.0
      %534 = vmatpush1.msra.mxu0 0.0
      %535 = vmatprep.subr.mxu0 0.0
      %536 = vmatpush1.msra.mxu0 0.0
      %537 = vmatprep.subr.mxu0 0.0
      %538 = vmatpush1.msra.mxu0 0.0
      %539 = vmatprep.subr.mxu0 0.0
      %540 = vmatpush1.msra.mxu0 0.0
      %541 = vmatprep.subr.mxu0 0.0
      %542 = vmatpush1.msra.mxu0 0.0
      %543 = vmatprep.subr.mxu0 0.0
      %544 = vmatpush1.msra.mxu0 0.0
      %545 = vmatprep.subr.mxu0 0.0
      %546 = vmatpush1.msra.mxu0 0.0
      %547 = vmatprep.subr.mxu0 0.0
      %548 = vmatpush1.msra.mxu0 0.0
      %549 = vmatprep.subr.mxu0 0.0
      %550 = vmatpush1.msra.mxu0 0.0
      %551 = vmatprep.subr.mxu0 0.0
      %552 = vmatpush1.msra.mxu0 0.0
      %553 = vmatprep.subr.mxu0 0.0
      %554 = vmatpush1.msra.mxu0 0.0
      %555 = vmatprep.subr.mxu0 0.0
      %556 = vmatpush1.msra.mxu0 %v307
      %557 = vmatprep.subr.mxu0 0.0
      %558 = vmatpush1.msra.mxu0 %v306
      %559 = vmatprep.subr.mxu0 0.0
      %560 = vmatpush1.msra.mxu0 %v305
      %561 = vmatprep.subr.mxu0 0.0
      %562 = vmatpush1.msra.mxu0 %v304
      %563 = vmatprep.subr.mxu0 0.0
      %564 = vmatpush2.msra.mxu0 0.0
      %565 = vmatprep.subr.mxu0 0.0
      %566 = vmatpush2.msra.mxu0 0.0
      %567 = vmatprep.subr.mxu0 0.0
      %568 = vmatpush2.msra.mxu0 0.0
      %569 = vmatprep.subr.mxu0 0.0
      %570 = vmatpush2.msra.mxu0 0.0
      %571 = vmatprep.subr.mxu0 0.0
      %572 = vmatpush2.msra.mxu0 0.0
      %573 = vmatprep.subr.mxu0 0.0
      %574 = vmatpush2.msra.mxu0 0.0
      %575 = vmatprep.subr.mxu0 0.0
      %576 = vmatpush2.msra.mxu0 0.0
      %577 = vmatprep.subr.mxu0 0.0
      %578 = vmatpush2.msra.mxu0 0.0
      %579 = vmatprep.subr.mxu0 0.0
      %580 = vmatpush2.msra.mxu0 0.0
      %581 = vmatprep.subr.mxu0 0.0
      %582 = vmatpush2.msra.mxu0 0.0
      %583 = vmatprep.subr.mxu0 0.0
      %584 = vmatpush2.msra.mxu0 0.0
      %585 = vmatprep.subr.mxu0 0.0
      %586 = vmatpush2.msra.mxu0 0.0
      %587 = vmatprep.subr.mxu0 0.0
      %588 = vmatpush2.msra.mxu0 0.0
      %589 = vmatprep.subr.mxu0 0.0
      %590 = vmatpush2.msra.mxu0 0.0
      %591 = vmatprep.subr.mxu0 0.0
      %592 = vmatpush2.msra.mxu0 0.0
      %593 = vmatprep.subr.mxu0 0.0
      %594 = vmatpush2.msra.mxu0 0.0
      %595 = vmatprep.mubr.f32.mxu0 0.0
      %596 = vmatmul.mubr.f32.gmra.mxu0 %v529
      %v597 = vpop.f32.mrf.mxu0
      %v598 = vadd.f32 0.0, %v597
      %v599 = vpop.f32.mrf.mxu0
      %600 = vdwg.mxu0
      %v601 = vadd.f32 %v525, %v598
      %v602 = vxor.u32 %v601, 2147483648
      %v603 = vmul.f32 %v602, 1.442695
      %v604 = vpow.pop %v603
      %v605 = vadd.f32 %v604, 1.0
      %v606 = vrcp.pop %v605
      %v607 = vmul.f32 1.0, %v606
      %v608 = vtanh.pop %v601
      %v609 = vmul.f32 %v607, %v413
      %611 = vrot.lane.b32.xlu0 %v608, 64
      %v612 = vpop.permute.xlu0 %611
      %v614 = vmul.f32 %v607, %v612
      %616 = vrot.lane.b32.xlu0 %v614, 32
      %v617 = vpop.permute.xlu0 %616
      %v619 = vadd.f32 %v609, %v617
      %v620 = vtanh.pop %v619
      %622 = vrot.lane.b32.xlu0 %v620, 64
      %v623 = vpop.permute.xlu0 %622
      %v625 = vmul.f32 %v607, %v623
      %s626 = scalar_lea.vmem %s292, 16
      %v627 = vld [vmem:[%s626] sm:$0xff]
      %629 = vrot.lane.b32.xlu0 %v523, 32
      %v630 = vpop.permute.xlu0 %629
      %v631 = vsel %vm317, %v630, 0
      %633 = vmatprep.subr.mxu0 0.0
      %634 = vmatpush1.msra.mxu0 0.0
      %635 = vmatprep.subr.mxu0 0.0
      %636 = vmatpush1.msra.mxu0 0.0
      %637 = vmatprep.subr.mxu0 0.0
      %638 = vmatpush1.msra.mxu0 0.0
      %639 = vmatprep.subr.mxu0 0.0
      %640 = vmatpush1.msra.mxu0 0.0
      %641 = vmatprep.subr.mxu0 0.0
      %642 = vmatpush1.msra.mxu0 0.0
      %643 = vmatprep.subr.mxu0 0.0
      %644 = vmatpush1.msra.mxu0 0.0
      %645 = vmatprep.subr.mxu0 0.0
      %646 = vmatpush1.msra.mxu0 0.0
      %647 = vmatprep.subr.mxu0 0.0
      %648 = vmatpush1.msra.mxu0 0.0
      %649 = vmatprep.subr.mxu0 0.0
      %650 = vmatpush1.msra.mxu0 0.0
      %651 = vmatprep.subr.mxu0 0.0
      %652 = vmatpush1.msra.mxu0 0.0
      %653 = vmatprep.subr.mxu0 0.0
      %654 = vmatpush1.msra.mxu0 0.0
      %655 = vmatprep.subr.mxu0 0.0
      %656 = vmatpush1.msra.mxu0 0.0
      %657 = vmatprep.subr.mxu0 0.0
      %658 = vmatpush1.msra.mxu0 %v311
      %659 = vmatprep.subr.mxu0 0.0
      %660 = vmatpush1.msra.mxu0 %v310
      %661 = vmatprep.subr.mxu0 0.0
      %662 = vmatpush1.msra.mxu0 %v309
      %663 = vmatprep.subr.mxu0 0.0
      %664 = vmatpush1.msra.mxu0 %v308
      %665 = vmatprep.subr.mxu0 0.0
      %666 = vmatpush2.msra.mxu0 0.0
      %667 = vmatprep.subr.mxu0 0.0
      %668 = vmatpush2.msra.mxu0 0.0
      %669 = vmatprep.subr.mxu0 0.0
      %670 = vmatpush2.msra.mxu0 0.0
      %671 = vmatprep.subr.mxu0 0.0
      %672 = vmatpush2.msra.mxu0 0.0
      %673 = vmatprep.subr.mxu0 0.0
      %674 = vmatpush2.msra.mxu0 0.0
      %675 = vmatprep.subr.mxu0 0.0
      %676 = vmatpush2.msra.mxu0 0.0
      %677 = vmatprep.subr.mxu0 0.0
      %678 = vmatpush2.msra.mxu0 0.0
      %679 = vmatprep.subr.mxu0 0.0
      %680 = vmatpush2.msra.mxu0 0.0
      %681 = vmatprep.subr.mxu0 0.0
      %682 = vmatpush2.msra.mxu0 0.0
      %683 = vmatprep.subr.mxu0 0.0
      %684 = vmatpush2.msra.mxu0 0.0
      %685 = vmatprep.subr.mxu0 0.0
      %686 = vmatpush2.msra.mxu0 0.0
      %687 = vmatprep.subr.mxu0 0.0
      %688 = vmatpush2.msra.mxu0 0.0
      %689 = vmatprep.subr.mxu0 0.0
      %690 = vmatpush2.msra.mxu0 0.0
      %691 = vmatprep.subr.mxu0 0.0
      %692 = vmatpush2.msra.mxu0 0.0
      %693 = vmatprep.subr.mxu0 0.0
      %694 = vmatpush2.msra.mxu0 0.0
      %695 = vmatprep.subr.mxu0 0.0
      %696 = vmatpush2.msra.mxu0 0.0
      %697 = vmatprep.mubr.f32.mxu0 0.0
      %698 = vmatmul.mubr.f32.gmra.mxu0 %v631
      %v699 = vpop.f32.mrf.mxu0
      %v700 = vadd.f32 0.0, %v699
      %v701 = vpop.f32.mrf.mxu0
      %702 = vdwg.mxu0
      %v703 = vadd.f32 %v627, %v700
      %v704 = vxor.u32 %v703, 2147483648
      %v705 = vmul.f32 %v704, 1.442695
      %v706 = vpow.pop %v705
      %v707 = vadd.f32 %v706, 1.0
      %v708 = vrcp.pop %v707
      %v709 = vmul.f32 1.0, %v708
      %v710 = vtanh.pop %v703
      %v711 = vmul.f32 %v709, %v517
      %713 = vrot.lane.b32.xlu0 %v710, 64
      %v714 = vpop.permute.xlu0 %713
      %v716 = vmul.f32 %v709, %v714
      %718 = vrot.lane.b32.xlu0 %v716, 32
      %v719 = vpop.permute.xlu0 %718
      %v721 = vadd.f32 %v711, %v719
      %v722 = vtanh.pop %v721
      %724 = vrot.lane.b32.xlu0 %v722, 64
      %v725 = vpop.permute.xlu0 %724
      %v727 = vmul.f32 %v709, %v725
      %s728 = scalar_lea.vmem %s285, 16
      %v729 = vld [vmem:[%s728] sm:$0xff]
      %731 = vrot.lane.b32.xlu0 %v625, 32
      %v732 = vpop.permute.xlu0 %731
      %v733 = vsel %vm317, %v732, 0
      %735 = vmatprep.subr.mxu0 0.0
      %736 = vmatpush1.msra.mxu0 0.0
      %737 = vmatprep.subr.mxu0 0.0
      %738 = vmatpush1.msra.mxu0 0.0
      %739 = vmatprep.subr.mxu0 0.0
      %740 = vmatpush1.msra.mxu0 0.0
      %741 = vmatprep.subr.mxu0 0.0
      %742 = vmatpush1.msra.mxu0 0.0
      %743 = vmatprep.subr.mxu0 0.0
      %744 = vmatpush1.msra.mxu0 0.0
      %745 = vmatprep.subr.mxu0 0.0
      %746 = vmatpush1.msra.mxu0 0.0
      %747 = vmatprep.subr.mxu0 0.0
      %748 = vmatpush1.msra.mxu0 0.0
      %749 = vmatprep.subr.mxu0 0.0
      %750 = vmatpush1.msra.mxu0 0.0
      %751 = vmatprep.subr.mxu0 0.0
      %752 = vmatpush1.msra.mxu0 0.0
      %753 = vmatprep.subr.mxu0 0.0
      %754 = vmatpush1.msra.mxu0 0.0
      %755 = vmatprep.subr.mxu0 0.0
      %756 = vmatpush1.msra.mxu0 0.0
      %757 = vmatprep.subr.mxu0 0.0
      %758 = vmatpush1.msra.mxu0 0.0
      %759 = vmatprep.subr.mxu0 0.0
      %760 = vmatpush1.msra.mxu0 %v307
      %761 = vmatprep.subr.mxu0 0.0
      %762 = vmatpush1.msra.mxu0 %v306
      %763 = vmatprep.subr.mxu0 0.0
      %764 = vmatpush1.msra.mxu0 %v305
      %765 = vmatprep.subr.mxu0 0.0
      %766 = vmatpush1.msra.mxu0 %v304
      %767 = vmatprep.subr.mxu0 0.0
      %768 = vmatpush2.msra.mxu0 0.0
      %769 = vmatprep.subr.mxu0 0.0
      %770 = vmatpush2.msra.mxu0 0.0
      %771 = vmatprep.subr.mxu0 0.0
      %772 = vmatpush2.msra.mxu0 0.0
      %773 = vmatprep.subr.mxu0 0.0
      %774 = vmatpush2.msra.mxu0 0.0
      %775 = vmatprep.subr.mxu0 0.0
      %776 = vmatpush2.msra.mxu0 0.0
      %777 = vmatprep.subr.mxu0 0.0
      %778 = vmatpush2.msra.mxu0 0.0
      %779 = vmatprep.subr.mxu0 0.0
      %780 = vmatpush2.msra.mxu0 0.0
      %781 = vmatprep.subr.mxu0 0.0
      %782 = vmatpush2.msra.mxu0 0.0
      %783 = vmatprep.subr.mxu0 0.0
      %784 = vmatpush2.msra.mxu0 0.0
      %785 = vmatprep.subr.mxu0 0.0
      %786 = vmatpush2.msra.mxu0 0.0
      %787 = vmatprep.subr.mxu0 0.0
      %788 = vmatpush2.msra.mxu0 0.0
      %789 = vmatprep.subr.mxu0 0.0
      %790 = vmatpush2.msra.mxu0 0.0
      %791 = vmatprep.subr.mxu0 0.0
      %792 = vmatpush2.msra.mxu0 0.0
      %793 = vmatprep.subr.mxu0 0.0
      %794 = vmatpush2.msra.mxu0 0.0
      %795 = vmatprep.subr.mxu0 0.0
      %796 = vmatpush2.msra.mxu0 0.0
      %797 = vmatprep.subr.mxu0 0.0
      %798 = vmatpush2.msra.mxu0 0.0
      %799 = vmatprep.mubr.f32.mxu0 0.0
      %800 = vmatmul.mubr.f32.gmra.mxu0 %v733
      %v801 = vpop.f32.mrf.mxu0
      %v802 = vadd.f32 0.0, %v801
      %v803 = vpop.f32.mrf.mxu0
      %804 = vdwg.mxu0
      %v805 = vadd.f32 %v729, %v802
      %v806 = vxor.u32 %v805, 2147483648
      %v807 = vmul.f32 %v806, 1.442695
      %v808 = vpow.pop %v807
      %v809 = vadd.f32 %v808, 1.0
      %v810 = vrcp.pop %v809
      %v811 = vmul.f32 1.0, %v810
      %v812 = vtanh.pop %v805
      %v813 = vmul.f32 %v811, %v619
      %815 = vrot.lane.b32.xlu0 %v812, 64
      %v816 = vpop.permute.xlu0 %815
      %v818 = vmul.f32 %v811, %v816
      %820 = vrot.lane.b32.xlu0 %v818, 32
      %v821 = vpop.permute.xlu0 %820
      %v823 = vadd.f32 %v813, %v821
      %v824 = vtanh.pop %v823
      %826 = vrot.lane.b32.xlu0 %v824, 64
      %v827 = vpop.permute.xlu0 %826
      %v829 = vmul.f32 %v811, %v827
      %s830 = scalar_lea.vmem %s292, 8
      %v831 = vld [vmem:[%s830] sm:$0xff]
      %833 = vrot.lane.b32.xlu0 %v727, 32
      %v834 = vpop.permute.xlu0 %833
      %v835 = vsel %vm317, %v834, 0
      %837 = vmatprep.subr.mxu0 0.0
      %838 = vmatpush1.msra.mxu0 0.0
      %839 = vmatprep.subr.mxu0 0.0
      %840 = vmatpush1.msra.mxu0 0.0
      %841 = vmatprep.subr.mxu0 0.0
      %842 = vmatpush1.msra.mxu0 0.0
      %843 = vmatprep.subr.mxu0 0.0
      %844 = vmatpush1.msra.mxu0 0.0
      %845 = vmatprep.subr.mxu0 0.0
      %846 = vmatpush1.msra.mxu0 0.0
      %847 = vmatprep.subr.mxu0 0.0
      %848 = vmatpush1.msra.mxu0 0.0
      %849 = vmatprep.subr.mxu0 0.0
      %850 = vmatpush1.msra.mxu0 0.0
      %851 = vmatprep.subr.mxu0 0.0
      %852 = vmatpush1.msra.mxu0 0.0
      %853 = vmatprep.subr.mxu0 0.0
      %854 = vmatpush1.msra.mxu0 0.0
      %855 = vmatprep.subr.mxu0 0.0
      %856 = vmatpush1.msra.mxu0 0.0
      %857 = vmatprep.subr.mxu0 0.0
      %858 = vmatpush1.msra.mxu0 0.0
      %859 = vmatprep.subr.mxu0 0.0
      %860 = vmatpush1.msra.mxu0 0.0
      %861 = vmatprep.subr.mxu0 0.0
      %862 = vmatpush1.msra.mxu0 %v311
      %863 = vmatprep.subr.mxu0 0.0
      %864 = vmatpush1.msra.mxu0 %v310
      %865 = vmatprep.subr.mxu0 0.0
      %866 = vmatpush1.msra.mxu0 %v309
      %867 = vmatprep.subr.mxu0 0.0
      %868 = vmatpush1.msra.mxu0 %v308
      %869 = vmatprep.subr.mxu0 0.0
      %870 = vmatpush2.msra.mxu0 0.0
      %871 = vmatprep.subr.mxu0 0.0
      %872 = vmatpush2.msra.mxu0 0.0
      %873 = vmatprep.subr.mxu0 0.0
      %874 = vmatpush2.msra.mxu0 0.0
      %875 = vmatprep.subr.mxu0 0.0
      %876 = vmatpush2.msra.mxu0 0.0
      %877 = vmatprep.subr.mxu0 0.0
      %878 = vmatpush2.msra.mxu0 0.0
      %879 = vmatprep.subr.mxu0 0.0
      %880 = vmatpush2.msra.mxu0 0.0
      %881 = vmatprep.subr.mxu0 0.0
      %882 = vmatpush2.msra.mxu0 0.0
      %883 = vmatprep.subr.mxu0 0.0
      %884 = vmatpush2.msra.mxu0 0.0
      %885 = vmatprep.subr.mxu0 0.0
      %886 = vmatpush2.msra.mxu0 0.0
      %887 = vmatprep.subr.mxu0 0.0
      %888 = vmatpush2.msra.mxu0 0.0
      %889 = vmatprep.subr.mxu0 0.0
      %890 = vmatpush2.msra.mxu0 0.0
      %891 = vmatprep.subr.mxu0 0.0
      %892 = vmatpush2.msra.mxu0 0.0
      %893 = vmatprep.subr.mxu0 0.0
      %894 = vmatpush2.msra.mxu0 0.0
      %895 = vmatprep.subr.mxu0 0.0
      %896 = vmatpush2.msra.mxu0 0.0
      %897 = vmatprep.subr.mxu0 0.0
      %898 = vmatpush2.msra.mxu0 0.0
      %899 = vmatprep.subr.mxu0 0.0
      %900 = vmatpush2.msra.mxu0 0.0
      %901 = vmatprep.mubr.f32.mxu0 0.0
      %902 = vmatmul.mubr.f32.gmra.mxu0 %v835
      %v903 = vpop.f32.mrf.mxu0
      %v904 = vadd.f32 0.0, %v903
      %v905 = vpop.f32.mrf.mxu0
      %906 = vdwg.mxu0
      %v907 = vadd.f32 %v831, %v904
      %v908 = vxor.u32 %v907, 2147483648
      %v909 = vmul.f32 %v908, 1.442695
      %v910 = vpow.pop %v909
      %v911 = vadd.f32 %v910, 1.0
      %v912 = vrcp.pop %v911
      %v913 = vmul.f32 1.0, %v912
      %v914 = vtanh.pop %v907
      %v915 = vmul.f32 %v913, %v721
      %917 = vrot.lane.b32.xlu0 %v914, 64
      %v918 = vpop.permute.xlu0 %917
      %v920 = vmul.f32 %v913, %v918
      %922 = vrot.lane.b32.xlu0 %v920, 32
      %v923 = vpop.permute.xlu0 %922
      %v925 = vadd.f32 %v915, %v923
      %v926 = vtanh.pop %v925
      %928 = vrot.lane.b32.xlu0 %v926, 64
      %v929 = vpop.permute.xlu0 %928
      %v931 = vmul.f32 %v913, %v929
      %s932 = scalar_lea.vmem %s285, 24
      %v933 = vld [vmem:[%s932] sm:$0xff]
      %935 = vrot.lane.b32.xlu0 %v829, 32
      %v936 = vpop.permute.xlu0 %935
      %v937 = vsel %vm317, %v936, 0
      %939 = vmatprep.subr.mxu0 0.0
      %940 = vmatpush1.msra.mxu0 0.0
      %941 = vmatprep.subr.mxu0 0.0
      %942 = vmatpush1.msra.mxu0 0.0
      %943 = vmatprep.subr.mxu0 0.0
      %944 = vmatpush1.msra.mxu0 0.0
      %945 = vmatprep.subr.mxu0 0.0
      %946 = vmatpush1.msra.mxu0 0.0
      %947 = vmatprep.subr.mxu0 0.0
      %948 = vmatpush1.msra.mxu0 0.0
      %949 = vmatprep.subr.mxu0 0.0
      %950 = vmatpush1.msra.mxu0 0.0
      %951 = vmatprep.subr.mxu0 0.0
      %952 = vmatpush1.msra.mxu0 0.0
      %953 = vmatprep.subr.mxu0 0.0
      %954 = vmatpush1.msra.mxu0 0.0
      %955 = vmatprep.subr.mxu0 0.0
      %956 = vmatpush1.msra.mxu0 0.0
      %957 = vmatprep.subr.mxu0 0.0
      %958 = vmatpush1.msra.mxu0 0.0
      %959 = vmatprep.subr.mxu0 0.0
      %960 = vmatpush1.msra.mxu0 0.0
      %961 = vmatprep.subr.mxu0 0.0
      %962 = vmatpush1.msra.mxu0 0.0
      %963 = vmatprep.subr.mxu0 0.0
      %964 = vmatpush1.msra.mxu0 %v307
      %965 = vmatprep.subr.mxu0 0.0
      %966 = vmatpush1.msra.mxu0 %v306
      %967 = vmatprep.subr.mxu0 0.0
      %968 = vmatpush1.msra.mxu0 %v305
      %969 = vmatprep.subr.mxu0 0.0
      %970 = vmatpush1.msra.mxu0 %v304
      %971 = vmatprep.subr.mxu0 0.0
      %972 = vmatpush2.msra.mxu0 0.0
      %973 = vmatprep.subr.mxu0 0.0
      %974 = vmatpush2.msra.mxu0 0.0
      %975 = vmatprep.subr.mxu0 0.0
      %976 = vmatpush2.msra.mxu0 0.0
      %977 = vmatprep.subr.mxu0 0.0
      %978 = vmatpush2.msra.mxu0 0.0
      %979 = vmatprep.subr.mxu0 0.0
      %980 = vmatpush2.msra.mxu0 0.0
      %981 = vmatprep.subr.mxu0 0.0
      %982 = vmatpush2.msra.mxu0 0.0
      %983 = vmatprep.subr.mxu0 0.0
      %984 = vmatpush2.msra.mxu0 0.0
      %985 = vmatprep.subr.mxu0 0.0
      %986 = vmatpush2.msra.mxu0 0.0
      %987 = vmatprep.subr.mxu0 0.0
      %988 = vmatpush2.msra.mxu0 0.0
      %989 = vmatprep.subr.mxu0 0.0
      %990 = vmatpush2.msra.mxu0 0.0
      %991 = vmatprep.subr.mxu0 0.0
      %992 = vmatpush2.msra.mxu0 0.0
      %993 = vmatprep.subr.mxu0 0.0
      %994 = vmatpush2.msra.mxu0 0.0
      %995 = vmatprep.subr.mxu0 0.0
      %996 = vmatpush2.msra.mxu0 0.0
      %997 = vmatprep.subr.mxu0 0.0
      %998 = vmatpush2.msra.mxu0 0.0
      %999 = vmatprep.subr.mxu0 0.0
      %1000 = vmatpush2.msra.mxu0 0.0
      %1001 = vmatprep.subr.mxu0 0.0
      %1002 = vmatpush2.msra.mxu0 0.0
      %1003 = vmatprep.mubr.f32.mxu0 0.0
      %1004 = vmatmul.mubr.f32.gmra.mxu0 %v937
      %v1005 = vpop.f32.mrf.mxu0
      %v1006 = vadd.f32 0.0, %v1005
      %v1007 = vpop.f32.mrf.mxu0
      %1008 = vdwg.mxu0
      %v1009 = vadd.f32 %v933, %v1006
      %v1010 = vxor.u32 %v1009, 2147483648
      %v1011 = vmul.f32 %v1010, 1.442695
      %v1012 = vpow.pop %v1011
      %v1013 = vadd.f32 %v1012, 1.0
      %v1014 = vrcp.pop %v1013
      %v1015 = vmul.f32 1.0, %v1014
      %v1016 = vtanh.pop %v1009
      %v1017 = vmul.f32 %v1015, %v823
      %1019 = vrot.lane.b32.xlu0 %v1016, 64
      %v1020 = vpop.permute.xlu0 %1019
      %v1022 = vmul.f32 %v1015, %v1020
      %1024 = vrot.lane.b32.xlu0 %v1022, 32
      %v1025 = vpop.permute.xlu0 %1024
      %v1027 = vadd.f32 %v1017, %v1025
      %v1028 = vtanh.pop %v1027
      %1030 = vrot.lane.b32.xlu0 %v1028, 64
      %v1031 = vpop.permute.xlu0 %1030
      %v1033 = vmul.f32 %v1015, %v1031
      %v1034 = vld [vmem:[%s292] sm:$0xff]
      %1036 = vrot.lane.b32.xlu0 %v931, 32
      %v1037 = vpop.permute.xlu0 %1036
      %v1038 = vsel %vm317, %v1037, 0
      %1040 = vmatprep.subr.mxu0 0.0
      %1041 = vmatpush1.msra.mxu0 0.0
      %1042 = vmatprep.subr.mxu0 0.0
      %1043 = vmatpush1.msra.mxu0 0.0
      %1044 = vmatprep.subr.mxu0 0.0
      %1045 = vmatpush1.msra.mxu0 0.0
      %1046 = vmatprep.subr.mxu0 0.0
      %1047 = vmatpush1.msra.mxu0 0.0
      %1048 = vmatprep.subr.mxu0 0.0
      %1049 = vmatpush1.msra.mxu0 0.0
      %1050 = vmatprep.subr.mxu0 0.0
      %1051 = vmatpush1.msra.mxu0 0.0
      %1052 = vmatprep.subr.mxu0 0.0
      %1053 = vmatpush1.msra.mxu0 0.0
      %1054 = vmatprep.subr.mxu0 0.0
      %1055 = vmatpush1.msra.mxu0 0.0
      %1056 = vmatprep.subr.mxu0 0.0
      %1057 = vmatpush1.msra.mxu0 0.0
      %1058 = vmatprep.subr.mxu0 0.0
      %1059 = vmatpush1.msra.mxu0 0.0
      %1060 = vmatprep.subr.mxu0 0.0
      %1061 = vmatpush1.msra.mxu0 0.0
      %1062 = vmatprep.subr.mxu0 0.0
      %1063 = vmatpush1.msra.mxu0 0.0
      %1064 = vmatprep.subr.mxu0 0.0
      %1065 = vmatpush1.msra.mxu0 %v311
      %1066 = vmatprep.subr.mxu0 0.0
      %1067 = vmatpush1.msra.mxu0 %v310
      %1068 = vmatprep.subr.mxu0 0.0
      %1069 = vmatpush1.msra.mxu0 %v309
      %1070 = vmatprep.subr.mxu0 0.0
      %1071 = vmatpush1.msra.mxu0 %v308
      %1072 = vmatprep.subr.mxu0 0.0
      %1073 = vmatpush2.msra.mxu0 0.0
      %1074 = vmatprep.subr.mxu0 0.0
      %1075 = vmatpush2.msra.mxu0 0.0
      %1076 = vmatprep.subr.mxu0 0.0
      %1077 = vmatpush2.msra.mxu0 0.0
      %1078 = vmatprep.subr.mxu0 0.0
      %1079 = vmatpush2.msra.mxu0 0.0
      %1080 = vmatprep.subr.mxu0 0.0
      %1081 = vmatpush2.msra.mxu0 0.0
      %1082 = vmatprep.subr.mxu0 0.0
      %1083 = vmatpush2.msra.mxu0 0.0
      %1084 = vmatprep.subr.mxu0 0.0
      %1085 = vmatpush2.msra.mxu0 0.0
      %1086 = vmatprep.subr.mxu0 0.0
      %1087 = vmatpush2.msra.mxu0 0.0
      %1088 = vmatprep.subr.mxu0 0.0
      %1089 = vmatpush2.msra.mxu0 0.0
      %1090 = vmatprep.subr.mxu0 0.0
      %1091 = vmatpush2.msra.mxu0 0.0
      %1092 = vmatprep.subr.mxu0 0.0
      %1093 = vmatpush2.msra.mxu0 0.0
      %1094 = vmatprep.subr.mxu0 0.0
      %1095 = vmatpush2.msra.mxu0 0.0
      %1096 = vmatprep.subr.mxu0 0.0
      %1097 = vmatpush2.msra.mxu0 0.0
      %1098 = vmatprep.subr.mxu0 0.0
      %1099 = vmatpush2.msra.mxu0 0.0
      %1100 = vmatprep.subr.mxu0 0.0
      %1101 = vmatpush2.msra.mxu0 0.0
      %1102 = vmatprep.subr.mxu0 0.0
      %1103 = vmatpush2.msra.mxu0 0.0
      %1104 = vmatprep.mubr.f32.mxu0 0.0
      %1105 = vmatmul.mubr.f32.gmra.mxu0 %v1038
      %v1106 = vpop.f32.mrf.mxu0
      %v1107 = vadd.f32 0.0, %v1106
      %v1108 = vpop.f32.mrf.mxu0
      %1109 = vdwg.mxu0
      %v1110 = vadd.f32 %v1034, %v1107
      %v1111 = vxor.u32 %v1110, 2147483648
      %v1112 = vmul.f32 %v1111, 1.442695
      %v1113 = vpow.pop %v1112
      %v1114 = vadd.f32 %v1113, 1.0
      %v1115 = vrcp.pop %v1114
      %v1116 = vmul.f32 1.0, %v1115
      %v1117 = vtanh.pop %v1110
      %v1118 = vmul.f32 %v1116, %v925
      %1120 = vrot.lane.b32.xlu0 %v1117, 64
      %v1121 = vpop.permute.xlu0 %1120
      %v1123 = vmul.f32 %v1116, %v1121
      %1125 = vrot.lane.b32.xlu0 %v1123, 32
      %v1126 = vpop.permute.xlu0 %1125
      %v1128 = vadd.f32 %v1118, %v1126
      %v1129 = vtanh.pop %v1128
      %1131 = vrot.lane.b32.xlu0 %v1129, 64
      %v1132 = vpop.permute.xlu0 %1131
      %v1134 = vmul.f32 %v1116, %v1132
      %1136 = vrot.lane.b32.xlu0 %v1033, 32
      %v1137 = vpop.permute.xlu0 %1136
      %1139 = vst.msk [vmem:[#allocation2] sm:$0xff] %vm317, %v1137
      %1141 = vrot.lane.b32.xlu0 %v1027, 96
      %v1142 = vpop.permute.xlu0 %1141
      %1144 = vst.msk [vmem:[#allocation3] sm:$0xff] %vm317, %v1142
      %1146 = vrot.lane.b32.xlu0 %v1134, 32
      %v1147 = vpop.permute.xlu0 %1146
      %1149 = vst.msk [vmem:[#allocation4] sm:$0xff] %vm317, %v1147
      %1151 = vrot.lane.b32.xlu0 %v1128, 96
      %v1152 = vpop.permute.xlu0 %1151
      %1154 = vst.msk [vmem:[#allocation5] sm:$0xff] %vm317, %v1152
      %p1155 = scmp.eq.s32.totalorder %s18, 1
      // Predicated region
      $region53: #{lstm_classifier_forward.7} parent=47 // pred_check
        %p1156 = pneg %p1155
      $region54: #{lstm_classifier_forward.7} parent=47 // pred_check_branch
        %1158 = sbr.rel (%p1156) target = $region56
      $region55: #{lstm_classifier_forward.7} parent=47 // pred_region
        %v1159 = vld [vmem:[%s4] sm:$0xff]
        %v1160 = vld [vmem:[%s4 + $0x8] sm:$0xff]
        %v1161 = vld [vmem:[%s4 + $0x10] sm:$0xff]
        %v1162 = vld [vmem:[%s4 + $0x18] sm:$0xff]
        %v1163 = vld [vmem:[%s5] sm:$0xff]
        %v1164 = vld [vmem:[%s5 + $0x8] sm:$0xff]
        %v1165 = vld [vmem:[%s5 + $0x10] sm:$0xff]
        %v1166 = vld [vmem:[%s5 + $0x18] sm:$0xff]
        %v1167 = vsel %vm317, %v1147, 0
        %1169 = vmatprep.subr.mxu0 0.0
        %1170 = vmatpush1.msra.mxu0 0.0
        %1171 = vmatprep.subr.mxu0 0.0
        %1172 = vmatpush1.msra.mxu0 0.0
        %1173 = vmatprep.subr.mxu0 0.0
        %1174 = vmatpush1.msra.mxu0 0.0
        %1175 = vmatprep.subr.mxu0 0.0
        %1176 = vmatpush1.msra.mxu0 0.0
        %1177 = vmatprep.subr.mxu0 0.0
        %1178 = vmatpush1.msra.mxu0 0.0
        %1179 = vmatprep.subr.mxu0 0.0
        %1180 = vmatpush1.msra.mxu0 0.0
        %1181 = vmatprep.subr.mxu0 0.0
        %1182 = vmatpush1.msra.mxu0 0.0
        %1183 = vmatprep.subr.mxu0 0.0
        %1184 = vmatpush1.msra.mxu0 0.0
        %1185 = vmatprep.subr.mxu0 0.0
        %1186 = vmatpush1.msra.mxu0 0.0
        %1187 = vmatprep.subr.mxu0 0.0
        %1188 = vmatpush1.msra.mxu0 0.0
        %1189 = vmatprep.subr.mxu0 0.0
        %1190 = vmatpush1.msra.mxu0 0.0
        %1191 = vmatprep.subr.mxu0 0.0
        %1192 = vmatpush1.msra.mxu0 0.0
        %1193 = vmatprep.subr.mxu0 0.0
        %1194 = vmatpush1.msra.mxu0 %v1166
        %1195 = vmatprep.subr.mxu0 0.0
        %1196 = vmatpush1.msra.mxu0 %v1165
        %1197 = vmatprep.subr.mxu0 0.0
        %1198 = vmatpush1.msra.mxu0 %v1164
        %1199 = vmatprep.subr.mxu0 0.0
        %1200 = vmatpush1.msra.mxu0 %v1163
        %1201 = vmatprep.subr.mxu0 0.0
        %1202 = vmatpush2.msra.mxu0 0.0
        %1203 = vmatprep.subr.mxu0 0.0
        %1204 = vmatpush2.msra.mxu0 0.0
        %1205 = vmatprep.subr.mxu0 0.0
        %1206 = vmatpush2.msra.mxu0 0.0
        %1207 = vmatprep.subr.mxu0 0.0
        %1208 = vmatpush2.msra.mxu0 0.0
        %1209 = vmatprep.subr.mxu0 0.0
        %1210 = vmatpush2.msra.mxu0 0.0
        %1211 = vmatprep.subr.mxu0 0.0
        %1212 = vmatpush2.msra.mxu0 0.0
        %1213 = vmatprep.subr.mxu0 0.0
        %1214 = vmatpush2.msra.mxu0 0.0
        %1215 = vmatprep.subr.mxu0 0.0
        %1216 = vmatpush2.msra.mxu0 0.0
        %1217 = vmatprep.subr.mxu0 0.0
        %1218 = vmatpush2.msra.mxu0 0.0
        %1219 = vmatprep.subr.mxu0 0.0
        %1220 = vmatpush2.msra.mxu0 0.0
        %1221 = vmatprep.subr.mxu0 0.0
        %1222 = vmatpush2.msra.mxu0 0.0
        %1223 = vmatprep.subr.mxu0 0.0
        %1224 = vmatpush2.msra.mxu0 0.0
        %1225 = vmatprep.subr.mxu0 0.0
        %1226 = vmatpush2.msra.mxu0 0.0
        %1227 = vmatprep.subr.mxu0 0.0
        %1228 = vmatpush2.msra.mxu0 0.0
        %1229 = vmatprep.subr.mxu0 0.0
        %1230 = vmatpush2.msra.mxu0 0.0
        %1231 = vmatprep.subr.mxu0 0.0
        %1232 = vmatpush2.msra.mxu0 0.0
        %1233 = vmatprep.mubr.f32.mxu0 0.0
        %1234 = vmatmul.mubr.f32.gmra.mxu0 %v1167
        %v1235 = vpop.f32.mrf.mxu0
        %v1236 = vadd.f32 0.0, %v1235
        %v1237 = vpop.f32.mrf.mxu0
        %1238 = vdwg.mxu0
        %v1239 = vsel %vm317, %v1137, 0
        %1241 = vmatprep.subr.mxu0 0.0
        %1242 = vmatpush1.msra.mxu0 0.0
        %1243 = vmatprep.subr.mxu0 0.0
        %1244 = vmatpush1.msra.mxu0 0.0
        %1245 = vmatprep.subr.mxu0 0.0
        %1246 = vmatpush1.msra.mxu0 0.0
        %1247 = vmatprep.subr.mxu0 0.0
        %1248 = vmatpush1.msra.mxu0 0.0
        %1249 = vmatprep.subr.mxu0 0.0
        %1250 = vmatpush1.msra.mxu0 0.0
        %1251 = vmatprep.subr.mxu0 0.0
        %1252 = vmatpush1.msra.mxu0 0.0
        %1253 = vmatprep.subr.mxu0 0.0
        %1254 = vmatpush1.msra.mxu0 0.0
        %1255 = vmatprep.subr.mxu0 0.0
        %1256 = vmatpush1.msra.mxu0 0.0
        %1257 = vmatprep.subr.mxu0 0.0
        %1258 = vmatpush1.msra.mxu0 0.0
        %1259 = vmatprep.subr.mxu0 0.0
        %1260 = vmatpush1.msra.mxu0 0.0
        %1261 = vmatprep.subr.mxu0 0.0
        %1262 = vmatpush1.msra.mxu0 0.0
        %1263 = vmatprep.subr.mxu0 0.0
        %1264 = vmatpush1.msra.mxu0 0.0
        %1265 = vmatprep.subr.mxu0 0.0
        %1266 = vmatpush1.msra.mxu0 %v1162
        %1267 = vmatprep.subr.mxu0 0.0
        %1268 = vmatpush1.msra.mxu0 %v1161
        %1269 = vmatprep.subr.mxu0 0.0
        %1270 = vmatpush1.msra.mxu0 %v1160
        %1271 = vmatprep.subr.mxu0 0.0
        %1272 = vmatpush1.msra.mxu0 %v1159
        %1273 = vmatprep.subr.mxu0 0.0
        %1274 = vmatpush2.msra.mxu0 0.0
        %1275 = vmatprep.subr.mxu0 0.0
        %1276 = vmatpush2.msra.mxu0 0.0
        %1277 = vmatprep.subr.mxu0 0.0
        %1278 = vmatpush2.msra.mxu0 0.0
        %1279 = vmatprep.subr.mxu0 0.0
        %1280 = vmatpush2.msra.mxu0 0.0
        %1281 = vmatprep.subr.mxu0 0.0
        %1282 = vmatpush2.msra.mxu0 0.0
        %1283 = vmatprep.subr.mxu0 0.0
        %1284 = vmatpush2.msra.mxu0 0.0
        %1285 = vmatprep.subr.mxu0 0.0
        %1286 = vmatpush2.msra.mxu0 0.0
        %1287 = vmatprep.subr.mxu0 0.0
        %1288 = vmatpush2.msra.mxu0 0.0
        %1289 = vmatprep.subr.mxu0 0.0
        %1290 = vmatpush2.msra.mxu0 0.0
        %1291 = vmatprep.subr.mxu0 0.0
        %1292 = vmatpush2.msra.mxu0 0.0
        %1293 = vmatprep.subr.mxu0 0.0
        %1294 = vmatpush2.msra.mxu0 0.0
        %1295 = vmatprep.subr.mxu0 0.0
        %1296 = vmatpush2.msra.mxu0 0.0
        %1297 = vmatprep.subr.mxu0 0.0
        %1298 = vmatpush2.msra.mxu0 0.0
        %1299 = vmatprep.subr.mxu0 0.0
        %1300 = vmatpush2.msra.mxu0 0.0
        %1301 = vmatprep.subr.mxu0 0.0
        %1302 = vmatpush2.msra.mxu0 0.0
        %1303 = vmatprep.subr.mxu0 0.0
        %1304 = vmatpush2.msra.mxu0 0.0
        %1305 = vmatprep.mubr.f32.mxu0 0.0
        %1306 = vmatmul.mubr.f32.gmra.mxu0 %v1239
        %v1307 = vpop.f32.mrf.mxu0
        %v1308 = vadd.f32 %v1236, %v1307
        %v1309 = vpop.f32.mrf.mxu0
        %1310 = vdwg.mxu0
        %v1311 = vld [vmem:[%s6] sm:$0x1]
        %v1313 = vlaneseq
        %v1314 = vshrl.u32 %v1313, 7
        %v1315 = vsub.s32 0, %v1314
        %v1316 = vrot.slane %v1311, %v1315
        %v1318 = vadd.f32 %v1308, %v1316
        %vm1319 = vcmask 31744
        %1320 = vst.msk [vmem:[%s7] sm:$0xff] %vm1319, %v1318
      $region56: #{lstm_classifier_forward.7} parent=47 // pred_fallthru
        _
      // Predicated region
      $region57: #{lstm_classifier_forward.7} parent=47 // pred_check
        %p1321 = pneg %p190
      $region58: #{lstm_classifier_forward.7} parent=47 // pred_check_branch
        %1323 = sbr.rel (%p1321) target = $region60
      $region59: #{lstm_classifier_forward.7} parent=47 // pred_region
        _
      $region60: #{lstm_classifier_forward.7} parent=47 // pred_fallthru
        _
      // Predicated region
      $region61: #{lstm_classifier_forward.7} parent=47 // pred_check
        %p1324 = pneg %p190
      $region62: #{lstm_classifier_forward.7} parent=47 // pred_check_branch
        %1326 = sbr.rel (%p1324) target = $region64
      $region63: #{lstm_classifier_forward.7} parent=47 // pred_region
        _
      $region64: #{lstm_classifier_forward.7} parent=47 // pred_fallthru
        _
    $region48: #{lstm_classifier_forward.7} parent=5 // pred_fallthru
      _
    %p1327 = scmp.le.s32.totalorder 2, %s13
    // Predicated region
    $region65: #{lstm_classifier_forward.7} parent=5 // pred_check
      %p1328 = pneg %p1327
    $region66: #{lstm_classifier_forward.7} parent=5 // pred_check_branch
      %1330 = sbr.rel (%p1328) target = $region68
    $region67: #{lstm_classifier_forward.7} parent=5 // pred_region
      %s1331 = ssub.s32 %s13, 2
    $region68: #{lstm_classifier_forward.7} parent=5 // pred_fallthru
      _
  $region6: #{lstm_classifier_forward.7} parent=0 // loop_footer
    %s17 = sadd.s32 1, %s13
  $region7: #{lstm_classifier_forward.7} parent=0 // loop_footer_branch
    %12 = sbr.rel target = $region3
  $region8: #{lstm_classifier_forward.7} parent=0 // loop_exit
    _

// kernel: lstm_classifier_forward.6
$region0: #{lstm_classifier_forward.6}
  #allocation0 [shape = 'u32[]', space=smem, size = 0x4, offset = 0x4, fixed_abs, tag = 'smem constant byte address 0x4 - core index']
  #allocation1 [shape = 'u32[144,128]{1,0:T(1,128)}', space=vmem, size = 0x12000, scoped, tag = 'internal scratch']
  %s0 = inlined_call_operand.vmem [shape: f32[64,32], index: 0, kind: input, shape index: {}]
  %s1 = inlined_call_operand.vmem [shape: f32[64,32], index: 1, kind: input, shape index: {}]
  %s2 = inlined_call_operand.vmem [shape: f32[32,128], index: 2, kind: input, shape index: {}]
  %s3 = inlined_call_operand.vmem [shape: f32[32,128], index: 3, kind: input, shape index: {}]
  %s4 = inlined_call_operand.vmem [shape: f32[32,128], index: 4, kind: input, shape index: {}]
  %s5 = inlined_call_operand.vmem [shape: f32[32,128], index: 5, kind: input, shape index: {}]
  %s6 = inlined_call_operand.vmem [shape: f32[1,128], index: 6, kind: input, shape index: {}]
  %s7 = inlined_call_operand.vmem [shape: f32[1,128], index: 7, kind: input, shape index: {}]
  %s8 = inlined_call_operand.vmem [shape: f32[64,128], index: 8, kind: output, shape index: {0}]
  %s9 = inlined_call_operand.vmem [shape: f32[64,128], index: 9, kind: output, shape index: {1}]
  %10 = xla_tuple %s8, %s9
  %s11 = sld [smem:[#allocation0]]
  $region50: #{lstm_classifier_forward.6} parent=0
    _
  %s13 = ssub.s32 1, %s11
  %s14 = scalar_select 0, %s13, %s11
  // Predicated region
  $region2: #{lstm_classifier_forward.6} parent=0 // pred_check
    _
  $region3: #{lstm_classifier_forward.6} parent=0 // pred_check_branch
    %16 = sbr.rel (0) target = $region5
  $region4: #{lstm_classifier_forward.6} parent=0 // pred_region
    _
  $region5: #{lstm_classifier_forward.6} parent=0 // pred_fallthru
    _
  // Predicated region
  $region6: #{lstm_classifier_forward.6} parent=0 // pred_check
    _
  $region7: #{lstm_classifier_forward.6} parent=0 // pred_check_branch
    %18 = sbr.rel (0) target = $region9
  $region8: #{lstm_classifier_forward.6} parent=0 // pred_region
    _
  $region9: #{lstm_classifier_forward.6} parent=0 // pred_fallthru
    _
  // Predicated region
  $region10: #{lstm_classifier_forward.6} parent=0 // pred_check
    _
  $region11: #{lstm_classifier_forward.6} parent=0 // pred_check_branch
    %20 = sbr.rel (0) target = $region13
  $region12: #{lstm_classifier_forward.6} parent=0 // pred_region
    _
  $region13: #{lstm_classifier_forward.6} parent=0 // pred_fallthru
    _
  // Predicated region
  $region14: #{lstm_classifier_forward.6} parent=0 // pred_check
    _
  $region15: #{lstm_classifier_forward.6} parent=0 // pred_check_branch
    %22 = sbr.rel (0) target = $region17
  $region16: #{lstm_classifier_forward.6} parent=0 // pred_region
    _
  $region17: #{lstm_classifier_forward.6} parent=0 // pred_fallthru
    _
  // Predicated region
  $region18: #{lstm_classifier_forward.6} parent=0 // pred_check
    _
  $region19: #{lstm_classifier_forward.6} parent=0 // pred_check_branch
    %24 = sbr.rel (0) target = $region21
  $region20: #{lstm_classifier_forward.6} parent=0 // pred_region
    _
  $region21: #{lstm_classifier_forward.6} parent=0 // pred_fallthru
    _
  // Predicated region
  $region22: #{lstm_classifier_forward.6} parent=0 // pred_check
    _
  $region23: #{lstm_classifier_forward.6} parent=0 // pred_check_branch
    %26 = sbr.rel (0) target = $region25
  $region24: #{lstm_classifier_forward.6} parent=0 // pred_region
    _
  $region25: #{lstm_classifier_forward.6} parent=0 // pred_fallthru
    _
  // Predicated region
  $region26: #{lstm_classifier_forward.6} parent=0 // pred_check
    _
  $region27: #{lstm_classifier_forward.6} parent=0 // pred_check_branch
    %28 = sbr.rel (0) target = $region29
  $region28: #{lstm_classifier_forward.6} parent=0 // pred_region
    _
  $region29: #{lstm_classifier_forward.6} parent=0 // pred_fallthru
    _
  // Predicated region
  $region30: #{lstm_classifier_forward.6} parent=0 // pred_check
    _
  $region31: #{lstm_classifier_forward.6} parent=0 // pred_check_branch
    %30 = sbr.rel (0) target = $region33
  $region32: #{lstm_classifier_forward.6} parent=0 // pred_region
    _
  $region33: #{lstm_classifier_forward.6} parent=0 // pred_fallthru
    _
  %v31 = vld [vmem:[%s0] sm:$0xff]
  %v32 = vld [vmem:[%s0 + $0x8] sm:$0xff]
  %v33 = vld [vmem:[%s0 + $0x10] sm:$0xff]
  %v34 = vld [vmem:[%s0 + $0x18] sm:$0xff]
  %v35 = vld [vmem:[%s0 + $0x20] sm:$0xff]
  %v36 = vld [vmem:[%s0 + $0x28] sm:$0xff]
  %v37 = vld [vmem:[%s0 + $0x30] sm:$0xff]
  %v38 = vld [vmem:[%s0 + $0x38] sm:$0xff]
  %v39 = vld [vmem:[%s1] sm:$0xff]
  %v40 = vld [vmem:[%s1 + $0x8] sm:$0xff]
  %v41 = vld [vmem:[%s1 + $0x10] sm:$0xff]
  %v42 = vld [vmem:[%s1 + $0x18] sm:$0xff]
  %v43 = vld [vmem:[%s1 + $0x20] sm:$0xff]
  %v44 = vld [vmem:[%s1 + $0x28] sm:$0xff]
  %v45 = vld [vmem:[%s1 + $0x30] sm:$0xff]
  %v46 = vld [vmem:[%s1 + $0x38] sm:$0xff]
  %v47 = vld [vmem:[%s2] sm:$0xff]
  %v48 = vld [vmem:[%s2 + $0x8] sm:$0xff]
  %v49 = vld [vmem:[%s2 + $0x10] sm:$0xff]
  %v50 = vld [vmem:[%s2 + $0x18] sm:$0xff]
  %v51 = vld [vmem:[%s3] sm:$0xff]
  %v52 = vld [vmem:[%s3 + $0x8] sm:$0xff]
  %v53 = vld [vmem:[%s3 + $0x10] sm:$0xff]
  %v54 = vld [vmem:[%s3 + $0x18] sm:$0xff]
  %vm55 = vcmask 261120
  %v57 = vsel %vm55, %v39, 0
  %v60 = vsel %vm55, %v40, 0
  %v63 = vsel %vm55, %v41, 0
  %v66 = vsel %vm55, %v42, 0
  %v69 = vsel %vm55, %v43, 0
  %v72 = vsel %vm55, %v44, 0
  %v75 = vsel %vm55, %v45, 0
  %v78 = vsel %vm55, %v46, 0
  %80 = vmatprep.subr.mxu0 0.0
  %81 = vmatpush1.msra.mxu0 0.0
  %82 = vmatprep.subr.mxu0 0.0
  %83 = vmatpush1.msra.mxu0 0.0
  %84 = vmatprep.subr.mxu0 0.0
  %85 = vmatpush1.msra.mxu0 0.0
  %86 = vmatprep.subr.mxu0 0.0
  %87 = vmatpush1.msra.mxu0 0.0
  %88 = vmatprep.subr.mxu0 0.0
  %89 = vmatpush1.msra.mxu0 0.0
  %90 = vmatprep.subr.mxu0 0.0
  %91 = vmatpush1.msra.mxu0 0.0
  %92 = vmatprep.subr.mxu0 0.0
  %93 = vmatpush1.msra.mxu0 0.0
  %94 = vmatprep.subr.mxu0 0.0
  %95 = vmatpush1.msra.mxu0 0.0
  %96 = vmatprep.subr.mxu0 0.0
  %97 = vmatpush1.msra.mxu0 0.0
  %98 = vmatprep.subr.mxu0 0.0
  %99 = vmatpush1.msra.mxu0 0.0
  %100 = vmatprep.subr.mxu0 0.0
  %101 = vmatpush1.msra.mxu0 0.0
  %102 = vmatprep.subr.mxu0 0.0
  %103 = vmatpush1.msra.mxu0 0.0
  %104 = vmatprep.subr.mxu0 0.0
  %105 = vmatpush1.msra.mxu0 %v54
  %106 = vmatprep.subr.mxu0 0.0
  %107 = vmatpush1.msra.mxu0 %v53
  %108 = vmatprep.subr.mxu0 0.0
  %109 = vmatpush1.msra.mxu0 %v52
  %110 = vmatprep.subr.mxu0 0.0
  %111 = vmatpush1.msra.mxu0 %v51
  %112 = vmatprep.subr.mxu0 0.0
  %113 = vmatpush2.msra.mxu0 0.0
  %114 = vmatprep.subr.mxu0 0.0
  %115 = vmatpush2.msra.mxu0 0.0
  %116 = vmatprep.subr.mxu0 0.0
  %117 = vmatpush2.msra.mxu0 0.0
  %118 = vmatprep.subr.mxu0 0.0
  %119 = vmatpush2.msra.mxu0 0.0
  %120 = vmatprep.subr.mxu0 0.0
  %121 = vmatpush2.msra.mxu0 0.0
  %122 = vmatprep.subr.mxu0 0.0
  %123 = vmatpush2.msra.mxu0 0.0
  %124 = vmatprep.subr.mxu0 0.0
  %125 = vmatpush2.msra.mxu0 0.0
  %126 = vmatprep.subr.mxu0 0.0
  %127 = vmatpush2.msra.mxu0 0.0
  %128 = vmatprep.subr.mxu0 0.0
  %129 = vmatpush2.msra.mxu0 0.0
  %130 = vmatprep.subr.mxu0 0.0
  %131 = vmatpush2.msra.mxu0 0.0
  %132 = vmatprep.subr.mxu0 0.0
  %133 = vmatpush2.msra.mxu0 0.0
  %134 = vmatprep.subr.mxu0 0.0
  %135 = vmatpush2.msra.mxu0 0.0
  %136 = vmatprep.subr.mxu0 0.0
  %137 = vmatpush2.msra.mxu0 0.0
  %138 = vmatprep.subr.mxu0 0.0
  %139 = vmatpush2.msra.mxu0 0.0
  %140 = vmatprep.subr.mxu0 0.0
  %141 = vmatpush2.msra.mxu0 0.0
  %142 = vmatprep.subr.mxu0 0.0
  %143 = vmatpush2.msra.mxu0 0.0
  %144 = vmatprep.mubr.f32.mxu0 0.0
  %145 = vmatmul.mubr.f32.gmra.mxu0 %v57
  %v146 = vpop.f32.mrf.mxu0
  %v147 = vadd.f32 0.0, %v146
  %v148 = vpop.f32.mrf.mxu0
  %149 = vmatprep.mubr.f32.mxu0 0.0
  %150 = vmatmul.mubr.f32.gmra.mxu0 %v60
  %v151 = vpop.f32.mrf.mxu0
  %v152 = vadd.f32 0.0, %v151
  %v153 = vpop.f32.mrf.mxu0
  %154 = vmatprep.mubr.f32.mxu0 0.0
  %155 = vmatmul.mubr.f32.gmra.mxu0 %v63
  %v156 = vpop.f32.mrf.mxu0
  %v157 = vadd.f32 0.0, %v156
  %v158 = vpop.f32.mrf.mxu0
  %159 = vmatprep.mubr.f32.mxu0 0.0
  %160 = vmatmul.mubr.f32.gmra.mxu0 %v66
  %v161 = vpop.f32.mrf.mxu0
  %v162 = vadd.f32 0.0, %v161
  %v163 = vpop.f32.mrf.mxu0
  %164 = vmatprep.mubr.f32.mxu0 0.0
  %165 = vmatmul.mubr.f32.gmra.mxu0 %v69
  %v166 = vpop.f32.mrf.mxu0
  %v167 = vadd.f32 0.0, %v166
  %v168 = vpop.f32.mrf.mxu0
  %169 = vmatprep.mubr.f32.mxu0 0.0
  %170 = vmatmul.mubr.f32.gmra.mxu0 %v72
  %v171 = vpop.f32.mrf.mxu0
  %v172 = vadd.f32 0.0, %v171
  %v173 = vpop.f32.mrf.mxu0
  %174 = vmatprep.mubr.f32.mxu0 0.0
  %175 = vmatmul.mubr.f32.gmra.mxu0 %v75
  %v176 = vpop.f32.mrf.mxu0
  %v177 = vadd.f32 0.0, %v176
  %v178 = vpop.f32.mrf.mxu0
  %179 = vmatprep.mubr.f32.mxu0 0.0
  %180 = vmatmul.mubr.f32.gmra.mxu0 %v78
  %v181 = vpop.f32.mrf.mxu0
  %v182 = vadd.f32 0.0, %v181
  %v183 = vpop.f32.mrf.mxu0
  %184 = vdwg.mxu0
  %v186 = vsel %vm55, %v31, 0
  %v189 = vsel %vm55, %v32, 0
  %v192 = vsel %vm55, %v33, 0
  %v195 = vsel %vm55, %v34, 0
  %v198 = vsel %vm55, %v35, 0
  %v201 = vsel %vm55, %v36, 0
  %v204 = vsel %vm55, %v37, 0
  %v207 = vsel %vm55, %v38, 0
  %209 = vmatprep.subr.mxu0 0.0
  %210 = vmatpush1.msra.mxu0 0.0
  %211 = vmatprep.subr.mxu0 0.0
  %212 = vmatpush1.msra.mxu0 0.0
  %213 = vmatprep.subr.mxu0 0.0
  %214 = vmatpush1.msra.mxu0 0.0
  %215 = vmatprep.subr.mxu0 0.0
  %216 = vmatpush1.msra.mxu0 0.0
  %217 = vmatprep.subr.mxu0 0.0
  %218 = vmatpush1.msra.mxu0 0.0
  %219 = vmatprep.subr.mxu0 0.0
  %220 = vmatpush1.msra.mxu0 0.0
  %221 = vmatprep.subr.mxu0 0.0
  %222 = vmatpush1.msra.mxu0 0.0
  %223 = vmatprep.subr.mxu0 0.0
  %224 = vmatpush1.msra.mxu0 0.0
  %225 = vmatprep.subr.mxu0 0.0
  %226 = vmatpush1.msra.mxu0 0.0
  %227 = vmatprep.subr.mxu0 0.0
  %228 = vmatpush1.msra.mxu0 0.0
  %229 = vmatprep.subr.mxu0 0.0
  %230 = vmatpush1.msra.mxu0 0.0
  %231 = vmatprep.subr.mxu0 0.0
  %232 = vmatpush1.msra.mxu0 0.0
  %233 = vmatprep.subr.mxu0 0.0
  %234 = vmatpush1.msra.mxu0 %v50
  %235 = vmatprep.subr.mxu0 0.0
  %236 = vmatpush1.msra.mxu0 %v49
  %237 = vmatprep.subr.mxu0 0.0
  %238 = vmatpush1.msra.mxu0 %v48
  %239 = vmatprep.subr.mxu0 0.0
  %240 = vmatpush1.msra.mxu0 %v47
  %241 = vmatprep.subr.mxu0 0.0
  %242 = vmatpush2.msra.mxu0 0.0
  %243 = vmatprep.subr.mxu0 0.0
  %244 = vmatpush2.msra.mxu0 0.0
  %245 = vmatprep.subr.mxu0 0.0
  %246 = vmatpush2.msra.mxu0 0.0
  %247 = vmatprep.subr.mxu0 0.0
  %248 = vmatpush2.msra.mxu0 0.0
  %249 = vmatprep.subr.mxu0 0.0
  %250 = vmatpush2.msra.mxu0 0.0
  %251 = vmatprep.subr.mxu0 0.0
  %252 = vmatpush2.msra.mxu0 0.0
  %253 = vmatprep.subr.mxu0 0.0
  %254 = vmatpush2.msra.mxu0 0.0
  %255 = vmatprep.subr.mxu0 0.0
  %256 = vmatpush2.msra.mxu0 0.0
  %257 = vmatprep.subr.mxu0 0.0
  %258 = vmatpush2.msra.mxu0 0.0
  %259 = vmatprep.subr.mxu0 0.0
  %260 = vmatpush2.msra.mxu0 0.0
  %261 = vmatprep.subr.mxu0 0.0
  %262 = vmatpush2.msra.mxu0 0.0
  %263 = vmatprep.subr.mxu0 0.0
  %264 = vmatpush2.msra.mxu0 0.0
  %265 = vmatprep.subr.mxu0 0.0
  %266 = vmatpush2.msra.mxu0 0.0
  %267 = vmatprep.subr.mxu0 0.0
  %268 = vmatpush2.msra.mxu0 0.0
  %269 = vmatprep.subr.mxu0 0.0
  %270 = vmatpush2.msra.mxu0 0.0
  %271 = vmatprep.subr.mxu0 0.0
  %272 = vmatpush2.msra.mxu0 0.0
  %273 = vmatprep.mubr.f32.mxu0 0.0
  %274 = vmatmul.mubr.f32.gmra.mxu0 %v186
  %v275 = vpop.f32.mrf.mxu0
  %v276 = vadd.f32 %v147, %v275
  %v277 = vpop.f32.mrf.mxu0
  %278 = vmatprep.mubr.f32.mxu0 0.0
  %279 = vmatmul.mubr.f32.gmra.mxu0 %v189
  %v280 = vpop.f32.mrf.mxu0
  %v281 = vadd.f32 %v152, %v280
  %v282 = vpop.f32.mrf.mxu0
  %283 = vmatprep.mubr.f32.mxu0 0.0
  %284 = vmatmul.mubr.f32.gmra.mxu0 %v192
  %v285 = vpop.f32.mrf.mxu0
  %v286 = vadd.f32 %v157, %v285
  %v287 = vpop.f32.mrf.mxu0
  %288 = vmatprep.mubr.f32.mxu0 0.0
  %289 = vmatmul.mubr.f32.gmra.mxu0 %v195
  %v290 = vpop.f32.mrf.mxu0
  %v291 = vadd.f32 %v162, %v290
  %v292 = vpop.f32.mrf.mxu0
  %293 = vmatprep.mubr.f32.mxu0 0.0
  %294 = vmatmul.mubr.f32.gmra.mxu0 %v198
  %v295 = vpop.f32.mrf.mxu0
  %v296 = vadd.f32 %v167, %v295
  %v297 = vpop.f32.mrf.mxu0
  %298 = vmatprep.mubr.f32.mxu0 0.0
  %299 = vmatmul.mubr.f32.gmra.mxu0 %v201
  %v300 = vpop.f32.mrf.mxu0
  %v301 = vadd.f32 %v172, %v300
  %v302 = vpop.f32.mrf.mxu0
  %303 = vmatprep.mubr.f32.mxu0 0.0
  %304 = vmatmul.mubr.f32.gmra.mxu0 %v204
  %v305 = vpop.f32.mrf.mxu0
  %v306 = vadd.f32 %v177, %v305
  %v307 = vpop.f32.mrf.mxu0
  %308 = vmatprep.mubr.f32.mxu0 0.0
  %309 = vmatmul.mubr.f32.gmra.mxu0 %v207
  %v310 = vpop.f32.mrf.mxu0
  %v311 = vadd.f32 %v182, %v310
  %v312 = vpop.f32.mrf.mxu0
  %313 = vdwg.mxu0
  %v314 = vld [vmem:[%s6] sm:$0x1]
  %v316 = vlaneseq
  %v317 = vshrl.u32 %v316, 7
  %v318 = vsub.s32 0, %v317
  %v319 = vrot.slane %v314, %v318
  %v321 = vadd.f32 %v276, %v319
  %v322 = vadd.f32 %v281, %v319
  %v323 = vadd.f32 %v286, %v319
  %v324 = vadd.f32 %v291, %v319
  %v325 = vadd.f32 %v296, %v319
  %v326 = vadd.f32 %v301, %v319
  %v327 = vadd.f32 %v306, %v319
  %v328 = vadd.f32 %v311, %v319
  %329 = vst [vmem:[%s8] sm:$0xff] %v321
  %330 = vst [vmem:[%s8 + $0x8] sm:$0xff] %v322
  %331 = vst [vmem:[%s8 + $0x10] sm:$0xff] %v323
  %332 = vst [vmem:[%s8 + $0x18] sm:$0xff] %v324
  %333 = vst [vmem:[%s8 + $0x20] sm:$0xff] %v325
  %334 = vst [vmem:[%s8 + $0x28] sm:$0xff] %v326
  %335 = vst [vmem:[%s8 + $0x30] sm:$0xff] %v327
  %336 = vst [vmem:[%s8 + $0x38] sm:$0xff] %v328
  %v337 = vld [vmem:[%s4] sm:$0xff]
  %v338 = vld [vmem:[%s4 + $0x8] sm:$0xff]
  %v339 = vld [vmem:[%s4 + $0x10] sm:$0xff]
  %v340 = vld [vmem:[%s4 + $0x18] sm:$0xff]
  %v341 = vld [vmem:[%s5] sm:$0xff]
  %v342 = vld [vmem:[%s5 + $0x8] sm:$0xff]
  %v343 = vld [vmem:[%s5 + $0x10] sm:$0xff]
  %v344 = vld [vmem:[%s5 + $0x18] sm:$0xff]
  %345 = vmatprep.subr.mxu0 0.0
  %346 = vmatpush1.msra.mxu0 0.0
  %347 = vmatprep.subr.mxu0 0.0
  %348 = vmatpush1.msra.mxu0 0.0
  %349 = vmatprep.subr.mxu0 0.0
  %350 = vmatpush1.msra.mxu0 0.0
  %351 = vmatprep.subr.mxu0 0.0
  %352 = vmatpush1.msra.mxu0 0.0
  %353 = vmatprep.subr.mxu0 0.0
  %354 = vmatpush1.msra.mxu0 0.0
  %355 = vmatprep.subr.mxu0 0.0
  %356 = vmatpush1.msra.mxu0 0.0
  %357 = vmatprep.subr.mxu0 0.0
  %358 = vmatpush1.msra.mxu0 0.0
  %359 = vmatprep.subr.mxu0 0.0
  %360 = vmatpush1.msra.mxu0 0.0
  %361 = vmatprep.subr.mxu0 0.0
  %362 = vmatpush1.msra.mxu0 0.0
  %363 = vmatprep.subr.mxu0 0.0
  %364 = vmatpush1.msra.mxu0 0.0
  %365 = vmatprep.subr.mxu0 0.0
  %366 = vmatpush1.msra.mxu0 0.0
  %367 = vmatprep.subr.mxu0 0.0
  %368 = vmatpush1.msra.mxu0 0.0
  %369 = vmatprep.subr.mxu0 0.0
  %370 = vmatpush1.msra.mxu0 %v344
  %371 = vmatprep.subr.mxu0 0.0
  %372 = vmatpush1.msra.mxu0 %v343
  %373 = vmatprep.subr.mxu0 0.0
  %374 = vmatpush1.msra.mxu0 %v342
  %375 = vmatprep.subr.mxu0 0.0
  %376 = vmatpush1.msra.mxu0 %v341
  %377 = vmatprep.subr.mxu0 0.0
  %378 = vmatpush2.msra.mxu0 0.0
  %379 = vmatprep.subr.mxu0 0.0
  %380 = vmatpush2.msra.mxu0 0.0
  %381 = vmatprep.subr.mxu0 0.0
  %382 = vmatpush2.msra.mxu0 0.0
  %383 = vmatprep.subr.mxu0 0.0
  %384 = vmatpush2.msra.mxu0 0.0
  %385 = vmatprep.subr.mxu0 0.0
  %386 = vmatpush2.msra.mxu0 0.0
  %387 = vmatprep.subr.mxu0 0.0
  %388 = vmatpush2.msra.mxu0 0.0
  %389 = vmatprep.subr.mxu0 0.0
  %390 = vmatpush2.msra.mxu0 0.0
  %391 = vmatprep.subr.mxu0 0.0
  %392 = vmatpush2.msra.mxu0 0.0
  %393 = vmatprep.subr.mxu0 0.0
  %394 = vmatpush2.msra.mxu0 0.0
  %395 = vmatprep.subr.mxu0 0.0
  %396 = vmatpush2.msra.mxu0 0.0
  %397 = vmatprep.subr.mxu0 0.0
  %398 = vmatpush2.msra.mxu0 0.0
  %399 = vmatprep.subr.mxu0 0.0
  %400 = vmatpush2.msra.mxu0 0.0
  %401 = vmatprep.subr.mxu0 0.0
  %402 = vmatpush2.msra.mxu0 0.0
  %403 = vmatprep.subr.mxu0 0.0
  %404 = vmatpush2.msra.mxu0 0.0
  %405 = vmatprep.subr.mxu0 0.0
  %406 = vmatpush2.msra.mxu0 0.0
  %407 = vmatprep.subr.mxu0 0.0
  %408 = vmatpush2.msra.mxu0 0.0
  %409 = vmatprep.mubr.f32.mxu0 0.0
  %410 = vmatmul.mubr.f32.gmra.mxu0 %v57
  %v411 = vpop.f32.mrf.mxu0
  %v412 = vadd.f32 0.0, %v411
  %v413 = vpop.f32.mrf.mxu0
  %414 = vmatprep.mubr.f32.mxu0 0.0
  %415 = vmatmul.mubr.f32.gmra.mxu0 %v60
  %v416 = vpop.f32.mrf.mxu0
  %v417 = vadd.f32 0.0, %v416
  %v418 = vpop.f32.mrf.mxu0
  %419 = vmatprep.mubr.f32.mxu0 0.0
  %420 = vmatmul.mubr.f32.gmra.mxu0 %v63
  %v421 = vpop.f32.mrf.mxu0
  %v422 = vadd.f32 0.0, %v421
  %v423 = vpop.f32.mrf.mxu0
  %424 = vmatprep.mubr.f32.mxu0 0.0
  %425 = vmatmul.mubr.f32.gmra.mxu0 %v66
  %v426 = vpop.f32.mrf.mxu0
  %v427 = vadd.f32 0.0, %v426
  %v428 = vpop.f32.mrf.mxu0
  %429 = vmatprep.mubr.f32.mxu0 0.0
  %430 = vmatmul.mubr.f32.gmra.mxu0 %v69
  %v431 = vpop.f32.mrf.mxu0
  %v432 = vadd.f32 0.0, %v431
  %v433 = vpop.f32.mrf.mxu0
  %434 = vmatprep.mubr.f32.mxu0 0.0
  %435 = vmatmul.mubr.f32.gmra.mxu0 %v72
  %v436 = vpop.f32.mrf.mxu0
  %v437 = vadd.f32 0.0, %v436
  %v438 = vpop.f32.mrf.mxu0
  %439 = vmatprep.mubr.f32.mxu0 0.0
  %440 = vmatmul.mubr.f32.gmra.mxu0 %v75
  %v441 = vpop.f32.mrf.mxu0
  %v442 = vadd.f32 0.0, %v441
  %v443 = vpop.f32.mrf.mxu0
  %444 = vmatprep.mubr.f32.mxu0 0.0
  %445 = vmatmul.mubr.f32.gmra.mxu0 %v78
  %v446 = vpop.f32.mrf.mxu0
  %v447 = vadd.f32 0.0, %v446
  %v448 = vpop.f32.mrf.mxu0
  %449 = vdwg.mxu0
  %450 = vmatprep.subr.mxu0 0.0
  %451 = vmatpush1.msra.mxu0 0.0
  %452 = vmatprep.subr.mxu0 0.0
  %453 = vmatpush1.msra.mxu0 0.0
  %454 = vmatprep.subr.mxu0 0.0
  %455 = vmatpush1.msra.mxu0 0.0
  %456 = vmatprep.subr.mxu0 0.0
  %457 = vmatpush1.msra.mxu0 0.0
  %458 = vmatprep.subr.mxu0 0.0
  %459 = vmatpush1.msra.mxu0 0.0
  %460 = vmatprep.subr.mxu0 0.0
  %461 = vmatpush1.msra.mxu0 0.0
  %462 = vmatprep.subr.mxu0 0.0
  %463 = vmatpush1.msra.mxu0 0.0
  %464 = vmatprep.subr.mxu0 0.0
  %465 = vmatpush1.msra.mxu0 0.0
  %466 = vmatprep.subr.mxu0 0.0
  %467 = vmatpush1.msra.mxu0 0.0
  %468 = vmatprep.subr.mxu0 0.0
  %469 = vmatpush1.msra.mxu0 0.0
  %470 = vmatprep.subr.mxu0 0.0
  %471 = vmatpush1.msra.mxu0 0.0
  %472 = vmatprep.subr.mxu0 0.0
  %473 = vmatpush1.msra.mxu0 0.0
  %474 = vmatprep.subr.mxu0 0.0
  %475 = vmatpush1.msra.mxu0 %v340
  %476 = vmatprep.subr.mxu0 0.0
  %477 = vmatpush1.msra.mxu0 %v339
  %478 = vmatprep.subr.mxu0 0.0
  %479 = vmatpush1.msra.mxu0 %v338
  %480 = vmatprep.subr.mxu0 0.0
  %481 = vmatpush1.msra.mxu0 %v337
  %482 = vmatprep.subr.mxu0 0.0
  %483 = vmatpush2.msra.mxu0 0.0
  %484 = vmatprep.subr.mxu0 0.0
  %485 = vmatpush2.msra.mxu0 0.0
  %486 = vmatprep.subr.mxu0 0.0
  %487 = vmatpush2.msra.mxu0 0.0
  %488 = vmatprep.subr.mxu0 0.0
  %489 = vmatpush2.msra.mxu0 0.0
  %490 = vmatprep.subr.mxu0 0.0
  %491 = vmatpush2.msra.mxu0 0.0
  %492 = vmatprep.subr.mxu0 0.0
  %493 = vmatpush2.msra.mxu0 0.0
  %494 = vmatprep.subr.mxu0 0.0
  %495 = vmatpush2.msra.mxu0 0.0
  %496 = vmatprep.subr.mxu0 0.0
  %497 = vmatpush2.msra.mxu0 0.0
  %498 = vmatprep.subr.mxu0 0.0
  %499 = vmatpush2.msra.mxu0 0.0
  %500 = vmatprep.subr.mxu0 0.0
  %501 = vmatpush2.msra.mxu0 0.0
  %502 = vmatprep.subr.mxu0 0.0
  %503 = vmatpush2.msra.mxu0 0.0
  %504 = vmatprep.subr.mxu0 0.0
  %505 = vmatpush2.msra.mxu0 0.0
  %506 = vmatprep.subr.mxu0 0.0
  %507 = vmatpush2.msra.mxu0 0.0
  %508 = vmatprep.subr.mxu0 0.0
  %509 = vmatpush2.msra.mxu0 0.0
  %510 = vmatprep.subr.mxu0 0.0
  %511 = vmatpush2.msra.mxu0 0.0
  %512 = vmatprep.subr.mxu0 0.0
  %513 = vmatpush2.msra.mxu0 0.0
  %514 = vmatprep.mubr.f32.mxu0 0.0
  %515 = vmatmul.mubr.f32.gmra.mxu0 %v186
  %v516 = vpop.f32.mrf.mxu0
  %v517 = vadd.f32 %v412, %v516
  %v518 = vpop.f32.mrf.mxu0
  %519 = vmatprep.mubr.f32.mxu0 0.0
  %520 = vmatmul.mubr.f32.gmra.mxu0 %v189
  %v521 = vpop.f32.mrf.mxu0
  %v522 = vadd.f32 %v417, %v521
  %v523 = vpop.f32.mrf.mxu0
  %524 = vmatprep.mubr.f32.mxu0 0.0
  %525 = vmatmul.mubr.f32.gmra.mxu0 %v192
  %v526 = vpop.f32.mrf.mxu0
  %v527 = vadd.f32 %v422, %v526
  %v528 = vpop.f32.mrf.mxu0
  %529 = vmatprep.mubr.f32.mxu0 0.0
  %530 = vmatmul.mubr.f32.gmra.mxu0 %v195
  %v531 = vpop.f32.mrf.mxu0
  %v532 = vadd.f32 %v427, %v531
  %v533 = vpop.f32.mrf.mxu0
  %534 = vmatprep.mubr.f32.mxu0 0.0
  %535 = vmatmul.mubr.f32.gmra.mxu0 %v198
  %v536 = vpop.f32.mrf.mxu0
  %v537 = vadd.f32 %v432, %v536
  %v538 = vpop.f32.mrf.mxu0
  %539 = vmatprep.mubr.f32.mxu0 0.0
  %540 = vmatmul.mubr.f32.gmra.mxu0 %v201
  %v541 = vpop.f32.mrf.mxu0
  %v542 = vadd.f32 %v437, %v541
  %v543 = vpop.f32.mrf.mxu0
  %544 = vmatprep.mubr.f32.mxu0 0.0
  %545 = vmatmul.mubr.f32.gmra.mxu0 %v204
  %v546 = vpop.f32.mrf.mxu0
  %v547 = vadd.f32 %v442, %v546
  %v548 = vpop.f32.mrf.mxu0
  %549 = vmatprep.mubr.f32.mxu0 0.0
  %550 = vmatmul.mubr.f32.gmra.mxu0 %v207
  %v551 = vpop.f32.mrf.mxu0
  %v552 = vadd.f32 %v447, %v551
  %v553 = vpop.f32.mrf.mxu0
  %554 = vdwg.mxu0
  %v555 = vld [vmem:[%s7] sm:$0x1]
  %v557 = vlaneseq
  %v558 = vshrl.u32 %v557, 7
  %v559 = vsub.s32 0, %v558
  %v560 = vrot.slane %v555, %v559
  %v562 = vadd.f32 %v517, %v560
  %v563 = vadd.f32 %v522, %v560
  %v564 = vadd.f32 %v527, %v560
  %v565 = vadd.f32 %v532, %v560
  %v566 = vadd.f32 %v537, %v560
  %v567 = vadd.f32 %v542, %v560
  %v568 = vadd.f32 %v547, %v560
  %v569 = vadd.f32 %v552, %v560
  %570 = vst [vmem:[%s9] sm:$0xff] %v562
  %571 = vst [vmem:[%s9 + $0x8] sm:$0xff] %v563
  %572 = vst [vmem:[%s9 + $0x10] sm:$0xff] %v564
  %573 = vst [vmem:[%s9 + $0x18] sm:$0xff] %v565
  %574 = vst [vmem:[%s9 + $0x20] sm:$0xff] %v566
  %575 = vst [vmem:[%s9 + $0x28] sm:$0xff] %v567
  %576 = vst [vmem:[%s9 + $0x30] sm:$0xff] %v568
  %577 = vst [vmem:[%s9 + $0x38] sm:$0xff] %v569
  // Predicated region
  $region34: #{lstm_classifier_forward.6} parent=0 // pred_check
    _
  $region35: #{lstm_classifier_forward.6} parent=0 // pred_check_branch
    %579 = sbr.rel (0) target = $region37
  $region36: #{lstm_classifier_forward.6} parent=0 // pred_region
    _
  $region37: #{lstm_classifier_forward.6} parent=0 // pred_fallthru
    _
  // Predicated region
  $region38: #{lstm_classifier_forward.6} parent=0 // pred_check
    _
  $region39: #{lstm_classifier_forward.6} parent=0 // pred_check_branch
    %581 = sbr.rel (0) target = $region41
  $region40: #{lstm_classifier_forward.6} parent=0 // pred_region
    _
  $region41: #{lstm_classifier_forward.6} parent=0 // pred_fallthru
    _
  // Predicated region
  $region42: #{lstm_classifier_forward.6} parent=0 // pred_check
    _
  $region43: #{lstm_classifier_forward.6} parent=0 // pred_check_branch
    %583 = sbr.rel (0) target = $region45
  $region44: #{lstm_classifier_forward.6} parent=0 // pred_region
    _
  $region45: #{lstm_classifier_forward.6} parent=0 // pred_fallthru
    _
  // Predicated region
  $region46: #{lstm_classifier_forward.6} parent=0 // pred_check
    _
  $region47: #{lstm_classifier_forward.6} parent=0 // pred_check_branch
    %585 = sbr.rel (0) target = $region49
  $region48: #{lstm_classifier_forward.6} parent=0 // pred_region
    _
  $region49: #{lstm_classifier_forward.6} parent=0 // pred_fallthru
    _

// kernel: lstm_classifier_forward.5
$region0: #{lstm_classifier_forward.5}
  #allocation0 [shape = 'u32[]', space=smem, size = 0x4, offset = 0x4, fixed_abs, tag = 'smem constant byte address 0x4 - core index']
  #allocation1 [shape = 'u32[144,128]{1,0:T(1,128)}', space=vmem, size = 0x12000, scoped, tag = 'internal scratch']
  #allocation2 [shape = 'f32[8,32]{1,0:T(8,128)}', space=vmem, size = 0x1000, scoped, tag = 'scratch operand']
  #allocation3 [shape = 'f32[8,32]{1,0:T(8,128)}', space=vmem, size = 0x1000, scoped, tag = 'scratch operand']
  #allocation4 [shape = 'f32[8,32]{1,0:T(8,128)}', space=vmem, size = 0x1000, scoped, tag = 'scratch operand']
  #allocation5 [shape = 'f32[8,32]{1,0:T(8,128)}', space=vmem, size = 0x1000, scoped, tag = 'scratch operand']
  %s0 = inlined_call_operand.vmem [shape: f32[8,8,128], index: 0, kind: input, shape index: {}]
  %s1 = inlined_call_operand.vmem [shape: f32[8,8,128], index: 1, kind: input, shape index: {}]
  %s2 = inlined_call_operand.vmem [shape: f32[32,128], index: 2, kind: input, shape index: {}]
  %s3 = inlined_call_operand.vmem [shape: f32[32,128], index: 3, kind: input, shape index: {}]
  %s4 = inlined_call_operand.vmem [shape: f32[8,8,32], index: 4, kind: output, shape index: {0}]
  %s5 = inlined_call_operand.vmem [shape: f32[8,8,32], index: 5, kind: output, shape index: {1}]
  %6 = xla_tuple %s4, %s5
  %s7 = sld [smem:[#allocation0]]
  $region61: #{lstm_classifier_forward.5} parent=0
    _
  %s9 = ssub.s32 1, %s7
  %s10 = scalar_select 0, %s9, %s7
  loop: start=0, step=1, limit=4
  $region2: #{lstm_classifier_forward.5} parent=0 // loop_pre_header
    _
  $region3: #{lstm_classifier_forward.5} parent=0 // loop_header
    %s12 = sphi 0, %s16
    %p13 = scmp.ge.s32.totalorder %s12, 4
    %s22 = sphi 0, %s24
    %s25 = sphi 0, %s22
    %s26 = sphi 0, %s25
    %s42 = sphi 0, %s26
    %s50 = sphi 0, %s52
    %s53 = sphi 0, %s50
    %s54 = sphi 0, %s53
    %s70 = sphi 0, %s54
    %s74 = sphi 0, %s74
    %s76 = sphi 0, %s74
    %s77 = sphi 0, %s76
    %s91 = sphi 0, %s77
    %s95 = sphi 0, %s95
    %s97 = sphi 0, %s95
    %s98 = sphi 0, %s97
    %s112 = sphi 0, %s98
    %s118 = sphi 0, %s120
    %s121 = sphi 0, %s118
    %s122 = sphi 0, %s121
    %s138 = sphi 0, %s122
    %s146 = sphi 0, %s148
    %s149 = sphi 0, %s146
    %s150 = sphi 0, %s149
    %s166 = sphi 0, %s150
  $region4: #{lstm_classifier_forward.5} parent=0 // loop_header_branch
    %15 = sbr.rel (%p13) target = $region8
  $region5: #{lstm_classifier_forward.5} parent=0 // loop_body
    %s17 = ssub.s32 %s12, 1
    %s18 = ssub.s32 %s12, 2
    %s19 = sadd.s32 %s12, 1
    %s20 = ssub.s32 %s12, %s19
    %p21 = scmp.eq.s32.totalorder %s20, 0
    %s23 = sadd.s32 %s22, 1
    %s24 = scalar_select %p21, %s22, %s23
    %p27 = pneg %p21
    %p28 = scmp.eq.s32.totalorder %s12, 1
    %p29 = por %p27, %p28
    %p30 = scmp.ne.s32.totalorder %s22, %s25
    %p31 = scmp.eq.s32.totalorder %s12, 0
    %p32 = por %p30, %p31
    %p33 = scmp.ne.s32.totalorder %s22, %s25
    %p34 = scmp.eq.s32.totalorder %s17, 1
    %p35 = por %p33, %p34
    %p36 = scmp.ne.s32.totalorder %s25, %s26
    %p37 = scmp.eq.s32.totalorder %s17, 0
    %p38 = por %p36, %p37
    %p39 = scmp.ne.s32.totalorder %s25, %s26
    %p40 = scmp.eq.s32.totalorder %s18, 1
    %p41 = por %p39, %p40
    %p43 = scmp.ne.s32.totalorder %s26, %s42
    %p44 = scmp.eq.s32.totalorder %s18, 0
    %p45 = por %p43, %p44
    %s46 = ssub.s32 1, %s12
    %s47 = ssub.s32 1, %s19
    %s48 = ssub.s32 %s46, %s47
    %p49 = scmp.eq.s32.totalorder %s48, 0
    %s51 = sadd.s32 %s50, 1
    %s52 = scalar_select %p49, %s50, %s51
    %p55 = pneg %p49
    %p56 = scmp.eq.s32.totalorder %s12, 1
    %p57 = por %p55, %p56
    %p58 = scmp.ne.s32.totalorder %s50, %s53
    %p59 = scmp.eq.s32.totalorder %s12, 0
    %p60 = por %p58, %p59
    %p61 = scmp.ne.s32.totalorder %s50, %s53
    %p62 = scmp.eq.s32.totalorder %s17, 1
    %p63 = por %p61, %p62
    %p64 = scmp.ne.s32.totalorder %s53, %s54
    %p65 = scmp.eq.s32.totalorder %s17, 0
    %p66 = por %p64, %p65
    %p67 = scmp.ne.s32.totalorder %s53, %s54
    %p68 = scmp.eq.s32.totalorder %s18, 1
    %p69 = por %p67, %p68
    %p71 = scmp.ne.s32.totalorder %s54, %s70
    %p72 = scmp.eq.s32.totalorder %s18, 0
    %p73 = por %p71, %p72
    %s75 = sadd.s32 %s74, 1
    %p78 = scmp.eq.s32.totalorder %s12, 1
    %p79 = scmp.ne.s32.totalorder %s74, %s76
    %p80 = scmp.eq.s32.totalorder %s12, 0
    %p81 = por %p79, %p80
    %p82 = scmp.ne.s32.totalorder %s74, %s76
    %p83 = scmp.eq.s32.totalorder %s17, 1
    %p84 = por %p82, %p83
    %p85 = scmp.ne.s32.totalorder %s76, %s77
    %p86 = scmp.eq.s32.totalorder %s17, 0
    %p87 = por %p85, %p86
    %p88 = scmp.ne.s32.totalorder %s76, %s77
    %p89 = scmp.eq.s32.totalorder %s18, 1
    %p90 = por %p88, %p89
    %p92 = scmp.ne.s32.totalorder %s77, %s91
    %p93 = scmp.eq.s32.totalorder %s18, 0
    %p94 = por %p92, %p93
    %s96 = sadd.s32 %s95, 1
    %p99 = scmp.eq.s32.totalorder %s12, 1
    %p100 = scmp.ne.s32.totalorder %s95, %s97
    %p101 = scmp.eq.s32.totalorder %s12, 0
    %p102 = por %p100, %p101
    %p103 = scmp.ne.s32.totalorder %s95, %s97
    %p104 = scmp.eq.s32.totalorder %s17, 1
    %p105 = por %p103, %p104
    %p106 = scmp.ne.s32.totalorder %s97, %s98
    %p107 = scmp.eq.s32.totalorder %s17, 0
    %p108 = por %p106, %p107
    %p109 = scmp.ne.s32.totalorder %s97, %s98
    %p110 = scmp.eq.s32.totalorder %s18, 1
    %p111 = por %p109, %p110
    %p113 = scmp.ne.s32.totalorder %s98, %s112
    %p114 = scmp.eq.s32.totalorder %s18, 0
    %p115 = por %p113, %p114
    %s116 = ssub.s32 %s12, %s19
    %p117 = scmp.eq.s32.totalorder %s116, 0
    %s119 = sadd.s32 %s118, 1
    %s120 = scalar_select %p117, %s118, %s119
    %p123 = pneg %p117
    %p124 = scmp.eq.s32.totalorder %s12, 1
    %p125 = por %p123, %p124
    %p126 = scmp.ne.s32.totalorder %s118, %s121
    %p127 = scmp.eq.s32.totalorder %s12, 0
    %p128 = por %p126, %p127
    %p129 = scmp.ne.s32.totalorder %s118, %s121
    %p130 = scmp.eq.s32.totalorder %s17, 1
    %p131 = por %p129, %p130
    %p132 = scmp.ne.s32.totalorder %s121, %s122
    %p133 = scmp.eq.s32.totalorder %s17, 0
    %p134 = por %p132, %p133
    %p135 = scmp.ne.s32.totalorder %s121, %s122
    %p136 = scmp.eq.s32.totalorder %s18, 1
    %p137 = por %p135, %p136
    %p139 = scmp.ne.s32.totalorder %s122, %s138
    %p140 = scmp.eq.s32.totalorder %s18, 0
    %p141 = por %p139, %p140
    %s142 = ssub.s32 1, %s12
    %s143 = ssub.s32 1, %s19
    %s144 = ssub.s32 %s142, %s143
    %p145 = scmp.eq.s32.totalorder %s144, 0
    %s147 = sadd.s32 %s146, 1
    %s148 = scalar_select %p145, %s146, %s147
    %p151 = pneg %p145
    %p152 = scmp.eq.s32.totalorder %s12, 1
    %p153 = por %p151, %p152
    %p154 = scmp.ne.s32.totalorder %s146, %s149
    %p155 = scmp.eq.s32.totalorder %s12, 0
    %p156 = por %p154, %p155
    %p157 = scmp.ne.s32.totalorder %s146, %s149
    %p158 = scmp.eq.s32.totalorder %s17, 1
    %p159 = por %p157, %p158
    %p160 = scmp.ne.s32.totalorder %s149, %s150
    %p161 = scmp.eq.s32.totalorder %s17, 0
    %p162 = por %p160, %p161
    %p163 = scmp.ne.s32.totalorder %s149, %s150
    %p164 = scmp.eq.s32.totalorder %s18, 1
    %p165 = por %p163, %p164
    %p167 = scmp.ne.s32.totalorder %s150, %s166
    %p168 = scmp.eq.s32.totalorder %s18, 0
    %p169 = por %p167, %p168
    %p170 = scmp.le.s32.totalorder 1, %s12
    %p171 = scmp.lt.s32.totalorder %s12, 3
    %p172 = pnand %p170, %p171
    %p173 = pneg %p172
    // Predicated region
    $region9: #{lstm_classifier_forward.5} parent=5 // pred_check
      _
    $region10: #{lstm_classifier_forward.5} parent=5 // pred_check_branch
      %175 = sbr.rel (%p172) target = $region12
    $region11: #{lstm_classifier_forward.5} parent=5 // pred_region
      %s176 = ssub.s32 %s12, 1
      // Predicated region
      $region13: #{lstm_classifier_forward.5} parent=11 // pred_check
        %p177 = pneg %p87
      $region14: #{lstm_classifier_forward.5} parent=11 // pred_check_branch
        %179 = sbr.rel (%p177) target = $region16
      $region15: #{lstm_classifier_forward.5} parent=11 // pred_region
        _
      $region16: #{lstm_classifier_forward.5} parent=11 // pred_fallthru
        _
      // Predicated region
      $region17: #{lstm_classifier_forward.5} parent=11 // pred_check
        %p180 = pneg %p108
      $region18: #{lstm_classifier_forward.5} parent=11 // pred_check_branch
        %182 = sbr.rel (%p180) target = $region20
      $region19: #{lstm_classifier_forward.5} parent=11 // pred_region
        _
      $region20: #{lstm_classifier_forward.5} parent=11 // pred_fallthru
        _
    $region12: #{lstm_classifier_forward.5} parent=5 // pred_fallthru
      _
    %p183 = scmp.lt.s32.totalorder %s12, 2
    // Predicated region
    $region21: #{lstm_classifier_forward.5} parent=5 // pred_check
      %p184 = pneg %p183
    $region22: #{lstm_classifier_forward.5} parent=5 // pred_check_branch
      %186 = sbr.rel (%p184) target = $region24
    $region23: #{lstm_classifier_forward.5} parent=5 // pred_region
      // Predicated region
      $region25: #{lstm_classifier_forward.5} parent=23 // pred_check
        %p187 = pneg %p32
      $region26: #{lstm_classifier_forward.5} parent=23 // pred_check_branch
        %189 = sbr.rel (%p187) target = $region28
      $region27: #{lstm_classifier_forward.5} parent=23 // pred_region
        %s190 = smul.u32 4, %s12
        %p191 = scmp.lt.s32.totalorder %s190, 7
        %s192 = scalar_select %p191, %s190, 7
        %s193 = smul.addr %s192, 8
        %s194 = scalar_lea.vmem %s0, %s193
        %s195 = smul.u32 4, %s12
      $region28: #{lstm_classifier_forward.5} parent=23 // pred_fallthru
        _
      // Predicated region
      $region29: #{lstm_classifier_forward.5} parent=23 // pred_check
        %p196 = pneg %p60
      $region30: #{lstm_classifier_forward.5} parent=23 // pred_check_branch
        %198 = sbr.rel (%p196) target = $region32
      $region31: #{lstm_classifier_forward.5} parent=23 // pred_region
        %s199 = ssub.s32 1, %s12
        %s200 = smul.u32 4, %s199
        %p201 = scmp.lt.s32.totalorder %s200, 7
        %s202 = scalar_select %p201, %s200, 7
        %s203 = smul.addr %s202, 8
        %s204 = scalar_lea.vmem %s1, %s203
        %s205 = ssub.s32 1, %s12
        %s206 = smul.u32 4, %s205
      $region32: #{lstm_classifier_forward.5} parent=23 // pred_fallthru
        _
    $region24: #{lstm_classifier_forward.5} parent=5 // pred_fallthru
      _
    %p207 = scmp.le.s32.totalorder 1, %s12
    %p208 = scmp.lt.s32.totalorder %s12, 3
    %p209 = pnand %p207, %p208
    %p210 = pneg %p209
    // Predicated region
    $region33: #{lstm_classifier_forward.5} parent=5 // pred_check
      _
    $region34: #{lstm_classifier_forward.5} parent=5 // pred_check_branch
      %212 = sbr.rel (%p209) target = $region36
    $region35: #{lstm_classifier_forward.5} parent=5 // pred_region
      %s213 = ssub.s32 %s12, 1
      %s214 = smul.u32 4, %s17
      %p215 = scmp.lt.s32.totalorder %s214, 7
      %s216 = scalar_select %p215, %s214, 7
      %s217 = smul.addr %s216, 8
      %s218 = scalar_lea.vmem %s0, %s217
      %p219 = pneg %p38
      %p220 = pneg %p35
      %s221 = ssub.s32 1, %s17
      %s222 = smul.u32 4, %s221
      %p223 = scmp.lt.s32.totalorder %s222, 7
      %s224 = scalar_select %p223, %s222, 7
      %s225 = smul.addr %s224, 8
      %s226 = scalar_lea.vmem %s1, %s225
      %p227 = pneg %p66
      %p228 = pneg %p63
      %p229 = pneg %p87
      %p230 = pneg %p84
      %p231 = pneg %p108
      %p232 = pneg %p105
      %p233 = pneg %p134
      %p234 = pneg %p131
      %s235 = smul.u32 4, %s17
      %p236 = scmp.lt.s32.totalorder %s235, 7
      %s237 = scalar_select %p236, %s235, 7
      %s238 = smul.addr %s237, 8
      %s239 = scalar_lea.vmem %s4, %s238
      %p240 = pneg %p162
      %p241 = pneg %p159
      %s242 = ssub.s32 1, %s17
      %s243 = smul.u32 4, %s242
      %p244 = scmp.lt.s32.totalorder %s243, 7
      %s245 = scalar_select %p244, %s243, 7
      %s246 = smul.addr %s245, 8
      %s247 = scalar_lea.vmem %s5, %s246
      %s248 = smul.u32 4, %s17
      %p249 = scmp.lt.s32.totalorder %s248, 7
      %s250 = scalar_select %p249, %s248, 7
      %s251 = smul.addr %s250, 8
      %s252 = scalar_lea.vmem %s0, %s251
      %s253 = smul.u32 4, %s17
      %s254 = ssub.s32 1, %s17
      %s255 = smul.u32 4, %s254
      %p256 = scmp.lt.s32.totalorder %s255, 7
      %s257 = scalar_select %p256, %s255, 7
      %s258 = smul.addr %s257, 8
      %s259 = scalar_lea.vmem %s1, %s258
      %s260 = ssub.s32 1, %s17
      %s261 = smul.u32 4, %s260
      %s262 = smul.u32 4, %s17
      %p263 = scmp.lt.s32.totalorder %s262, 7
      %s264 = scalar_select %p263, %s262, 7
      %s265 = smul.addr %s264, 8
      %s266 = scalar_lea.vmem %s4, %s265
      %s267 = smul.u32 4, %s17
      %s268 = ssub.s32 1, %s17
      %s269 = smul.u32 4, %s268
      %p270 = scmp.lt.s32.totalorder %s269, 7
      %s271 = scalar_select %p270, %s269, 7
      %s272 = smul.addr %s271, 8
      %s273 = scalar_lea.vmem %s5, %s272
      %s274 = ssub.s32 1, %s17
      %s275 = smul.u32 4, %s274
      %p276 = scmp.eq.s32.totalorder %s17, 0
      // Predicated region
      $region37: #{lstm_classifier_forward.5} parent=35 // pred_check
        %p277 = pneg %p276
      $region38: #{lstm_classifier_forward.5} parent=35 // pred_check_branch
        %279 = sbr.rel (%p277) target = $region40
      $region39: #{lstm_classifier_forward.5} parent=35 // pred_region
        %vm280 = vcmask 261120
        %281 = vst.msk [vmem:[#allocation2] sm:$0xff] %vm280, 0.0
        %282 = vst.msk [vmem:[#allocation3] sm:$0xff] %vm280, 0.0
        %283 = vst.msk [vmem:[#allocation4] sm:$0xff] %vm280, 0.0
        %284 = vst.msk [vmem:[#allocation5] sm:$0xff] %vm280, 0.0
      $region40: #{lstm_classifier_forward.5} parent=35 // pred_fallthru
        _
      %v285 = vld [vmem:[%s2] sm:$0xff]
      %v286 = vld [vmem:[%s2 + $0x8] sm:$0xff]
      %v287 = vld [vmem:[%s2 + $0x10] sm:$0xff]
      %v288 = vld [vmem:[%s2 + $0x18] sm:$0xff]
      %v289 = vld [vmem:[%s3] sm:$0xff]
      %v290 = vld [vmem:[%s3 + $0x8] sm:$0xff]
      %v291 = vld [vmem:[%s3 + $0x10] sm:$0xff]
      %v292 = vld [vmem:[%s3 + $0x18] sm:$0xff]
      %v293 = vld [vmem:[#allocation2] sm:$0xff]
      %v294 = vld [vmem:[#allocation3] sm:$0xff]
      %v295 = vld [vmem:[#allocation4] sm:$0xff]
      %v296 = vld [vmem:[#allocation5] sm:$0xff]
      %v297 = vld [vmem:[%s252] sm:$0xff]
      %vm298 = vcmask 261120
      %v300 = vsel %vm298, %v293, 0
      %302 = vmatprep.subr.mxu0 0.0
      %303 = vmatpush1.msra.mxu0 0.0
      %304 = vmatprep.subr.mxu0 0.0
      %305 = vmatpush1.msra.mxu0 0.0
      %306 = vmatprep.subr.mxu0 0.0
      %307 = vmatpush1.msra.mxu0 0.0
      %308 = vmatprep.subr.mxu0 0.0
      %309 = vmatpush1.msra.mxu0 0.0
      %310 = vmatprep.subr.mxu0 0.0
      %311 = vmatpush1.msra.mxu0 0.0
      %312 = vmatprep.subr.mxu0 0.0
      %313 = vmatpush1.msra.mxu0 0.0
      %314 = vmatprep.subr.mxu0 0.0
      %315 = vmatpush1.msra.mxu0 0.0
      %316 = vmatprep.subr.mxu0 0.0
      %317 = vmatpush1.msra.mxu0 0.0
      %318 = vmatprep.subr.mxu0 0.0
      %319 = vmatpush1.msra.mxu0 0.0
      %320 = vmatprep.subr.mxu0 0.0
      %321 = vmatpush1.msra.mxu0 0.0
      %322 = vmatprep.subr.mxu0 0.0
      %323 = vmatpush1.msra.mxu0 0.0
      %324 = vmatprep.subr.mxu0 0.0
      %325 = vmatpush1.msra.mxu0 0.0
      %326 = vmatprep.subr.mxu0 0.0
      %327 = vmatpush1.msra.mxu0 %v288
      %328 = vmatprep.subr.mxu0 0.0
      %329 = vmatpush1.msra.mxu0 %v287
      %330 = vmatprep.subr.mxu0 0.0
      %331 = vmatpush1.msra.mxu0 %v286
      %332 = vmatprep.subr.mxu0 0.0
      %333 = vmatpush1.msra.mxu0 %v285
      %334 = vmatprep.subr.mxu0 0.0
      %335 = vmatpush2.msra.mxu0 0.0
      %336 = vmatprep.subr.mxu0 0.0
      %337 = vmatpush2.msra.mxu0 0.0
      %338 = vmatprep.subr.mxu0 0.0
      %339 = vmatpush2.msra.mxu0 0.0
      %340 = vmatprep.subr.mxu0 0.0
      %341 = vmatpush2.msra.mxu0 0.0
      %342 = vmatprep.subr.mxu0 0.0
      %343 = vmatpush2.msra.mxu0 0.0
      %344 = vmatprep.subr.mxu0 0.0
      %345 = vmatpush2.msra.mxu0 0.0
      %346 = vmatprep.subr.mxu0 0.0
      %347 = vmatpush2.msra.mxu0 0.0
      %348 = vmatprep.subr.mxu0 0.0
      %349 = vmatpush2.msra.mxu0 0.0
      %350 = vmatprep.subr.mxu0 0.0
      %351 = vmatpush2.msra.mxu0 0.0
      %352 = vmatprep.subr.mxu0 0.0
      %353 = vmatpush2.msra.mxu0 0.0
      %354 = vmatprep.subr.mxu0 0.0
      %355 = vmatpush2.msra.mxu0 0.0
      %356 = vmatprep.subr.mxu0 0.0
      %357 = vmatpush2.msra.mxu0 0.0
      %358 = vmatprep.subr.mxu0 0.0
      %359 = vmatpush2.msra.mxu0 0.0
      %360 = vmatprep.subr.mxu0 0.0
      %361 = vmatpush2.msra.mxu0 0.0
      %362 = vmatprep.subr.mxu0 0.0
      %363 = vmatpush2.msra.mxu0 0.0
      %364 = vmatprep.subr.mxu0 0.0
      %365 = vmatpush2.msra.mxu0 0.0
      %366 = vmatprep.mubr.f32.mxu0 0.0
      %367 = vmatmul.mubr.f32.gmra.mxu0 %v300
      %v368 = vpop.f32.mrf.mxu0
      %v369 = vadd.f32 0.0, %v368
      %v370 = vpop.f32.mrf.mxu0
      %371 = vdwg.mxu0
      %v372 = vadd.f32 %v297, %v369
      %v373 = vxor.u32 %v372, 2147483648
      %v374 = vmul.f32 %v373, 1.442695
      %v375 = vpow.pop %v374
      %v376 = vadd.f32 %v375, 1.0
      %v377 = vrcp.pop %v376
      %v378 = vmul.f32 1.0, %v377
      %v379 = vtanh.pop %v372
      %381 = vrot.lane.b32.xlu0 %v294, 32
      %v382 = vpop.permute.xlu0 %381
      %v384 = vmul.f32 %v378, %v382
      %386 = vrot.lane.b32.xlu0 %v379, 64
      %v387 = vpop.permute.xlu0 %386
      %v389 = vmul.f32 %v378, %v387
      %391 = vrot.lane.b32.xlu0 %v389, 32
      %v392 = vpop.permute.xlu0 %391
      %v394 = vadd.f32 %v384, %v392
      %v395 = vtanh.pop %v394
      %397 = vrot.lane.b32.xlu0 %v395, 64
      %v398 = vpop.permute.xlu0 %397
      %v400 = vmul.f32 %v378, %v398
      %s401 = scalar_lea.vmem %s259, 24
      %v402 = vld [vmem:[%s401] sm:$0xff]
      %v404 = vsel %vm298, %v295, 0
      %406 = vmatprep.subr.mxu0 0.0
      %407 = vmatpush1.msra.mxu0 0.0
      %408 = vmatprep.subr.mxu0 0.0
      %409 = vmatpush1.msra.mxu0 0.0
      %410 = vmatprep.subr.mxu0 0.0
      %411 = vmatpush1.msra.mxu0 0.0
      %412 = vmatprep.subr.mxu0 0.0
      %413 = vmatpush1.msra.mxu0 0.0
      %414 = vmatprep.subr.mxu0 0.0
      %415 = vmatpush1.msra.mxu0 0.0
      %416 = vmatprep.subr.mxu0 0.0
      %417 = vmatpush1.msra.mxu0 0.0
      %418 = vmatprep.subr.mxu0 0.0
      %419 = vmatpush1.msra.mxu0 0.0
      %420 = vmatprep.subr.mxu0 0.0
      %421 = vmatpush1.msra.mxu0 0.0
      %422 = vmatprep.subr.mxu0 0.0
      %423 = vmatpush1.msra.mxu0 0.0
      %424 = vmatprep.subr.mxu0 0.0
      %425 = vmatpush1.msra.mxu0 0.0
      %426 = vmatprep.subr.mxu0 0.0
      %427 = vmatpush1.msra.mxu0 0.0
      %428 = vmatprep.subr.mxu0 0.0
      %429 = vmatpush1.msra.mxu0 0.0
      %430 = vmatprep.subr.mxu0 0.0
      %431 = vmatpush1.msra.mxu0 %v292
      %432 = vmatprep.subr.mxu0 0.0
      %433 = vmatpush1.msra.mxu0 %v291
      %434 = vmatprep.subr.mxu0 0.0
      %435 = vmatpush1.msra.mxu0 %v290
      %436 = vmatprep.subr.mxu0 0.0
      %437 = vmatpush1.msra.mxu0 %v289
      %438 = vmatprep.subr.mxu0 0.0
      %439 = vmatpush2.msra.mxu0 0.0
      %440 = vmatprep.subr.mxu0 0.0
      %441 = vmatpush2.msra.mxu0 0.0
      %442 = vmatprep.subr.mxu0 0.0
      %443 = vmatpush2.msra.mxu0 0.0
      %444 = vmatprep.subr.mxu0 0.0
      %445 = vmatpush2.msra.mxu0 0.0
      %446 = vmatprep.subr.mxu0 0.0
      %447 = vmatpush2.msra.mxu0 0.0
      %448 = vmatprep.subr.mxu0 0.0
      %449 = vmatpush2.msra.mxu0 0.0
      %450 = vmatprep.subr.mxu0 0.0
      %451 = vmatpush2.msra.mxu0 0.0
      %452 = vmatprep.subr.mxu0 0.0
      %453 = vmatpush2.msra.mxu0 0.0
      %454 = vmatprep.subr.mxu0 0.0
      %455 = vmatpush2.msra.mxu0 0.0
      %456 = vmatprep.subr.mxu0 0.0
      %457 = vmatpush2.msra.mxu0 0.0
      %458 = vmatprep.subr.mxu0 0.0
      %459 = vmatpush2.msra.mxu0 0.0
      %460 = vmatprep.subr.mxu0 0.0
      %461 = vmatpush2.msra.mxu0 0.0
      %462 = vmatprep.subr.mxu0 0.0
      %463 = vmatpush2.msra.mxu0 0.0
      %464 = vmatprep.subr.mxu0 0.0
      %465 = vmatpush2.msra.mxu0 0.0
      %466 = vmatprep.subr.mxu0 0.0
      %467 = vmatpush2.msra.mxu0 0.0
      %468 = vmatprep.subr.mxu0 0.0
      %469 = vmatpush2.msra.mxu0 0.0
      %470 = vmatprep.mubr.f32.mxu0 0.0
      %471 = vmatmul.mubr.f32.gmra.mxu0 %v404
      %v472 = vpop.f32.mrf.mxu0
      %v473 = vadd.f32 0.0, %v472
      %v474 = vpop.f32.mrf.mxu0
      %475 = vdwg.mxu0
      %v476 = vadd.f32 %v402, %v473
      %v477 = vxor.u32 %v476, 2147483648
      %v478 = vmul.f32 %v477, 1.442695
      %v479 = vpow.pop %v478
      %v480 = vadd.f32 %v479, 1.0
      %v481 = vrcp.pop %v480
      %v482 = vmul.f32 1.0, %v481
      %v483 = vtanh.pop %v476
      %485 = vrot.lane.b32.xlu0 %v296, 32
      %v486 = vpop.permute.xlu0 %485
      %v488 = vmul.f32 %v482, %v486
      %490 = vrot.lane.b32.xlu0 %v483, 64
      %v491 = vpop.permute.xlu0 %490
      %v493 = vmul.f32 %v482, %v491
      %495 = vrot.lane.b32.xlu0 %v493, 32
      %v496 = vpop.permute.xlu0 %495
      %v498 = vadd.f32 %v488, %v496
      %v499 = vtanh.pop %v498
      %501 = vrot.lane.b32.xlu0 %v499, 64
      %v502 = vpop.permute.xlu0 %501
      %v504 = vmul.f32 %v482, %v502
      %506 = vrot.lane.b32.xlu0 %v400, 32
      %v507 = vpop.permute.xlu0 %506
      %509 = vst.msk [vmem:[%s266] sm:$0xff] %vm298, %v507
      %511 = vrot.lane.b32.xlu0 %v504, 32
      %v512 = vpop.permute.xlu0 %511
      %s514 = scalar_lea.vmem %s273, 24
      %515 = vst.msk [vmem:[%s514] sm:$0xff] %vm298, %v512
      %s516 = scalar_lea.vmem %s252, 8
      %v517 = vld [vmem:[%s516] sm:$0xff]
      %v518 = vsel %vm298, %v507, 0
      %520 = vmatprep.subr.mxu0 0.0
      %521 = vmatpush1.msra.mxu0 0.0
      %522 = vmatprep.subr.mxu0 0.0
      %523 = vmatpush1.msra.mxu0 0.0
      %524 = vmatprep.subr.mxu0 0.0
      %525 = vmatpush1.msra.mxu0 0.0
      %526 = vmatprep.subr.mxu0 0.0
      %527 = vmatpush1.msra.mxu0 0.0
      %528 = vmatprep.subr.mxu0 0.0
      %529 = vmatpush1.msra.mxu0 0.0
      %530 = vmatprep.subr.mxu0 0.0
      %531 = vmatpush1.msra.mxu0 0.0
      %532 = vmatprep.subr.mxu0 0.0
      %533 = vmatpush1.msra.mxu0 0.0
      %534 = vmatprep.subr.mxu0 0.0
      %535 = vmatpush1.msra.mxu0 0.0
      %536 = vmatprep.subr.mxu0 0.0
      %537 = vmatpush1.msra.mxu0 0.0
      %538 = vmatprep.subr.mxu0 0.0
      %539 = vmatpush1.msra.mxu0 0.0
      %540 = vmatprep.subr.mxu0 0.0
      %541 = vmatpush1.msra.mxu0 0.0
      %542 = vmatprep.subr.mxu0 0.0
      %543 = vmatpush1.msra.mxu0 0.0
      %544 = vmatprep.subr.mxu0 0.0
      %545 = vmatpush1.msra.mxu0 %v288
      %546 = vmatprep.subr.mxu0 0.0
      %547 = vmatpush1.msra.mxu0 %v287
      %548 = vmatprep.subr.mxu0 0.0
      %549 = vmatpush1.msra.mxu0 %v286
      %550 = vmatprep.subr.mxu0 0.0
      %551 = vmatpush1.msra.mxu0 %v285
      %552 = vmatprep.subr.mxu0 0.0
      %553 = vmatpush2.msra.mxu0 0.0
      %554 = vmatprep.subr.mxu0 0.0
      %555 = vmatpush2.msra.mxu0 0.0
      %556 = vmatprep.subr.mxu0 0.0
      %557 = vmatpush2.msra.mxu0 0.0
      %558 = vmatprep.subr.mxu0 0.0
      %559 = vmatpush2.msra.mxu0 0.0
      %560 = vmatprep.subr.mxu0 0.0
      %561 = vmatpush2.msra.mxu0 0.0
      %562 = vmatprep.subr.mxu0 0.0
      %563 = vmatpush2.msra.mxu0 0.0
      %564 = vmatprep.subr.mxu0 0.0
      %565 = vmatpush2.msra.mxu0 0.0
      %566 = vmatprep.subr.mxu0 0.0
      %567 = vmatpush2.msra.mxu0 0.0
      %568 = vmatprep.subr.mxu0 0.0
      %569 = vmatpush2.msra.mxu0 0.0
      %570 = vmatprep.subr.mxu0 0.0
      %571 = vmatpush2.msra.mxu0 0.0
      %572 = vmatprep.subr.mxu0 0.0
      %573 = vmatpush2.msra.mxu0 0.0
      %574 = vmatprep.subr.mxu0 0.0
      %575 = vmatpush2.msra.mxu0 0.0
      %576 = vmatprep.subr.mxu0 0.0
      %577 = vmatpush2.msra.mxu0 0.0
      %578 = vmatprep.subr.mxu0 0.0
      %579 = vmatpush2.msra.mxu0 0.0
      %580 = vmatprep.subr.mxu0 0.0
      %581 = vmatpush2.msra.mxu0 0.0
      %582 = vmatprep.subr.mxu0 0.0
      %583 = vmatpush2.msra.mxu0 0.0
      %584 = vmatprep.mubr.f32.mxu0 0.0
      %585 = vmatmul.mubr.f32.gmra.mxu0 %v518
      %v586 = vpop.f32.mrf.mxu0
      %v587 = vadd.f32 0.0, %v586
      %v588 = vpop.f32.mrf.mxu0
      %589 = vdwg.mxu0
      %v590 = vadd.f32 %v517, %v587
      %v591 = vxor.u32 %v590, 2147483648
      %v592 = vmul.f32 %v591, 1.442695
      %v593 = vpow.pop %v592
      %v594 = vadd.f32 %v593, 1.0
      %v595 = vrcp.pop %v594
      %v596 = vmul.f32 1.0, %v595
      %v597 = vtanh.pop %v590
      %v598 = vmul.f32 %v596, %v394
      %600 = vrot.lane.b32.xlu0 %v597, 64
      %v601 = vpop.permute.xlu0 %600
      %v603 = vmul.f32 %v596, %v601
      %605 = vrot.lane.b32.xlu0 %v603, 32
      %v606 = vpop.permute.xlu0 %605
      %v608 = vadd.f32 %v598, %v606
      %v609 = vtanh.pop %v608
      %611 = vrot.lane.b32.xlu0 %v609, 64
      %v612 = vpop.permute.xlu0 %611
      %v614 = vmul.f32 %v596, %v612
      %s615 = scalar_lea.vmem %s259, 16
      %v616 = vld [vmem:[%s615] sm:$0xff]
      %v617 = vsel %vm298, %v512, 0
      %619 = vmatprep.subr.mxu0 0.0
      %620 = vmatpush1.msra.mxu0 0.0
      %621 = vmatprep.subr.mxu0 0.0
      %622 = vmatpush1.msra.mxu0 0.0
      %623 = vmatprep.subr.mxu0 0.0
      %624 = vmatpush1.msra.mxu0 0.0
      %625 = vmatprep.subr.mxu0 0.0
      %626 = vmatpush1.msra.mxu0 0.0
      %627 = vmatprep.subr.mxu0 0.0
      %628 = vmatpush1.msra.mxu0 0.0
      %629 = vmatprep.subr.mxu0 0.0
      %630 = vmatpush1.msra.mxu0 0.0
      %631 = vmatprep.subr.mxu0 0.0
      %632 = vmatpush1.msra.mxu0 0.0
      %633 = vmatprep.subr.mxu0 0.0
      %634 = vmatpush1.msra.mxu0 0.0
      %635 = vmatprep.subr.mxu0 0.0
      %636 = vmatpush1.msra.mxu0 0.0
      %637 = vmatprep.subr.mxu0 0.0
      %638 = vmatpush1.msra.mxu0 0.0
      %639 = vmatprep.subr.mxu0 0.0
      %640 = vmatpush1.msra.mxu0 0.0
      %641 = vmatprep.subr.mxu0 0.0
      %642 = vmatpush1.msra.mxu0 0.0
      %643 = vmatprep.subr.mxu0 0.0
      %644 = vmatpush1.msra.mxu0 %v292
      %645 = vmatprep.subr.mxu0 0.0
      %646 = vmatpush1.msra.mxu0 %v291
      %647 = vmatprep.subr.mxu0 0.0
      %648 = vmatpush1.msra.mxu0 %v290
      %649 = vmatprep.subr.mxu0 0.0
      %650 = vmatpush1.msra.mxu0 %v289
      %651 = vmatprep.subr.mxu0 0.0
      %652 = vmatpush2.msra.mxu0 0.0
      %653 = vmatprep.subr.mxu0 0.0
      %654 = vmatpush2.msra.mxu0 0.0
      %655 = vmatprep.subr.mxu0 0.0
      %656 = vmatpush2.msra.mxu0 0.0
      %657 = vmatprep.subr.mxu0 0.0
      %658 = vmatpush2.msra.mxu0 0.0
      %659 = vmatprep.subr.mxu0 0.0
      %660 = vmatpush2.msra.mxu0 0.0
      %661 = vmatprep.subr.mxu0 0.0
      %662 = vmatpush2.msra.mxu0 0.0
      %663 = vmatprep.subr.mxu0 0.0
      %664 = vmatpush2.msra.mxu0 0.0
      %665 = vmatprep.subr.mxu0 0.0
      %666 = vmatpush2.msra.mxu0 0.0
      %667 = vmatprep.subr.mxu0 0.0
      %668 = vmatpush2.msra.mxu0 0.0
      %669 = vmatprep.subr.mxu0 0.0
      %670 = vmatpush2.msra.mxu0 0.0
      %671 = vmatprep.subr.mxu0 0.0
      %672 = vmatpush2.msra.mxu0 0.0
      %673 = vmatprep.subr.mxu0 0.0
      %674 = vmatpush2.msra.mxu0 0.0
      %675 = vmatprep.subr.mxu0 0.0
      %676 = vmatpush2.msra.mxu0 0.0
      %677 = vmatprep.subr.mxu0 0.0
      %678 = vmatpush2.msra.mxu0 0.0
      %679 = vmatprep.subr.mxu0 0.0
      %680 = vmatpush2.msra.mxu0 0.0
      %681 = vmatprep.subr.mxu0 0.0
      %682 = vmatpush2.msra.mxu0 0.0
      %683 = vmatprep.mubr.f32.mxu0 0.0
      %684 = vmatmul.mubr.f32.gmra.mxu0 %v617
      %v685 = vpop.f32.mrf.mxu0
      %v686 = vadd.f32 0.0, %v685
      %v687 = vpop.f32.mrf.mxu0
      %688 = vdwg.mxu0
      %v689 = vadd.f32 %v616, %v686
      %v690 = vxor.u32 %v689, 2147483648
      %v691 = vmul.f32 %v690, 1.442695
      %v692 = vpow.pop %v691
      %v693 = vadd.f32 %v692, 1.0
      %v694 = vrcp.pop %v693
      %v695 = vmul.f32 1.0, %v694
      %v696 = vtanh.pop %v689
      %v697 = vmul.f32 %v695, %v498
      %699 = vrot.lane.b32.xlu0 %v696, 64
      %v700 = vpop.permute.xlu0 %699
      %v702 = vmul.f32 %v695, %v700
      %704 = vrot.lane.b32.xlu0 %v702, 32
      %v705 = vpop.permute.xlu0 %704
      %v707 = vadd.f32 %v697, %v705
      %v708 = vtanh.pop %v707
      %710 = vrot.lane.b32.xlu0 %v708, 64
      %v711 = vpop.permute.xlu0 %710
      %v713 = vmul.f32 %v695, %v711
      %715 = vrot.lane.b32.xlu0 %v614, 32
      %v716 = vpop.permute.xlu0 %715
      %s718 = scalar_lea.vmem %s266, 8
      %719 = vst.msk [vmem:[%s718] sm:$0xff] %vm298, %v716
      %721 = vrot.lane.b32.xlu0 %v713, 32
      %v722 = vpop.permute.xlu0 %721
      %s724 = scalar_lea.vmem %s273, 16
      %725 = vst.msk [vmem:[%s724] sm:$0xff] %vm298, %v722
      %s726 = scalar_lea.vmem %s252, 16
      %v727 = vld [vmem:[%s726] sm:$0xff]
      %v728 = vsel %vm298, %v716, 0
      %730 = vmatprep.subr.mxu0 0.0
      %731 = vmatpush1.msra.mxu0 0.0
      %732 = vmatprep.subr.mxu0 0.0
      %733 = vmatpush1.msra.mxu0 0.0
      %734 = vmatprep.subr.mxu0 0.0
      %735 = vmatpush1.msra.mxu0 0.0
      %736 = vmatprep.subr.mxu0 0.0
      %737 = vmatpush1.msra.mxu0 0.0
      %738 = vmatprep.subr.mxu0 0.0
      %739 = vmatpush1.msra.mxu0 0.0
      %740 = vmatprep.subr.mxu0 0.0
      %741 = vmatpush1.msra.mxu0 0.0
      %742 = vmatprep.subr.mxu0 0.0
      %743 = vmatpush1.msra.mxu0 0.0
      %744 = vmatprep.subr.mxu0 0.0
      %745 = vmatpush1.msra.mxu0 0.0
      %746 = vmatprep.subr.mxu0 0.0
      %747 = vmatpush1.msra.mxu0 0.0
      %748 = vmatprep.subr.mxu0 0.0
      %749 = vmatpush1.msra.mxu0 0.0
      %750 = vmatprep.subr.mxu0 0.0
      %751 = vmatpush1.msra.mxu0 0.0
      %752 = vmatprep.subr.mxu0 0.0
      %753 = vmatpush1.msra.mxu0 0.0
      %754 = vmatprep.subr.mxu0 0.0
      %755 = vmatpush1.msra.mxu0 %v288
      %756 = vmatprep.subr.mxu0 0.0
      %757 = vmatpush1.msra.mxu0 %v287
      %758 = vmatprep.subr.mxu0 0.0
      %759 = vmatpush1.msra.mxu0 %v286
      %760 = vmatprep.subr.mxu0 0.0
      %761 = vmatpush1.msra.mxu0 %v285
      %762 = vmatprep.subr.mxu0 0.0
      %763 = vmatpush2.msra.mxu0 0.0
      %764 = vmatprep.subr.mxu0 0.0
      %765 = vmatpush2.msra.mxu0 0.0
      %766 = vmatprep.subr.mxu0 0.0
      %767 = vmatpush2.msra.mxu0 0.0
      %768 = vmatprep.subr.mxu0 0.0
      %769 = vmatpush2.msra.mxu0 0.0
      %770 = vmatprep.subr.mxu0 0.0
      %771 = vmatpush2.msra.mxu0 0.0
      %772 = vmatprep.subr.mxu0 0.0
      %773 = vmatpush2.msra.mxu0 0.0
      %774 = vmatprep.subr.mxu0 0.0
      %775 = vmatpush2.msra.mxu0 0.0
      %776 = vmatprep.subr.mxu0 0.0
      %777 = vmatpush2.msra.mxu0 0.0
      %778 = vmatprep.subr.mxu0 0.0
      %779 = vmatpush2.msra.mxu0 0.0
      %780 = vmatprep.subr.mxu0 0.0
      %781 = vmatpush2.msra.mxu0 0.0
      %782 = vmatprep.subr.mxu0 0.0
      %783 = vmatpush2.msra.mxu0 0.0
      %784 = vmatprep.subr.mxu0 0.0
      %785 = vmatpush2.msra.mxu0 0.0
      %786 = vmatprep.subr.mxu0 0.0
      %787 = vmatpush2.msra.mxu0 0.0
      %788 = vmatprep.subr.mxu0 0.0
      %789 = vmatpush2.msra.mxu0 0.0
      %790 = vmatprep.subr.mxu0 0.0
      %791 = vmatpush2.msra.mxu0 0.0
      %792 = vmatprep.subr.mxu0 0.0
      %793 = vmatpush2.msra.mxu0 0.0
      %794 = vmatprep.mubr.f32.mxu0 0.0
      %795 = vmatmul.mubr.f32.gmra.mxu0 %v728
      %v796 = vpop.f32.mrf.mxu0
      %v797 = vadd.f32 0.0, %v796
      %v798 = vpop.f32.mrf.mxu0
      %799 = vdwg.mxu0
      %v800 = vadd.f32 %v727, %v797
      %v801 = vxor.u32 %v800, 2147483648
      %v802 = vmul.f32 %v801, 1.442695
      %v803 = vpow.pop %v802
      %v804 = vadd.f32 %v803, 1.0
      %v805 = vrcp.pop %v804
      %v806 = vmul.f32 1.0, %v805
      %v807 = vtanh.pop %v800
      %v808 = vmul.f32 %v806, %v608
      %810 = vrot.lane.b32.xlu0 %v807, 64
      %v811 = vpop.permute.xlu0 %810
      %v813 = vmul.f32 %v806, %v811
      %815 = vrot.lane.b32.xlu0 %v813, 32
      %v816 = vpop.permute.xlu0 %815
      %v818 = vadd.f32 %v808, %v816
      %v819 = vtanh.pop %v818
      %821 = vrot.lane.b32.xlu0 %v819, 64
      %v822 = vpop.permute.xlu0 %821
      %v824 = vmul.f32 %v806, %v822
      %s825 = scalar_lea.vmem %s259, 8
      %v826 = vld [vmem:[%s825] sm:$0xff]
      %v827 = vsel %vm298, %v722, 0
      %829 = vmatprep.subr.mxu0 0.0
      %830 = vmatpush1.msra.mxu0 0.0
      %831 = vmatprep.subr.mxu0 0.0
      %832 = vmatpush1.msra.mxu0 0.0
      %833 = vmatprep.subr.mxu0 0.0
      %834 = vmatpush1.msra.mxu0 0.0
      %835 = vmatprep.subr.mxu0 0.0
      %836 = vmatpush1.msra.mxu0 0.0
      %837 = vmatprep.subr.mxu0 0.0
      %838 = vmatpush1.msra.mxu0 0.0
      %839 = vmatprep.subr.mxu0 0.0
      %840 = vmatpush1.msra.mxu0 0.0
      %841 = vmatprep.subr.mxu0 0.0
      %842 = vmatpush1.msra.mxu0 0.0
      %843 = vmatprep.subr.mxu0 0.0
      %844 = vmatpush1.msra.mxu0 0.0
      %845 = vmatprep.subr.mxu0 0.0
      %846 = vmatpush1.msra.mxu0 0.0
      %847 = vmatprep.subr.mxu0 0.0
      %848 = vmatpush1.msra.mxu0 0.0
      %849 = vmatprep.subr.mxu0 0.0
      %850 = vmatpush1.msra.mxu0 0.0
      %851 = vmatprep.subr.mxu0 0.0
      %852 = vmatpush1.msra.mxu0 0.0
      %853 = vmatprep.subr.mxu0 0.0
      %854 = vmatpush1.msra.mxu0 %v292
      %855 = vmatprep.subr.mxu0 0.0
      %856 = vmatpush1.msra.mxu0 %v291
      %857 = vmatprep.subr.mxu0 0.0
      %858 = vmatpush1.msra.mxu0 %v290
      %859 = vmatprep.subr.mxu0 0.0
      %860 = vmatpush1.msra.mxu0 %v289
      %861 = vmatprep.subr.mxu0 0.0
      %862 = vmatpush2.msra.mxu0 0.0
      %863 = vmatprep.subr.mxu0 0.0
      %864 = vmatpush2.msra.mxu0 0.0
      %865 = vmatprep.subr.mxu0 0.0
      %866 = vmatpush2.msra.mxu0 0.0
      %867 = vmatprep.subr.mxu0 0.0
      %868 = vmatpush2.msra.mxu0 0.0
      %869 = vmatprep.subr.mxu0 0.0
      %870 = vmatpush2.msra.mxu0 0.0
      %871 = vmatprep.subr.mxu0 0.0
      %872 = vmatpush2.msra.mxu0 0.0
      %873 = vmatprep.subr.mxu0 0.0
      %874 = vmatpush2.msra.mxu0 0.0
      %875 = vmatprep.subr.mxu0 0.0
      %876 = vmatpush2.msra.mxu0 0.0
      %877 = vmatprep.subr.mxu0 0.0
      %878 = vmatpush2.msra.mxu0 0.0
      %879 = vmatprep.subr.mxu0 0.0
      %880 = vmatpush2.msra.mxu0 0.0
      %881 = vmatprep.subr.mxu0 0.0
      %882 = vmatpush2.msra.mxu0 0.0
      %883 = vmatprep.subr.mxu0 0.0
      %884 = vmatpush2.msra.mxu0 0.0
      %885 = vmatprep.subr.mxu0 0.0
      %886 = vmatpush2.msra.mxu0 0.0
      %887 = vmatprep.subr.mxu0 0.0
      %888 = vmatpush2.msra.mxu0 0.0
      %889 = vmatprep.subr.mxu0 0.0
      %890 = vmatpush2.msra.mxu0 0.0
      %891 = vmatprep.subr.mxu0 0.0
      %892 = vmatpush2.msra.mxu0 0.0
      %893 = vmatprep.mubr.f32.mxu0 0.0
      %894 = vmatmul.mubr.f32.gmra.mxu0 %v827
      %v895 = vpop.f32.mrf.mxu0
      %v896 = vadd.f32 0.0, %v895
      %v897 = vpop.f32.mrf.mxu0
      %898 = vdwg.mxu0
      %v899 = vadd.f32 %v826, %v896
      %v900 = vxor.u32 %v899, 2147483648
      %v901 = vmul.f32 %v900, 1.442695
      %v902 = vpow.pop %v901
      %v903 = vadd.f32 %v902, 1.0
      %v904 = vrcp.pop %v903
      %v905 = vmul.f32 1.0, %v904
      %v906 = vtanh.pop %v899
      %v907 = vmul.f32 %v905, %v707
      %909 = vrot.lane.b32.xlu0 %v906, 64
      %v910 = vpop.permute.xlu0 %909
      %v912 = vmul.f32 %v905, %v910
      %914 = vrot.lane.b32.xlu0 %v912, 32
      %v915 = vpop.permute.xlu0 %914
      %v917 = vadd.f32 %v907, %v915
      %v918 = vtanh.pop %v917
      %920 = vrot.lane.b32.xlu0 %v918, 64
      %v921 = vpop.permute.xlu0 %920
      %v923 = vmul.f32 %v905, %v921
      %925 = vrot.lane.b32.xlu0 %v824, 32
      %v926 = vpop.permute.xlu0 %925
      %s928 = scalar_lea.vmem %s266, 16
      %929 = vst.msk [vmem:[%s928] sm:$0xff] %vm298, %v926
      %931 = vrot.lane.b32.xlu0 %v923, 32
      %v932 = vpop.permute.xlu0 %931
      %s934 = scalar_lea.vmem %s273, 8
      %935 = vst.msk [vmem:[%s934] sm:$0xff] %vm298, %v932
      %s936 = scalar_lea.vmem %s252, 24
      %v937 = vld [vmem:[%s936] sm:$0xff]
      %v938 = vsel %vm298, %v926, 0
      %940 = vmatprep.subr.mxu0 0.0
      %941 = vmatpush1.msra.mxu0 0.0
      %942 = vmatprep.subr.mxu0 0.0
      %943 = vmatpush1.msra.mxu0 0.0
      %944 = vmatprep.subr.mxu0 0.0
      %945 = vmatpush1.msra.mxu0 0.0
      %946 = vmatprep.subr.mxu0 0.0
      %947 = vmatpush1.msra.mxu0 0.0
      %948 = vmatprep.subr.mxu0 0.0
      %949 = vmatpush1.msra.mxu0 0.0
      %950 = vmatprep.subr.mxu0 0.0
      %951 = vmatpush1.msra.mxu0 0.0
      %952 = vmatprep.subr.mxu0 0.0
      %953 = vmatpush1.msra.mxu0 0.0
      %954 = vmatprep.subr.mxu0 0.0
      %955 = vmatpush1.msra.mxu0 0.0
      %956 = vmatprep.subr.mxu0 0.0
      %957 = vmatpush1.msra.mxu0 0.0
      %958 = vmatprep.subr.mxu0 0.0
      %959 = vmatpush1.msra.mxu0 0.0
      %960 = vmatprep.subr.mxu0 0.0
      %961 = vmatpush1.msra.mxu0 0.0
      %962 = vmatprep.subr.mxu0 0.0
      %963 = vmatpush1.msra.mxu0 0.0
      %964 = vmatprep.subr.mxu0 0.0
      %965 = vmatpush1.msra.mxu0 %v288
      %966 = vmatprep.subr.mxu0 0.0
      %967 = vmatpush1.msra.mxu0 %v287
      %968 = vmatprep.subr.mxu0 0.0
      %969 = vmatpush1.msra.mxu0 %v286
      %970 = vmatprep.subr.mxu0 0.0
      %971 = vmatpush1.msra.mxu0 %v285
      %972 = vmatprep.subr.mxu0 0.0
      %973 = vmatpush2.msra.mxu0 0.0
      %974 = vmatprep.subr.mxu0 0.0
      %975 = vmatpush2.msra.mxu0 0.0
      %976 = vmatprep.subr.mxu0 0.0
      %977 = vmatpush2.msra.mxu0 0.0
      %978 = vmatprep.subr.mxu0 0.0
      %979 = vmatpush2.msra.mxu0 0.0
      %980 = vmatprep.subr.mxu0 0.0
      %981 = vmatpush2.msra.mxu0 0.0
      %982 = vmatprep.subr.mxu0 0.0
      %983 = vmatpush2.msra.mxu0 0.0
      %984 = vmatprep.subr.mxu0 0.0
      %985 = vmatpush2.msra.mxu0 0.0
      %986 = vmatprep.subr.mxu0 0.0
      %987 = vmatpush2.msra.mxu0 0.0
      %988 = vmatprep.subr.mxu0 0.0
      %989 = vmatpush2.msra.mxu0 0.0
      %990 = vmatprep.subr.mxu0 0.0
      %991 = vmatpush2.msra.mxu0 0.0
      %992 = vmatprep.subr.mxu0 0.0
      %993 = vmatpush2.msra.mxu0 0.0
      %994 = vmatprep.subr.mxu0 0.0
      %995 = vmatpush2.msra.mxu0 0.0
      %996 = vmatprep.subr.mxu0 0.0
      %997 = vmatpush2.msra.mxu0 0.0
      %998 = vmatprep.subr.mxu0 0.0
      %999 = vmatpush2.msra.mxu0 0.0
      %1000 = vmatprep.subr.mxu0 0.0
      %1001 = vmatpush2.msra.mxu0 0.0
      %1002 = vmatprep.subr.mxu0 0.0
      %1003 = vmatpush2.msra.mxu0 0.0
      %1004 = vmatprep.mubr.f32.mxu0 0.0
      %1005 = vmatmul.mubr.f32.gmra.mxu0 %v938
      %v1006 = vpop.f32.mrf.mxu0
      %v1007 = vadd.f32 0.0, %v1006
      %v1008 = vpop.f32.mrf.mxu0
      %1009 = vdwg.mxu0
      %v1010 = vadd.f32 %v937, %v1007
      %v1011 = vxor.u32 %v1010, 2147483648
      %v1012 = vmul.f32 %v1011, 1.442695
      %v1013 = vpow.pop %v1012
      %v1014 = vadd.f32 %v1013, 1.0
      %v1015 = vrcp.pop %v1014
      %v1016 = vmul.f32 1.0, %v1015
      %v1017 = vtanh.pop %v1010
      %v1018 = vmul.f32 %v1016, %v818
      %1020 = vrot.lane.b32.xlu0 %v1017, 64
      %v1021 = vpop.permute.xlu0 %1020
      %v1023 = vmul.f32 %v1016, %v1021
      %1025 = vrot.lane.b32.xlu0 %v1023, 32
      %v1026 = vpop.permute.xlu0 %1025
      %v1028 = vadd.f32 %v1018, %v1026
      %v1029 = vtanh.pop %v1028
      %1031 = vrot.lane.b32.xlu0 %v1029, 64
      %v1032 = vpop.permute.xlu0 %1031
      %v1034 = vmul.f32 %v1016, %v1032
      %v1035 = vld [vmem:[%s259] sm:$0xff]
      %v1036 = vsel %vm298, %v932, 0
      %1038 = vmatprep.subr.mxu0 0.0
      %1039 = vmatpush1.msra.mxu0 0.0
      %1040 = vmatprep.subr.mxu0 0.0
      %1041 = vmatpush1.msra.mxu0 0.0
      %1042 = vmatprep.subr.mxu0 0.0
      %1043 = vmatpush1.msra.mxu0 0.0
      %1044 = vmatprep.subr.mxu0 0.0
      %1045 = vmatpush1.msra.mxu0 0.0
      %1046 = vmatprep.subr.mxu0 0.0
      %1047 = vmatpush1.msra.mxu0 0.0
      %1048 = vmatprep.subr.mxu0 0.0
      %1049 = vmatpush1.msra.mxu0 0.0
      %1050 = vmatprep.subr.mxu0 0.0
      %1051 = vmatpush1.msra.mxu0 0.0
      %1052 = vmatprep.subr.mxu0 0.0
      %1053 = vmatpush1.msra.mxu0 0.0
      %1054 = vmatprep.subr.mxu0 0.0
      %1055 = vmatpush1.msra.mxu0 0.0
      %1056 = vmatprep.subr.mxu0 0.0
      %1057 = vmatpush1.msra.mxu0 0.0
      %1058 = vmatprep.subr.mxu0 0.0
      %1059 = vmatpush1.msra.mxu0 0.0
      %1060 = vmatprep.subr.mxu0 0.0
      %1061 = vmatpush1.msra.mxu0 0.0
      %1062 = vmatprep.subr.mxu0 0.0
      %1063 = vmatpush1.msra.mxu0 %v292
      %1064 = vmatprep.subr.mxu0 0.0
      %1065 = vmatpush1.msra.mxu0 %v291
      %1066 = vmatprep.subr.mxu0 0.0
      %1067 = vmatpush1.msra.mxu0 %v290
      %1068 = vmatprep.subr.mxu0 0.0
      %1069 = vmatpush1.msra.mxu0 %v289
      %1070 = vmatprep.subr.mxu0 0.0
      %1071 = vmatpush2.msra.mxu0 0.0
      %1072 = vmatprep.subr.mxu0 0.0
      %1073 = vmatpush2.msra.mxu0 0.0
      %1074 = vmatprep.subr.mxu0 0.0
      %1075 = vmatpush2.msra.mxu0 0.0
      %1076 = vmatprep.subr.mxu0 0.0
      %1077 = vmatpush2.msra.mxu0 0.0
      %1078 = vmatprep.subr.mxu0 0.0
      %1079 = vmatpush2.msra.mxu0 0.0
      %1080 = vmatprep.subr.mxu0 0.0
      %1081 = vmatpush2.msra.mxu0 0.0
      %1082 = vmatprep.subr.mxu0 0.0
      %1083 = vmatpush2.msra.mxu0 0.0
      %1084 = vmatprep.subr.mxu0 0.0
      %1085 = vmatpush2.msra.mxu0 0.0
      %1086 = vmatprep.subr.mxu0 0.0
      %1087 = vmatpush2.msra.mxu0 0.0
      %1088 = vmatprep.subr.mxu0 0.0
      %1089 = vmatpush2.msra.mxu0 0.0
      %1090 = vmatprep.subr.mxu0 0.0
      %1091 = vmatpush2.msra.mxu0 0.0
      %1092 = vmatprep.subr.mxu0 0.0
      %1093 = vmatpush2.msra.mxu0 0.0
      %1094 = vmatprep.subr.mxu0 0.0
      %1095 = vmatpush2.msra.mxu0 0.0
      %1096 = vmatprep.subr.mxu0 0.0
      %1097 = vmatpush2.msra.mxu0 0.0
      %1098 = vmatprep.subr.mxu0 0.0
      %1099 = vmatpush2.msra.mxu0 0.0
      %1100 = vmatprep.subr.mxu0 0.0
      %1101 = vmatpush2.msra.mxu0 0.0
      %1102 = vmatprep.mubr.f32.mxu0 0.0
      %1103 = vmatmul.mubr.f32.gmra.mxu0 %v1036
      %v1104 = vpop.f32.mrf.mxu0
      %v1105 = vadd.f32 0.0, %v1104
      %v1106 = vpop.f32.mrf.mxu0
      %1107 = vdwg.mxu0
      %v1108 = vadd.f32 %v1035, %v1105
      %v1109 = vxor.u32 %v1108, 2147483648
      %v1110 = vmul.f32 %v1109, 1.442695
      %v1111 = vpow.pop %v1110
      %v1112 = vadd.f32 %v1111, 1.0
      %v1113 = vrcp.pop %v1112
      %v1114 = vmul.f32 1.0, %v1113
      %v1115 = vtanh.pop %v1108
      %v1116 = vmul.f32 %v1114, %v917
      %1118 = vrot.lane.b32.xlu0 %v1115, 64
      %v1119 = vpop.permute.xlu0 %1118
      %v1121 = vmul.f32 %v1114, %v1119
      %1123 = vrot.lane.b32.xlu0 %v1121, 32
      %v1124 = vpop.permute.xlu0 %1123
      %v1126 = vadd.f32 %v1116, %v1124
      %v1127 = vtanh.pop %v1126
      %1129 = vrot.lane.b32.xlu0 %v1127, 64
      %v1130 = vpop.permute.xlu0 %1129
      %v1132 = vmul.f32 %v1114, %v1130
      %1134 = vrot.lane.b32.xlu0 %v1034, 32
      %v1135 = vpop.permute.xlu0 %1134
      %s1137 = scalar_lea.vmem %s266, 24
      %1138 = vst.msk [vmem:[%s1137] sm:$0xff] %vm298, %v1135
      %1140 = vrot.lane.b32.xlu0 %v1132, 32
      %v1141 = vpop.permute.xlu0 %1140
      %1143 = vst.msk [vmem:[%s273] sm:$0xff] %vm298, %v1141
      %1144 = vst.msk [vmem:[#allocation2] sm:$0xff] %vm298, %v1135
      %1146 = vrot.lane.b32.xlu0 %v1028, 96
      %v1147 = vpop.permute.xlu0 %1146
      %1149 = vst.msk [vmem:[#allocation3] sm:$0xff] %vm298, %v1147
      %1150 = vst.msk [vmem:[#allocation4] sm:$0xff] %vm298, %v1141
      %1152 = vrot.lane.b32.xlu0 %v1126, 96
      %v1153 = vpop.permute.xlu0 %1152
      %1155 = vst.msk [vmem:[#allocation5] sm:$0xff] %vm298, %v1153
      %s1156 = smul.u32 4, %s17
      %p1157 = scmp.lt.s32.totalorder %s1156, 7
      %s1158 = scalar_select %p1157, %s1156, 7
      %s1159 = smul.addr %s1158, 8
      %s1160 = scalar_lea.vmem %s4, %s1159
      %s1161 = ssub.s32 1, %s17
      %s1162 = smul.u32 4, %s1161
      %p1163 = scmp.lt.s32.totalorder %s1162, 7
      %s1164 = scalar_select %p1163, %s1162, 7
      %s1165 = smul.addr %s1164, 8
      %s1166 = scalar_lea.vmem %s5, %s1165
      // Predicated region
      $region41: #{lstm_classifier_forward.5} parent=35 // pred_check
        %p1167 = pneg %p131
      $region42: #{lstm_classifier_forward.5} parent=35 // pred_check_branch
        %1169 = sbr.rel (%p1167) target = $region44
      $region43: #{lstm_classifier_forward.5} parent=35 // pred_region
        %s1170 = smul.u32 4, %s17
      $region44: #{lstm_classifier_forward.5} parent=35 // pred_fallthru
        _
      // Predicated region
      $region45: #{lstm_classifier_forward.5} parent=35 // pred_check
        %p1171 = pneg %p159
      $region46: #{lstm_classifier_forward.5} parent=35 // pred_check_branch
        %1173 = sbr.rel (%p1171) target = $region48
      $region47: #{lstm_classifier_forward.5} parent=35 // pred_region
        %s1174 = ssub.s32 1, %s17
        %s1175 = smul.u32 4, %s1174
      $region48: #{lstm_classifier_forward.5} parent=35 // pred_fallthru
        _
    $region36: #{lstm_classifier_forward.5} parent=5 // pred_fallthru
      _
    %p1176 = scmp.le.s32.totalorder 2, %s12
    // Predicated region
    $region49: #{lstm_classifier_forward.5} parent=5 // pred_check
      %p1177 = pneg %p1176
    $region50: #{lstm_classifier_forward.5} parent=5 // pred_check_branch
      %1179 = sbr.rel (%p1177) target = $region52
    $region51: #{lstm_classifier_forward.5} parent=5 // pred_region
      %s1180 = ssub.s32 %s12, 2
      // Predicated region
      $region53: #{lstm_classifier_forward.5} parent=51 // pred_check
        %p1181 = pneg %p137
      $region54: #{lstm_classifier_forward.5} parent=51 // pred_check_branch
        %1183 = sbr.rel (%p1181) target = $region56
      $region55: #{lstm_classifier_forward.5} parent=51 // pred_region
        %s1184 = smul.u32 4, %s18
        %p1185 = scmp.lt.s32.totalorder %s1184, 7
        %s1186 = scalar_select %p1185, %s1184, 7
        %s1187 = smul.addr %s1186, 8
        %s1188 = scalar_lea.vmem %s4, %s1187
      $region56: #{lstm_classifier_forward.5} parent=51 // pred_fallthru
        _
      // Predicated region
      $region57: #{lstm_classifier_forward.5} parent=51 // pred_check
        %p1189 = pneg %p165
      $region58: #{lstm_classifier_forward.5} parent=51 // pred_check_branch
        %1191 = sbr.rel (%p1189) target = $region60
      $region59: #{lstm_classifier_forward.5} parent=51 // pred_region
        %s1192 = ssub.s32 1, %s18
        %s1193 = smul.u32 4, %s1192
        %p1194 = scmp.lt.s32.totalorder %s1193, 7
        %s1195 = scalar_select %p1194, %s1193, 7
        %s1196 = smul.addr %s1195, 8
        %s1197 = scalar_lea.vmem %s5, %s1196
      $region60: #{lstm_classifier_forward.5} parent=51 // pred_fallthru
        _
    $region52: #{lstm_classifier_forward.5} parent=5 // pred_fallthru
      _
  $region6: #{lstm_classifier_forward.5} parent=0 // loop_footer
    %s16 = sadd.s32 1, %s12
  $region7: #{lstm_classifier_forward.5} parent=0 // loop_footer_branch
    %11 = sbr.rel target = $region3
  $region8: #{lstm_classifier_forward.5} parent=0 // loop_exit
    _

</llo_original>
